<compile_context>
chip_gen: v7x
topology: tpu7x:2x2x1
jax: 0.10.0
libtpu: 0.0.40
codegen_flags: <defaults>
</compile_context>

<pallas_src>
import jax
import jax.numpy as jnp
import numpy as np
from jax.experimental import pallas as pl
from jax.experimental.pallas import tpu as pltpu

H1, H2, H3, OUT = 512, 256, 128, 1


def _round_up(n, m):
    return ((n + m - 1) // m) * m


def _vmem_limit_bytes():
    """Generation-aware scoped-VMEM limit: ~3/4 of physical, capped at 100 MB."""
    try:
        cap = int(pltpu.get_tpu_info().vmem_capacity_bytes)
    except Exception:  # pragma: no cover - conservative fallback
        cap = 64 * 1024 * 1024
    return int(min(100 * 1024 * 1024, (cap * 3) // 4))


def _pick_batch_tile(B):
    """Large tiles amortize per-grid-step overhead; keep >=2 grid steps when
    the batch allows it so v7x can shard the parallel axis across both TCs."""
    bp = _round_up(max(B, 1), 256)
    if bp <= 256:
        return 256
    if bp >= 2048:
        return 1024
    return max(256, (bp // 2 // 256) * 256)


def _pick_k_tile(D, batch_tile, vmem_limit):
    """Largest lane-multiple K tile whose double-buffered x (f32) and w1 (bf16)
    blocks fit in the scoped-VMEM budget (minus room for resident blocks)."""
    Dp = _round_up(max(D, 1), 128)
    per_k_bytes = 2 * batch_tile * 4 + 2 * H1 * 2   # x block + w1 block, per tk unit
    budget = max(vmem_limit - 12 * 1024 * 1024, 4 * 1024 * 1024)
    tk = (budget // per_k_bytes) // 128 * 128
    return int(max(128, min(Dp, tk)))


def _mlp_kernel(x_ref, w1_ref, b1_ref, w2_ref, b2_ref,
                w3_ref, b3_ref, w4_ref, b4_ref, o_ref, acc_ref):
    k = pl.program_id(1)

    @pl.when(k == 0)
    def _():
        acc_ref[...] = jnp.zeros_like(acc_ref)

    # Layer 1 partial product.  The f32 x tile is cast to bf16 on the VPU here
    # (no wrapper-side bf16 materialization pass over HBM); f32 MXU accumulate.
    acc_ref[...] += jnp.dot(x_ref[...].astype(jnp.bfloat16), w1_ref[...],
                            preferred_element_type=jnp.float32)

    @pl.when(k == pl.num_programs(1) - 1)
    def _():
        # Layer 1 epilogue: bias + ReLU (Dropout = identity at inference).
        h = jnp.maximum(acc_ref[...] + b1_ref[...], 0.0)

        # Layer 2: Linear + ReLU (Dropout = identity at inference).
        h = jnp.dot(h.astype(jnp.bfloat16), w2_ref[...],
                    preferred_element_type=jnp.float32)
        h = jnp.maximum(h + b2_ref[...], 0.0)

        # Layer 3: Linear + ReLU.
        h = jnp.dot(h.astype(jnp.bfloat16), w3_ref[...],
                    preferred_element_type=jnp.float32)
        h = jnp.maximum(h + b3_ref[...], 0.0)

        # Layer 4: 128 -> 1 head as VPU multiply + cross-lane sum (XLU); a
        # (K=128, N=1) MXU matvec would waste a full MXU pass.  b4 from SMEM.
        logits = jnp.sum(h * w4_ref[...], axis=-1, keepdims=True) + b4_ref[0]
        o_ref[...] = jax.nn.sigmoid(logits)


def bot_detection_forward(x, params, *, batch_tile=None, k_tile=None):
    """x: (B, input_dim) f32 -> (B, 1) f32 probabilities (eval-mode forward)."""
    w1, b1, w2, b2, w3, b3, w4, b4 = params
    B, D = x.shape
    h1, h2, h3 = w1.shape[1], w2.shape[1], w3.shape[1]

    vmem_limit = _vmem_limit_bytes()
    if batch_tile is None:
        batch_tile = _pick_batch_tile(B)
    assert batch_tile % 8 == 0, "batch_tile must be a multiple of 8 sublanes"
    if k_tile is None:
        k_tile = _pick_k_tile(D, batch_tile, vmem_limit)
    assert k_tile % 128 == 0, "k_tile must be a multiple of 128 lanes"

    # ---- wrapper-side layout prep (zero-padding is exact) ------------------
    Dp = _round_up(D, k_tile)
    Bp = _round_up(B, batch_tile)
    if Dp != D or Bp != B:
        x = jnp.pad(x, ((0, Bp - B), (0, Dp - D)))
    if Dp != D:
        w1 = jnp.pad(w1, ((0, Dp - D), (0, 0)))

    x_f32 = x.astype(jnp.float32)                    # cast to bf16 happens in-kernel
    w1_bf = w1.astype(jnp.bfloat16)
    w2_bf = w2.astype(jnp.bfloat16)
    w3_bf = w3.astype(jnp.bfloat16)
    b1_f = b1.reshape(1, h1).astype(jnp.float32)
    b2_f = b2.reshape(1, h2).astype(jnp.float32)
    b3_f = b3.reshape(1, h3).astype(jnp.float32)
    w4_row = w4.reshape(1, h3).astype(jnp.float32)   # (1, 128) row for VPU reduce
    b4_s = b4.reshape(-1).astype(jnp.float32)        # (1,) scalar, lives in SMEM

    n_b = Bp // batch_tile
    n_k = Dp // k_tile
    grid = (n_b, n_k)

    flops = 2 * Bp * (Dp * h1 + h1 * h2 + h2 * h3 + h3 * OUT)
    bytes_accessed = (Bp * Dp * 4                          # x (f32)
                      + (Dp * h1 + h1 * h2 + h2 * h3) * 2  # bf16 weights
                      + (h1 + h2 + h3 + OUT + h3) * 4      # biases + w4 row
                      + Bp * OUT * 4)                      # output
    cost = pl.CostEstimate(flops=int(flops), transcendentals=int(Bp),
                           bytes_accessed=int(bytes_accessed))

    def resident(shape):
        # Constant block index across the whole grid -> fetched once by the
        # pipeline; these blocks are small, default double-buffering is fine.
        return pl.BlockSpec(shape, lambda i, k: (0, 0))

    out = pl.pallas_call(
        _mlp_kernel,
        out_shape=jax.ShapeDtypeStruct((Bp, OUT), jnp.float32),
        grid_spec=pltpu.PrefetchScalarGridSpec(
            num_scalar_prefetch=0,
            grid=grid,
            in_specs=[
                pl.BlockSpec((batch_tile, k_tile), lambda i, k: (i, k)),   # x (streamed)
                pl.BlockSpec((k_tile, h1), lambda i, k: (k, 0)),           # w1 (K-tiled)
                resident((1, h1)),                                         # b1
                resident((h1, h2)), resident((1, h2)),                     # w2, b2
                resident((h2, h3)), resident((1, h3)),                     # w3, b3
                resident((1, h3)),                                         # w4 row
                pl.BlockSpec(memory_space=pltpu.MemorySpace.SMEM),         # b4 scalar
            ],
            out_specs=pl.BlockSpec((batch_tile, OUT), lambda i, k: (i, 0)),
            scratch_shapes=[pltpu.VMEM((batch_tile, h1), jnp.float32)],    # layer-1 acc
        ),
        compiler_params=pltpu.CompilerParams(
            dimension_semantics=("parallel", "arbitrary"),
            vmem_limit_bytes=vmem_limit,
        ),
        cost_estimate=cost,
    )(x_f32, w1_bf, b1_f, w2_bf, b2_f, w3_bf, b3_f, w4_row, b4_s)

    return out[:B]


def init_params(input_dim, key):
    """Deterministic init matching the nn.Linear shapes of the module."""
    ks = jax.random.split(key, 8)

    def linear(kw, kb, fan_in, fan_out):
        bound = 1.0 / np.sqrt(fan_in)
        w = jax.random.uniform(kw, (fan_in, fan_out), jnp.float32, -bound, bound)
        b = jax.random.uniform(kb, (1, fan_out), jnp.float32, -bound, bound)
        return w, b

    w1, b1 = linear(ks[0], ks[1], input_dim, H1)
    w2, b2 = linear(ks[2], ks[3], H1, H2)
    w3, b3 = linear(ks[4], ks[5], H2, H3)
    w4, b4 = linear(ks[6], ks[7], H3, OUT)
    return (w1, b1, w2, b2, w3, b3, w4, b4)


def _reference_forward(x, params):
    """Pure-JAX reference using the same bf16-matmul / f32-accumulate recipe."""
    w1, b1, w2, b2, w3, b3, w4, b4 = params
    bf, f32 = jnp.bfloat16, jnp.float32
    h = jnp.dot(x.astype(bf), w1.astype(bf), preferred_element_type=f32)
    h = jnp.maximum(h + b1, 0.0)
    h = jnp.dot(h.astype(bf), w2.astype(bf), preferred_element_type=f32)
    h = jnp.maximum(h + b2, 0.0)
    h = jnp.dot(h.astype(bf), w3.astype(bf), preferred_element_type=f32)
    h = jnp.maximum(h + b3, 0.0)
    return jax.nn.sigmoid(jnp.dot(h, w4) + b4)


if __name__ == "__main__":
    key = jax.random.PRNGKey(0)
    k_x, k_p, k_x2, k_p2 = jax.random.split(key, 4)

    # Case 1: small, deliberately unaligned shapes (exercises D-padding
    # 37 -> 128 and batch-padding 32 -> 256, single grid step per axis).
    batch, input_dim = 32, 37
    x = jax.random.normal(k_x, (batch, input_dim), jnp.float32)
    params = init_params(input_dim, k_p)
    out = jax.block_until_ready(bot_detection_forward(x, params))
    ref = _reference_forward(x, params)
    np.testing.assert_allclose(np.asarray(out), np.asarray(ref),
                               rtol=2e-3, atol=2e-3)
    assert out.shape == (batch, 1)

    # Case 2: multi-tile batch axis and forced K-tiling of layer 1
    # (exercises the pl.when init/finalize accumulator path).
    batch2, input_dim2 = 600, 300
    x2 = jax.random.normal(k_x2, (batch2, input_dim2), jnp.float32)
    params2 = init_params(input_dim2, k_p2)
    out2 = jax.block_until_ready(
        bot_detection_forward(x2, params2, batch_tile=256, k_tile=128))
    ref2 = _reference_forward(x2, params2)
    np.testing.assert_allclose(np.asarray(out2), np.asarray(ref2),
                               rtol=2e-3, atol=2e-3)
    assert out2.shape == (batch2, 1)

    print("KERNEL_OK")
</pallas_src>

<mosaic_0001>
module attributes {stable_mosaic.version = 11 : i64} {
  func.func @_mlp_kernel(%arg0: i32, %arg1: i32, %arg2: memref<256x128xf32, #tpu.memory_space<vmem>>, %arg3: memref<128x512xbf16, #tpu.memory_space<vmem>>, %arg4: memref<1x512xf32, #tpu.memory_space<vmem>>, %arg5: memref<512x256xbf16, #tpu.memory_space<vmem>>, %arg6: memref<1x256xf32, #tpu.memory_space<vmem>>, %arg7: memref<256x128xbf16, #tpu.memory_space<vmem>>, %arg8: memref<1x128xf32, #tpu.memory_space<vmem>>, %arg9: memref<1x128xf32, #tpu.memory_space<vmem>>, %arg10: memref<1xf32, #tpu.memory_space<smem>>, %arg11: memref<256x1xf32, #tpu.memory_space<vmem>>, %arg12: memref<256x512xf32, #tpu.memory_space<vmem>>) attributes {dimension_semantics = [#tpu.dimension_semantics<parallel>, #tpu.dimension_semantics<arbitrary>], iteration_bounds = array<i64: 1, 1>, scalar_prefetch = 0 : i64, scratch_operands = 1 : i64, tpu.core_type = #tpu.core_type<tc>, window_params = [{transform_indices = @transform_0, window_bounds = array<i64: 256, 128>}, {transform_indices = @transform_1, window_bounds = array<i64: 128, 512>}, {pipeline_mode = #tpu.pipeline_mode<synchronous>, transform_indices = @transform_2, window_bounds = array<i64: 1, 512>}, {pipeline_mode = #tpu.pipeline_mode<synchronous>, transform_indices = @transform_3, window_bounds = array<i64: 512, 256>}, {pipeline_mode = #tpu.pipeline_mode<synchronous>, transform_indices = @transform_4, window_bounds = array<i64: 1, 256>}, {pipeline_mode = #tpu.pipeline_mode<synchronous>, transform_indices = @transform_5, window_bounds = array<i64: 256, 128>}, {pipeline_mode = #tpu.pipeline_mode<synchronous>, transform_indices = @transform_6, window_bounds = array<i64: 1, 128>}, {pipeline_mode = #tpu.pipeline_mode<synchronous>, transform_indices = @transform_7, window_bounds = array<i64: 1, 128>}, {transform_indices = @transform_8, window_bounds = array<i64: 1>}, {transform_indices = @transform_9, window_bounds = array<i64: 256, 1>}]} {
    %c0_i32 = arith.constant 0 : i32
    %0 = arith.cmpi eq, %arg1, %c0_i32 : i32
    %1 = arith.extui %0 : i1 to i32
    %c0_i32_0 = arith.constant 0 : i32
    %2 = arith.cmpi ne, %1, %c0_i32_0 : i32
    scf.if %2 {
      %cst_10 = arith.constant 0.000000e+00 : f32
      %13 = vector.broadcast %cst_10 : f32 to vector<256x512xf32>
      %c0_11 = arith.constant 0 : index
      %c0_12 = arith.constant 0 : index
      %14 = vector.load %arg12[%c0_11, %c0_12] : memref<256x512xf32, #tpu.memory_space<vmem>>, vector<256x512xf32>
      tpu.vector_store %arg12[%c0_11, %c0_12], %13 {strides = array<i32>} : memref<256x512xf32, #tpu.memory_space<vmem>>, vector<256x512xf32>,
    } else {
    }
    %c0 = arith.constant 0 : index
    %c0_1 = arith.constant 0 : index
    %3 = vector.load %arg12[%c0, %c0_1] : memref<256x512xf32, #tpu.memory_space<vmem>>, vector<256x512xf32>
    %c0_2 = arith.constant 0 : index
    %c0_3 = arith.constant 0 : index
    %4 = vector.load %arg2[%c0_2, %c0_3] : memref<256x128xf32, #tpu.memory_space<vmem>>, vector<256x128xf32>
    %5 = arith.truncf %4 : vector<256x128xf32> to vector<256x128xbf16>
    %c0_4 = arith.constant 0 : index
    %c0_5 = arith.constant 0 : index
    %6 = vector.load %arg3[%c0_4, %c0_5] : memref<128x512xbf16, #tpu.memory_space<vmem>>, vector<128x512xbf16>
    %cst = arith.constant dense<0.000000e+00> : vector<256x512xf32>
    %7 = tpu.matmul %5, %6, %cst {dimension_numbers = #tpu.dot_dimension_numbers<[1], [0], [0], [1], [0, 0, 1, 1], [], []>} : vector<256x128xbf16>, vector<128x512xbf16>, vector<256x512xf32> -> vector<256x512xf32>
    %8 = arith.addf %3, %7 : vector<256x512xf32>
    %c0_6 = arith.constant 0 : index
    %c0_7 = arith.constant 0 : index
    %9 = vector.load %arg12[%c0_6, %c0_7] : memref<256x512xf32, #tpu.memory_space<vmem>>, vector<256x512xf32>
    tpu.vector_store %arg12[%c0_6, %c0_7], %8 {strides = array<i32>} : memref<256x512xf32, #tpu.memory_space<vmem>>, vector<256x512xf32>,
    %c0_i32_8 = arith.constant 0 : i32
    %10 = arith.cmpi eq, %arg1, %c0_i32_8 : i32
    %11 = arith.extui %10 : i1 to i32
    %c0_i32_9 = arith.constant 0 : i32
    %12 = arith.cmpi ne, %11, %c0_i32_9 : i32
    scf.if %12 {
      %c0_10 = arith.constant 0 : index
      %c0_11 = arith.constant 0 : index
      %13 = vector.load %arg12[%c0_10, %c0_11] : memref<256x512xf32, #tpu.memory_space<vmem>>, vector<256x512xf32>
      %c0_12 = arith.constant 0 : index
      %c0_13 = arith.constant 0 : index
      %14 = vector.load %arg4[%c0_12, %c0_13] : memref<1x512xf32, #tpu.memory_space<vmem>>, vector<1x512xf32>
      %15 = vector.broadcast %14 : vector<1x512xf32> to vector<256x512xf32>
      %16 = arith.addf %13, %15 : vector<256x512xf32>
      %cst_14 = arith.constant 0.000000e+00 : f32
      %17 = vector.broadcast %cst_14 : f32 to vector<256x512xf32>
      %18 = arith.maximumf %16, %17 : vector<256x512xf32>
      %19 = arith.truncf %18 : vector<256x512xf32> to vector<256x512xbf16>
      %c0_15 = arith.constant 0 : index
      %c0_16 = arith.constant 0 : index
      %20 = vector.load %arg5[%c0_15, %c0_16] : memref<512x256xbf16, #tpu.memory_space<vmem>>, vector<512x256xbf16>
      %cst_17 = arith.constant dense<0.000000e+00> : vector<256x256xf32>
      %21 = tpu.matmul %19, %20, %cst_17 {dimension_numbers = #tpu.dot_dimension_numbers<[1], [0], [0], [1], [0, 0, 1, 1], [], []>} : vector<256x512xbf16>, vector<512x256xbf16>, vector<256x256xf32> -> vector<256x256xf32>
      %c0_18 = arith.constant 0 : index
      %c0_19 = arith.constant 0 : index
      %22 = vector.load %arg6[%c0_18, %c0_19] : memref<1x256xf32, #tpu.memory_space<vmem>>, vector<1x256xf32>
      %23 = vector.broadcast %22 : vector<1x256xf32> to vector<256x256xf32>
      %24 = arith.addf %21, %23 : vector<256x256xf32>
      %cst_20 = arith.constant 0.000000e+00 : f32
      %25 = vector.broadcast %cst_20 : f32 to vector<256x256xf32>
      %26 = arith.maximumf %24, %25 : vector<256x256xf32>
      %27 = arith.truncf %26 : vector<256x256xf32> to vector<256x256xbf16>
      %c0_21 = arith.constant 0 : index
      %c0_22 = arith.constant 0 : index
      %28 = vector.load %arg7[%c0_21, %c0_22] : memref<256x128xbf16, #tpu.memory_space<vmem>>, vector<256x128xbf16>
      %cst_23 = arith.constant dense<0.000000e+00> : vector<256x128xf32>
      %29 = tpu.matmul %27, %28, %cst_23 {dimension_numbers = #tpu.dot_dimension_numbers<[1], [0], [0], [1], [0, 0, 1, 1], [], []>} : vector<256x256xbf16>, vector<256x128xbf16>, vector<256x128xf32> -> vector<256x128xf32>
      %c0_24 = arith.constant 0 : index
      %c0_25 = arith.constant 0 : index
      %30 = vector.load %arg8[%c0_24, %c0_25] : memref<1x128xf32, #tpu.memory_space<vmem>>, vector<1x128xf32>
      %31 = vector.broadcast %30 : vector<1x128xf32> to vector<256x128xf32>
      %32 = arith.addf %29, %31 : vector<256x128xf32>
      %cst_26 = arith.constant 0.000000e+00 : f32
      %33 = vector.broadcast %cst_26 : f32 to vector<256x128xf32>
      %34 = arith.maximumf %32, %33 : vector<256x128xf32>
      %c0_27 = arith.constant 0 : index
      %c0_28 = arith.constant 0 : index
      %35 = vector.load %arg9[%c0_27, %c0_28] : memref<1x128xf32, #tpu.memory_space<vmem>>, vector<1x128xf32>
      %36 = vector.broadcast %35 : vector<1x128xf32> to vector<256x128xf32>
      %37 = arith.mulf %34, %36 : vector<256x128xf32>
      %cst_29 = arith.constant dense<0.000000e+00> : vector<256xf32>
      %38 = vector.multi_reduction <add>, %37, %cst_29 [1] : vector<256x128xf32> to vector<256xf32>
      %39 = vector.shape_cast %38 : vector<256xf32> to vector<256x1xf32>
      %c0_30 = arith.constant 0 : index
      %40 = memref.load %arg10[%c0_30] : memref<1xf32, #tpu.memory_space<smem>>
      %41 = vector.broadcast %40 : f32 to vector<256x1xf32>
      %42 = arith.addf %39, %41 : vector<256x1xf32>
      %43 = arith.negf %42 : vector<256x1xf32>
      %44 = math.exp %43 : vector<256x1xf32>
      %cst_31 = arith.constant 1.000000e+00 : f32
      %45 = vector.broadcast %cst_31 : f32 to vector<256x1xf32>
      %46 = arith.addf %45, %44 : vector<256x1xf32>
      %47 = arith.divf %45, %46 : vector<256x1xf32>
      %c0_32 = arith.constant 0 : index
      %c0_33 = arith.constant 0 : index
      %48 = vector.load %arg11[%c0_32, %c0_33] : memref<256x1xf32, #tpu.memory_space<vmem>>, vector<256x1xf32>
      tpu.vector_store %arg11[%c0_32, %c0_33], %47 {strides = array<i32>} : memref<256x1xf32, #tpu.memory_space<vmem>>, vector<256x1xf32>,
    } else {
    }
    return
  }
  func.func @transform_0(%arg0: i32, %arg1: i32) -> (i32, i32) {
    %c0_i32 = arith.constant 0 : i32
    return %arg0, %arg1 : i32, i32
  }
  func.func @transform_1(%arg0: i32, %arg1: i32) -> (i32, i32) {
    %c0_i32 = arith.constant 0 : i32
    %c0_i32_0 = arith.constant 0 : i32
    return %arg1, %c0_i32 : i32, i32
  }
  func.func @transform_2(%arg0: i32, %arg1: i32) -> (i32, i32) {
    %c0_i32 = arith.constant 0 : i32
    %c0_i32_0 = arith.constant 0 : i32
    %c0_i32_1 = arith.constant 0 : i32
    return %c0_i32, %c0_i32_0 : i32, i32
  }
  func.func @transform_3(%arg0: i32, %arg1: i32) -> (i32, i32) {
    %c0_i32 = arith.constant 0 : i32
    %c0_i32_0 = arith.constant 0 : i32
    %c0_i32_1 = arith.constant 0 : i32
    return %c0_i32, %c0_i32_0 : i32, i32
  }
  func.func @transform_4(%arg0: i32, %arg1: i32) -> (i32, i32) {
    %c0_i32 = arith.constant 0 : i32
    %c0_i32_0 = arith.constant 0 : i32
    %c0_i32_1 = arith.constant 0 : i32
    return %c0_i32, %c0_i32_0 : i32, i32
  }
  func.func @transform_5(%arg0: i32, %arg1: i32) -> (i32, i32) {
    %c0_i32 = arith.constant 0 : i32
    %c0_i32_0 = arith.constant 0 : i32
    %c0_i32_1 = arith.constant 0 : i32
    return %c0_i32, %c0_i32_0 : i32, i32
  }
  func.func @transform_6(%arg0: i32, %arg1: i32) -> (i32, i32) {
    %c0_i32 = arith.constant 0 : i32
    %c0_i32_0 = arith.constant 0 : i32
    %c0_i32_1 = arith.constant 0 : i32
    return %c0_i32, %c0_i32_0 : i32, i32
  }
  func.func @transform_7(%arg0: i32, %arg1: i32) -> (i32, i32) {
    %c0_i32 = arith.constant 0 : i32
    %c0_i32_0 = arith.constant 0 : i32
    %c0_i32_1 = arith.constant 0 : i32
    return %c0_i32, %c0_i32_0 : i32, i32
  }
  func.func @transform_8(%arg0: i32, %arg1: i32) -> i32 {
    %c0_i32 = arith.constant 0 : i32
    %c0_i32_0 = arith.constant 0 : i32
    return %c0_i32 : i32
  }
  func.func @transform_9(%arg0: i32, %arg1: i32) -> (i32, i32) {
    %c0_i32 = arith.constant 0 : i32
    %c0_i32_0 = arith.constant 0 : i32
    return %arg0, %c0_i32 : i32, i32
  }
}

</mosaic_0001>

<llo_original>
// kernel: tpu_custom_call.1
$region0: #{tpu_custom_call.1}
  #allocation0 [shape = 'u32[]', space=smem, size = 0x4, offset = 0x4, fixed_abs, tag = 'smem constant byte address 0x4 - core index']
  #allocation1 [shape = 'u32[144,128]{1,0:T(1,128)}', space=vmem, size = 0x12000, scoped, tag = 'internal scratch']
  #allocation2 [shape = 'f32[256,512]{1,0:T(8,128)}', space=vmem, size = 0x80000, scoped, tag = 'scratch operand']
  #allocation3 [shape = 'f32[1]{0:T(128)S(6)}', space=smem, size = 0x200, scoped, tag = 'scoped memory for tpu_custom_call.1']
  %s0 = inlined_call_operand.hbm [shape: f32[256,128], index: 0, kind: input, shape index: {}]
  %s1 = inlined_call_operand.hbm [shape: bf16[128,512], index: 1, kind: input, shape index: {}]
  %s2 = inlined_call_operand.vmem [shape: f32[1,512], index: 2, kind: input, shape index: {}]
  %s3 = inlined_call_operand.hbm [shape: bf16[512,256], index: 3, kind: input, shape index: {}]
  %s4 = inlined_call_operand.vmem [shape: f32[1,256], index: 4, kind: input, shape index: {}]
  %s5 = inlined_call_operand.hbm [shape: bf16[256,128], index: 5, kind: input, shape index: {}]
  %s6 = inlined_call_operand.vmem [shape: f32[1,128], index: 6, kind: input, shape index: {}]
  %s7 = inlined_call_operand.vmem [shape: f32[1,128], index: 7, kind: input, shape index: {}]
  %s8 = inlined_call_operand.<no memory space> [shape: f32[1], index: 8, kind: input, shape index: {}]
  %s9 = inlined_call_operand.vmem [shape: f32[256,1], index: 9, kind: output, shape index: {}]
  %s10 = sld [smem:[#allocation0]]
  $region70: #{tpu_custom_call.1} parent=0
    _
  %s12 = ssub.s32 1, %s10
  %s13 = scalar_select 0, %s12, %s10
  %14 = sst [smem:[#allocation3]] %s8
  $region1: #{tpu_custom_call.1} parent=0
    #allocation4 [shape = 'u8[131072]{0}', space=vmem, size = 0x20000, scoped, tag = 'input window, operand 0, single buffered']
    #allocation5 [shape = 's32[1]{0}', space=sflag, size = 0x4, scoped, tag = 'scoped memory for tpu_custom_call.1']
    #allocation6 [shape = 'u8[131072]{0}', space=vmem, size = 0x20000, scoped, tag = 'input window, operand 1, single buffered']
    #allocation7 [shape = 's32[1]{0}', space=sflag, size = 0x4, scoped, tag = 'scoped memory for tpu_custom_call.1']
    #allocation8 [shape = 'u8[262144]{0}', space=vmem, size = 0x40000, scoped, tag = 'input window, operand 3, single buffered']
    #allocation9 [shape = 'u8[65536]{0}', space=vmem, size = 0x10000, scoped, tag = 'input window, operand 5, single buffered']
    #allocation10 [shape = 's32[1]{0}', space=sflag, size = 0x4, scoped, tag = 'scoped memory for tpu_custom_call.1']
    %15 = vsyncpa [#allocation5], 0
    %16 = vsyncpa [#allocation7], 0
    %17 = vsyncpa [#allocation10], 0
    // Predicated region
    $region2: #{tpu_custom_call.1} parent=1 // pred_check
      _
    $region3: #{tpu_custom_call.1} parent=1 // pred_check_branch
      %19 = sbr.rel (0) target = $region5
    $region4: #{tpu_custom_call.1} parent=1 // pred_region
      %s21 = ssub.s32 4096, 4096
      %22 = vsyncadd [#allocation5], %s21
      %s23 = sshll.u32 [#allocation4], 4
      %s24 = int_to_ptr.vmem [resolvable:$true] %s23
      %29 = dma.hbm_to_vmem [thread:$0]  %s0, 4096, %s24, [#allocation5], 128, 128, 8
    $region5: #{tpu_custom_call.1} parent=1 // pred_fallthru
      _
    // Predicated region
    $region6: #{tpu_custom_call.1} parent=1 // pred_check
      _
    $region7: #{tpu_custom_call.1} parent=1 // pred_check_branch
      %31 = sbr.rel (0) target = $region9
    $region8: #{tpu_custom_call.1} parent=1 // pred_region
      %s33 = ssub.s32 4096, 4096
      %34 = vsyncadd [#allocation7], %s33
      %s35 = sshll.u32 [#allocation6], 4
      %s36 = int_to_ptr.vmem [resolvable:$true] %s35
      %41 = dma.hbm_to_vmem [thread:$0]  %s1, 4096, %s36, [#allocation7], 256, 256, 16
    $region9: #{tpu_custom_call.1} parent=1 // pred_fallthru
      _
    // Predicated region
    $region10: #{tpu_custom_call.1} parent=1 // pred_check
      _
    $region11: #{tpu_custom_call.1} parent=1 // pred_check_branch
      %43 = sbr.rel (0) target = $region13
    $region12: #{tpu_custom_call.1} parent=1 // pred_region
      _
    $region13: #{tpu_custom_call.1} parent=1 // pred_fallthru
      _
    // Predicated region
    $region14: #{tpu_custom_call.1} parent=1 // pred_check
      _
    $region15: #{tpu_custom_call.1} parent=1 // pred_check_branch
      %45 = sbr.rel (0) target = $region17
    $region16: #{tpu_custom_call.1} parent=1 // pred_region
      %s47 = ssub.s32 8192, 8192
      %48 = vsyncadd [#allocation7], %s47
      %s49 = sshll.u32 [#allocation8], 4
      %s50 = int_to_ptr.vmem [resolvable:$true] %s49
      %55 = dma.hbm_to_vmem [thread:$0]  %s3, 8192, %s50, [#allocation7], 128, 128, 8
    $region17: #{tpu_custom_call.1} parent=1 // pred_fallthru
      _
    // Predicated region
    $region18: #{tpu_custom_call.1} parent=1 // pred_check
      _
    $region19: #{tpu_custom_call.1} parent=1 // pred_check_branch
      %57 = sbr.rel (0) target = $region21
    $region20: #{tpu_custom_call.1} parent=1 // pred_region
      _
    $region21: #{tpu_custom_call.1} parent=1 // pred_fallthru
      _
    // Predicated region
    $region22: #{tpu_custom_call.1} parent=1 // pred_check
      _
    $region23: #{tpu_custom_call.1} parent=1 // pred_check_branch
      %59 = sbr.rel (0) target = $region25
    $region24: #{tpu_custom_call.1} parent=1 // pred_region
      %s61 = ssub.s32 2048, 2048
      %62 = vsyncadd [#allocation10], %s61
      %s63 = sshll.u32 [#allocation9], 4
      %s64 = int_to_ptr.vmem [resolvable:$true] %s63
      %69 = dma.hbm_to_vmem [thread:$0]  %s5, 2048, %s64, [#allocation10], 64, 64, 4
    $region25: #{tpu_custom_call.1} parent=1 // pred_fallthru
      _
    // Predicated region
    $region26: #{tpu_custom_call.1} parent=1 // pred_check
      _
    $region27: #{tpu_custom_call.1} parent=1 // pred_check_branch
      %71 = sbr.rel (0) target = $region29
    $region28: #{tpu_custom_call.1} parent=1 // pred_region
      _
    $region29: #{tpu_custom_call.1} parent=1 // pred_fallthru
      _
    // Predicated region
    $region30: #{tpu_custom_call.1} parent=1 // pred_check
      _
    $region31: #{tpu_custom_call.1} parent=1 // pred_check_branch
      %73 = sbr.rel (0) target = $region33
    $region32: #{tpu_custom_call.1} parent=1 // pred_region
      _
    $region33: #{tpu_custom_call.1} parent=1 // pred_fallthru
      _
    // Predicated region
    $region34: #{tpu_custom_call.1} parent=1 // pred_check
      _
    $region35: #{tpu_custom_call.1} parent=1 // pred_check_branch
      %75 = sbr.rel (0) target = $region37
    $region36: #{tpu_custom_call.1} parent=1 // pred_region
      _
    $region37: #{tpu_custom_call.1} parent=1 // pred_fallthru
      _
    // Predicated region
    $region38: #{tpu_custom_call.1} parent=1 // pred_check
      _
    $region39: #{tpu_custom_call.1} parent=1 // pred_check_branch
      %77 = sbr.rel (0) target = $region41
    $region40: #{tpu_custom_call.1} parent=1 // pred_region
      %78 = dma.done [#allocation5], 4096
    $region41: #{tpu_custom_call.1} parent=1 // pred_fallthru
      _
    // Predicated region
    $region42: #{tpu_custom_call.1} parent=1 // pred_check
      _
    $region43: #{tpu_custom_call.1} parent=1 // pred_check_branch
      %80 = sbr.rel (0) target = $region45
    $region44: #{tpu_custom_call.1} parent=1 // pred_region
      %81 = dma.done [#allocation7], 4096
    $region45: #{tpu_custom_call.1} parent=1 // pred_fallthru
      _
    // Predicated region
    $region46: #{tpu_custom_call.1} parent=1 // pred_check
      _
    $region47: #{tpu_custom_call.1} parent=1 // pred_check_branch
      %83 = sbr.rel (0) target = $region49
    $region48: #{tpu_custom_call.1} parent=1 // pred_region
      %84 = dma.done [#allocation7], 8192
    $region49: #{tpu_custom_call.1} parent=1 // pred_fallthru
      _
    // Predicated region
    $region50: #{tpu_custom_call.1} parent=1 // pred_check
      _
    $region51: #{tpu_custom_call.1} parent=1 // pred_check_branch
      %86 = sbr.rel (0) target = $region53
    $region52: #{tpu_custom_call.1} parent=1 // pred_region
      %87 = dma.done [#allocation10], 2048
    $region53: #{tpu_custom_call.1} parent=1 // pred_fallthru
      _
    %p89 = scmp.eq.s32.totalorder 0, 0
    // Predicated region
    $region54: #{tpu_custom_call.1} parent=1 // pred_check
      %p90 = pneg %p89
    $region55: #{tpu_custom_call.1} parent=1 // pred_check_branch
      %92 = sbr.rel (%p90) target = $region57
    $region56: #{tpu_custom_call.1} parent=1 // pred_region
      %93 = vst [vmem:[#allocation2] sm:$0xff] 0.0
      %94 = vst [vmem:[#allocation2 + $0x8] sm:$0xff] 0.0
      %95 = vst [vmem:[#allocation2 + $0x10] sm:$0xff] 0.0
      %96 = vst [vmem:[#allocation2 + $0x18] sm:$0xff] 0.0
      %97 = vst [vmem:[#allocation2 + $0x20] sm:$0xff] 0.0
      %98 = vst [vmem:[#allocation2 + $0x28] sm:$0xff] 0.0
      %99 = vst [vmem:[#allocation2 + $0x30] sm:$0xff] 0.0
      %100 = vst [vmem:[#allocation2 + $0x38] sm:$0xff] 0.0
      %101 = vst [vmem:[#allocation2 + $0x40] sm:$0xff] 0.0
      %102 = vst [vmem:[#allocation2 + $0x48] sm:$0xff] 0.0
      %103 = vst [vmem:[#allocation2 + $0x50] sm:$0xff] 0.0
      %104 = vst [vmem:[#allocation2 + $0x58] sm:$0xff] 0.0
      %105 = vst [vmem:[#allocation2 + $0x60] sm:$0xff] 0.0
      %106 = vst [vmem:[#allocation2 + $0x68] sm:$0xff] 0.0
      %107 = vst [vmem:[#allocation2 + $0x70] sm:$0xff] 0.0
      %108 = vst [vmem:[#allocation2 + $0x78] sm:$0xff] 0.0
      %109 = vst [vmem:[#allocation2 + $0x80] sm:$0xff] 0.0
      %110 = vst [vmem:[#allocation2 + $0x88] sm:$0xff] 0.0
      %111 = vst [vmem:[#allocation2 + $0x90] sm:$0xff] 0.0
      %112 = vst [vmem:[#allocation2 + $0x98] sm:$0xff] 0.0
      %113 = vst [vmem:[#allocation2 + $0xa0] sm:$0xff] 0.0
      %114 = vst [vmem:[#allocation2 + $0xa8] sm:$0xff] 0.0
      %115 = vst [vmem:[#allocation2 + $0xb0] sm:$0xff] 0.0
      %116 = vst [vmem:[#allocation2 + $0xb8] sm:$0xff] 0.0
      %117 = vst [vmem:[#allocation2 + $0xc0] sm:$0xff] 0.0
      %118 = vst [vmem:[#allocation2 + $0xc8] sm:$0xff] 0.0
      %119 = vst [vmem:[#allocation2 + $0xd0] sm:$0xff] 0.0
      %120 = vst [vmem:[#allocation2 + $0xd8] sm:$0xff] 0.0
      %121 = vst [vmem:[#allocation2 + $0xe0] sm:$0xff] 0.0
      %122 = vst [vmem:[#allocation2 + $0xe8] sm:$0xff] 0.0
      %123 = vst [vmem:[#allocation2 + $0xf0] sm:$0xff] 0.0
      %124 = vst [vmem:[#allocation2 + $0xf8] sm:$0xff] 0.0
      %125 = vst [vmem:[#allocation2 + $0x100] sm:$0xff] 0.0
      %126 = vst [vmem:[#allocation2 + $0x108] sm:$0xff] 0.0
      %127 = vst [vmem:[#allocation2 + $0x110] sm:$0xff] 0.0
      %128 = vst [vmem:[#allocation2 + $0x118] sm:$0xff] 0.0
      %129 = vst [vmem:[#allocation2 + $0x120] sm:$0xff] 0.0
      %130 = vst [vmem:[#allocation2 + $0x128] sm:$0xff] 0.0
      %131 = vst [vmem:[#allocation2 + $0x130] sm:$0xff] 0.0
      %132 = vst [vmem:[#allocation2 + $0x138] sm:$0xff] 0.0
      %133 = vst [vmem:[#allocation2 + $0x140] sm:$0xff] 0.0
      %134 = vst [vmem:[#allocation2 + $0x148] sm:$0xff] 0.0
      %135 = vst [vmem:[#allocation2 + $0x150] sm:$0xff] 0.0
      %136 = vst [vmem:[#allocation2 + $0x158] sm:$0xff] 0.0
      %137 = vst [vmem:[#allocation2 + $0x160] sm:$0xff] 0.0
      %138 = vst [vmem:[#allocation2 + $0x168] sm:$0xff] 0.0
      %139 = vst [vmem:[#allocation2 + $0x170] sm:$0xff] 0.0
      %140 = vst [vmem:[#allocation2 + $0x178] sm:$0xff] 0.0
      %141 = vst [vmem:[#allocation2 + $0x180] sm:$0xff] 0.0
      %142 = vst [vmem:[#allocation2 + $0x188] sm:$0xff] 0.0
      %143 = vst [vmem:[#allocation2 + $0x190] sm:$0xff] 0.0
      %144 = vst [vmem:[#allocation2 + $0x198] sm:$0xff] 0.0
      %145 = vst [vmem:[#allocation2 + $0x1a0] sm:$0xff] 0.0
      %146 = vst [vmem:[#allocation2 + $0x1a8] sm:$0xff] 0.0
      %147 = vst [vmem:[#allocation2 + $0x1b0] sm:$0xff] 0.0
      %148 = vst [vmem:[#allocation2 + $0x1b8] sm:$0xff] 0.0
      %149 = vst [vmem:[#allocation2 + $0x1c0] sm:$0xff] 0.0
      %150 = vst [vmem:[#allocation2 + $0x1c8] sm:$0xff] 0.0
      %151 = vst [vmem:[#allocation2 + $0x1d0] sm:$0xff] 0.0
      %152 = vst [vmem:[#allocation2 + $0x1d8] sm:$0xff] 0.0
      %153 = vst [vmem:[#allocation2 + $0x1e0] sm:$0xff] 0.0
      %154 = vst [vmem:[#allocation2 + $0x1e8] sm:$0xff] 0.0
      %155 = vst [vmem:[#allocation2 + $0x1f0] sm:$0xff] 0.0
      %156 = vst [vmem:[#allocation2 + $0x1f8] sm:$0xff] 0.0
      %157 = vst [vmem:[#allocation2 + $0x200] sm:$0xff] 0.0
      %158 = vst [vmem:[#allocation2 + $0x208] sm:$0xff] 0.0
      %159 = vst [vmem:[#allocation2 + $0x210] sm:$0xff] 0.0
      %160 = vst [vmem:[#allocation2 + $0x218] sm:$0xff] 0.0
      %161 = vst [vmem:[#allocation2 + $0x220] sm:$0xff] 0.0
      %162 = vst [vmem:[#allocation2 + $0x228] sm:$0xff] 0.0
      %163 = vst [vmem:[#allocation2 + $0x230] sm:$0xff] 0.0
      %164 = vst [vmem:[#allocation2 + $0x238] sm:$0xff] 0.0
      %165 = vst [vmem:[#allocation2 + $0x240] sm:$0xff] 0.0
      %166 = vst [vmem:[#allocation2 + $0x248] sm:$0xff] 0.0
      %167 = vst [vmem:[#allocation2 + $0x250] sm:$0xff] 0.0
      %168 = vst [vmem:[#allocation2 + $0x258] sm:$0xff] 0.0
      %169 = vst [vmem:[#allocation2 + $0x260] sm:$0xff] 0.0
      %170 = vst [vmem:[#allocation2 + $0x268] sm:$0xff] 0.0
      %171 = vst [vmem:[#allocation2 + $0x270] sm:$0xff] 0.0
      %172 = vst [vmem:[#allocation2 + $0x278] sm:$0xff] 0.0
      %173 = vst [vmem:[#allocation2 + $0x280] sm:$0xff] 0.0
      %174 = vst [vmem:[#allocation2 + $0x288] sm:$0xff] 0.0
      %175 = vst [vmem:[#allocation2 + $0x290] sm:$0xff] 0.0
      %176 = vst [vmem:[#allocation2 + $0x298] sm:$0xff] 0.0
      %177 = vst [vmem:[#allocation2 + $0x2a0] sm:$0xff] 0.0
      %178 = vst [vmem:[#allocation2 + $0x2a8] sm:$0xff] 0.0
      %179 = vst [vmem:[#allocation2 + $0x2b0] sm:$0xff] 0.0
      %180 = vst [vmem:[#allocation2 + $0x2b8] sm:$0xff] 0.0
      %181 = vst [vmem:[#allocation2 + $0x2c0] sm:$0xff] 0.0
      %182 = vst [vmem:[#allocation2 + $0x2c8] sm:$0xff] 0.0
      %183 = vst [vmem:[#allocation2 + $0x2d0] sm:$0xff] 0.0
      %184 = vst [vmem:[#allocation2 + $0x2d8] sm:$0xff] 0.0
      %185 = vst [vmem:[#allocation2 + $0x2e0] sm:$0xff] 0.0
      %186 = vst [vmem:[#allocation2 + $0x2e8] sm:$0xff] 0.0
      %187 = vst [vmem:[#allocation2 + $0x2f0] sm:$0xff] 0.0
      %188 = vst [vmem:[#allocation2 + $0x2f8] sm:$0xff] 0.0
      %189 = vst [vmem:[#allocation2 + $0x300] sm:$0xff] 0.0
      %190 = vst [vmem:[#allocation2 + $0x308] sm:$0xff] 0.0
      %191 = vst [vmem:[#allocation2 + $0x310] sm:$0xff] 0.0
      %192 = vst [vmem:[#allocation2 + $0x318] sm:$0xff] 0.0
      %193 = vst [vmem:[#allocation2 + $0x320] sm:$0xff] 0.0
      %194 = vst [vmem:[#allocation2 + $0x328] sm:$0xff] 0.0
      %195 = vst [vmem:[#allocation2 + $0x330] sm:$0xff] 0.0
      %196 = vst [vmem:[#allocation2 + $0x338] sm:$0xff] 0.0
      %197 = vst [vmem:[#allocation2 + $0x340] sm:$0xff] 0.0
      %198 = vst [vmem:[#allocation2 + $0x348] sm:$0xff] 0.0
      %199 = vst [vmem:[#allocation2 + $0x350] sm:$0xff] 0.0
      %200 = vst [vmem:[#allocation2 + $0x358] sm:$0xff] 0.0
      %201 = vst [vmem:[#allocation2 + $0x360] sm:$0xff] 0.0
      %202 = vst [vmem:[#allocation2 + $0x368] sm:$0xff] 0.0
      %203 = vst [vmem:[#allocation2 + $0x370] sm:$0xff] 0.0
      %204 = vst [vmem:[#allocation2 + $0x378] sm:$0xff] 0.0
      %205 = vst [vmem:[#allocation2 + $0x380] sm:$0xff] 0.0
      %206 = vst [vmem:[#allocation2 + $0x388] sm:$0xff] 0.0
      %207 = vst [vmem:[#allocation2 + $0x390] sm:$0xff] 0.0
      %208 = vst [vmem:[#allocation2 + $0x398] sm:$0xff] 0.0
      %209 = vst [vmem:[#allocation2 + $0x3a0] sm:$0xff] 0.0
      %210 = vst [vmem:[#allocation2 + $0x3a8] sm:$0xff] 0.0
      %211 = vst [vmem:[#allocation2 + $0x3b0] sm:$0xff] 0.0
      %212 = vst [vmem:[#allocation2 + $0x3b8] sm:$0xff] 0.0
      %213 = vst [vmem:[#allocation2 + $0x3c0] sm:$0xff] 0.0
      %214 = vst [vmem:[#allocation2 + $0x3c8] sm:$0xff] 0.0
      %215 = vst [vmem:[#allocation2 + $0x3d0] sm:$0xff] 0.0
      %216 = vst [vmem:[#allocation2 + $0x3d8] sm:$0xff] 0.0
      %217 = vst [vmem:[#allocation2 + $0x3e0] sm:$0xff] 0.0
      %218 = vst [vmem:[#allocation2 + $0x3e8] sm:$0xff] 0.0
      %219 = vst [vmem:[#allocation2 + $0x3f0] sm:$0xff] 0.0
      %220 = vst [vmem:[#allocation2 + $0x3f8] sm:$0xff] 0.0
    $region57: #{tpu_custom_call.1} parent=1 // pred_fallthru
      _
    %v221 = vld [vmem:[#allocation2] sm:$0xff]
    %v222 = vld [vmem:[#allocation2 + $0x8] sm:$0xff]
    %v223 = vld [vmem:[#allocation2 + $0x10] sm:$0xff]
    %v224 = vld [vmem:[#allocation2 + $0x18] sm:$0xff]
    %v225 = vld [vmem:[#allocation2 + $0x20] sm:$0xff]
    %v226 = vld [vmem:[#allocation2 + $0x28] sm:$0xff]
    %v227 = vld [vmem:[#allocation2 + $0x30] sm:$0xff]
    %v228 = vld [vmem:[#allocation2 + $0x38] sm:$0xff]
    %v229 = vld [vmem:[#allocation2 + $0x40] sm:$0xff]
    %v230 = vld [vmem:[#allocation2 + $0x48] sm:$0xff]
    %v231 = vld [vmem:[#allocation2 + $0x50] sm:$0xff]
    %v232 = vld [vmem:[#allocation2 + $0x58] sm:$0xff]
    %v233 = vld [vmem:[#allocation2 + $0x60] sm:$0xff]
    %v234 = vld [vmem:[#allocation2 + $0x68] sm:$0xff]
    %v235 = vld [vmem:[#allocation2 + $0x70] sm:$0xff]
    %v236 = vld [vmem:[#allocation2 + $0x78] sm:$0xff]
    %v237 = vld [vmem:[#allocation2 + $0x80] sm:$0xff]
    %v238 = vld [vmem:[#allocation2 + $0x88] sm:$0xff]
    %v239 = vld [vmem:[#allocation2 + $0x90] sm:$0xff]
    %v240 = vld [vmem:[#allocation2 + $0x98] sm:$0xff]
    %v241 = vld [vmem:[#allocation2 + $0xa0] sm:$0xff]
    %v242 = vld [vmem:[#allocation2 + $0xa8] sm:$0xff]
    %v243 = vld [vmem:[#allocation2 + $0xb0] sm:$0xff]
    %v244 = vld [vmem:[#allocation2 + $0xb8] sm:$0xff]
    %v245 = vld [vmem:[#allocation2 + $0xc0] sm:$0xff]
    %v246 = vld [vmem:[#allocation2 + $0xc8] sm:$0xff]
    %v247 = vld [vmem:[#allocation2 + $0xd0] sm:$0xff]
    %v248 = vld [vmem:[#allocation2 + $0xd8] sm:$0xff]
    %v249 = vld [vmem:[#allocation2 + $0xe0] sm:$0xff]
    %v250 = vld [vmem:[#allocation2 + $0xe8] sm:$0xff]
    %v251 = vld [vmem:[#allocation2 + $0xf0] sm:$0xff]
    %v252 = vld [vmem:[#allocation2 + $0xf8] sm:$0xff]
    %v253 = vld [vmem:[#allocation2 + $0x100] sm:$0xff]
    %v254 = vld [vmem:[#allocation2 + $0x108] sm:$0xff]
    %v255 = vld [vmem:[#allocation2 + $0x110] sm:$0xff]
    %v256 = vld [vmem:[#allocation2 + $0x118] sm:$0xff]
    %v257 = vld [vmem:[#allocation2 + $0x120] sm:$0xff]
    %v258 = vld [vmem:[#allocation2 + $0x128] sm:$0xff]
    %v259 = vld [vmem:[#allocation2 + $0x130] sm:$0xff]
    %v260 = vld [vmem:[#allocation2 + $0x138] sm:$0xff]
    %v261 = vld [vmem:[#allocation2 + $0x140] sm:$0xff]
    %v262 = vld [vmem:[#allocation2 + $0x148] sm:$0xff]
    %v263 = vld [vmem:[#allocation2 + $0x150] sm:$0xff]
    %v264 = vld [vmem:[#allocation2 + $0x158] sm:$0xff]
    %v265 = vld [vmem:[#allocation2 + $0x160] sm:$0xff]
    %v266 = vld [vmem:[#allocation2 + $0x168] sm:$0xff]
    %v267 = vld [vmem:[#allocation2 + $0x170] sm:$0xff]
    %v268 = vld [vmem:[#allocation2 + $0x178] sm:$0xff]
    %v269 = vld [vmem:[#allocation2 + $0x180] sm:$0xff]
    %v270 = vld [vmem:[#allocation2 + $0x188] sm:$0xff]
    %v271 = vld [vmem:[#allocation2 + $0x190] sm:$0xff]
    %v272 = vld [vmem:[#allocation2 + $0x198] sm:$0xff]
    %v273 = vld [vmem:[#allocation2 + $0x1a0] sm:$0xff]
    %v274 = vld [vmem:[#allocation2 + $0x1a8] sm:$0xff]
    %v275 = vld [vmem:[#allocation2 + $0x1b0] sm:$0xff]
    %v276 = vld [vmem:[#allocation2 + $0x1b8] sm:$0xff]
    %v277 = vld [vmem:[#allocation2 + $0x1c0] sm:$0xff]
    %v278 = vld [vmem:[#allocation2 + $0x1c8] sm:$0xff]
    %v279 = vld [vmem:[#allocation2 + $0x1d0] sm:$0xff]
    %v280 = vld [vmem:[#allocation2 + $0x1d8] sm:$0xff]
    %v281 = vld [vmem:[#allocation2 + $0x1e0] sm:$0xff]
    %v282 = vld [vmem:[#allocation2 + $0x1e8] sm:$0xff]
    %v283 = vld [vmem:[#allocation2 + $0x1f0] sm:$0xff]
    %v284 = vld [vmem:[#allocation2 + $0x1f8] sm:$0xff]
    %v285 = vld [vmem:[#allocation2 + $0x200] sm:$0xff]
    %v286 = vld [vmem:[#allocation2 + $0x208] sm:$0xff]
    %v287 = vld [vmem:[#allocation2 + $0x210] sm:$0xff]
    %v288 = vld [vmem:[#allocation2 + $0x218] sm:$0xff]
    %v289 = vld [vmem:[#allocation2 + $0x220] sm:$0xff]
    %v290 = vld [vmem:[#allocation2 + $0x228] sm:$0xff]
    %v291 = vld [vmem:[#allocation2 + $0x230] sm:$0xff]
    %v292 = vld [vmem:[#allocation2 + $0x238] sm:$0xff]
    %v293 = vld [vmem:[#allocation2 + $0x240] sm:$0xff]
    %v294 = vld [vmem:[#allocation2 + $0x248] sm:$0xff]
    %v295 = vld [vmem:[#allocation2 + $0x250] sm:$0xff]
    %v296 = vld [vmem:[#allocation2 + $0x258] sm:$0xff]
    %v297 = vld [vmem:[#allocation2 + $0x260] sm:$0xff]
    %v298 = vld [vmem:[#allocation2 + $0x268] sm:$0xff]
    %v299 = vld [vmem:[#allocation2 + $0x270] sm:$0xff]
    %v300 = vld [vmem:[#allocation2 + $0x278] sm:$0xff]
    %v301 = vld [vmem:[#allocation2 + $0x280] sm:$0xff]
    %v302 = vld [vmem:[#allocation2 + $0x288] sm:$0xff]
    %v303 = vld [vmem:[#allocation2 + $0x290] sm:$0xff]
    %v304 = vld [vmem:[#allocation2 + $0x298] sm:$0xff]
    %v305 = vld [vmem:[#allocation2 + $0x2a0] sm:$0xff]
    %v306 = vld [vmem:[#allocation2 + $0x2a8] sm:$0xff]
    %v307 = vld [vmem:[#allocation2 + $0x2b0] sm:$0xff]
    %v308 = vld [vmem:[#allocation2 + $0x2b8] sm:$0xff]
    %v309 = vld [vmem:[#allocation2 + $0x2c0] sm:$0xff]
    %v310 = vld [vmem:[#allocation2 + $0x2c8] sm:$0xff]
    %v311 = vld [vmem:[#allocation2 + $0x2d0] sm:$0xff]
    %v312 = vld [vmem:[#allocation2 + $0x2d8] sm:$0xff]
    %v313 = vld [vmem:[#allocation2 + $0x2e0] sm:$0xff]
    %v314 = vld [vmem:[#allocation2 + $0x2e8] sm:$0xff]
    %v315 = vld [vmem:[#allocation2 + $0x2f0] sm:$0xff]
    %v316 = vld [vmem:[#allocation2 + $0x2f8] sm:$0xff]
    %v317 = vld [vmem:[#allocation2 + $0x300] sm:$0xff]
    %v318 = vld [vmem:[#allocation2 + $0x308] sm:$0xff]
    %v319 = vld [vmem:[#allocation2 + $0x310] sm:$0xff]
    %v320 = vld [vmem:[#allocation2 + $0x318] sm:$0xff]
    %v321 = vld [vmem:[#allocation2 + $0x320] sm:$0xff]
    %v322 = vld [vmem:[#allocation2 + $0x328] sm:$0xff]
    %v323 = vld [vmem:[#allocation2 + $0x330] sm:$0xff]
    %v324 = vld [vmem:[#allocation2 + $0x338] sm:$0xff]
    %v325 = vld [vmem:[#allocation2 + $0x340] sm:$0xff]
    %v326 = vld [vmem:[#allocation2 + $0x348] sm:$0xff]
    %v327 = vld [vmem:[#allocation2 + $0x350] sm:$0xff]
    %v328 = vld [vmem:[#allocation2 + $0x358] sm:$0xff]
    %v329 = vld [vmem:[#allocation2 + $0x360] sm:$0xff]
    %v330 = vld [vmem:[#allocation2 + $0x368] sm:$0xff]
    %v331 = vld [vmem:[#allocation2 + $0x370] sm:$0xff]
    %v332 = vld [vmem:[#allocation2 + $0x378] sm:$0xff]
    %v333 = vld [vmem:[#allocation2 + $0x380] sm:$0xff]
    %v334 = vld [vmem:[#allocation2 + $0x388] sm:$0xff]
    %v335 = vld [vmem:[#allocation2 + $0x390] sm:$0xff]
    %v336 = vld [vmem:[#allocation2 + $0x398] sm:$0xff]
    %v337 = vld [vmem:[#allocation2 + $0x3a0] sm:$0xff]
    %v338 = vld [vmem:[#allocation2 + $0x3a8] sm:$0xff]
    %v339 = vld [vmem:[#allocation2 + $0x3b0] sm:$0xff]
    %v340 = vld [vmem:[#allocation2 + $0x3b8] sm:$0xff]
    %v341 = vld [vmem:[#allocation2 + $0x3c0] sm:$0xff]
    %v342 = vld [vmem:[#allocation2 + $0x3c8] sm:$0xff]
    %v343 = vld [vmem:[#allocation2 + $0x3d0] sm:$0xff]
    %v344 = vld [vmem:[#allocation2 + $0x3d8] sm:$0xff]
    %v345 = vld [vmem:[#allocation2 + $0x3e0] sm:$0xff]
    %v346 = vld [vmem:[#allocation2 + $0x3e8] sm:$0xff]
    %v347 = vld [vmem:[#allocation2 + $0x3f0] sm:$0xff]
    %v348 = vld [vmem:[#allocation2 + $0x3f8] sm:$0xff]
    %v349 = vld [vmem:[#allocation4] sm:$0xff]
    %v350 = vld [vmem:[#allocation4 + $0x8] sm:$0xff]
    %v351 = vld [vmem:[#allocation4 + $0x10] sm:$0xff]
    %v352 = vld [vmem:[#allocation4 + $0x18] sm:$0xff]
    %v353 = vld [vmem:[#allocation4 + $0x20] sm:$0xff]
    %v354 = vld [vmem:[#allocation4 + $0x28] sm:$0xff]
    %v355 = vld [vmem:[#allocation4 + $0x30] sm:$0xff]
    %v356 = vld [vmem:[#allocation4 + $0x38] sm:$0xff]
    %v357 = vld [vmem:[#allocation4 + $0x40] sm:$0xff]
    %v358 = vld [vmem:[#allocation4 + $0x48] sm:$0xff]
    %v359 = vld [vmem:[#allocation4 + $0x50] sm:$0xff]
    %v360 = vld [vmem:[#allocation4 + $0x58] sm:$0xff]
    %v361 = vld [vmem:[#allocation4 + $0x60] sm:$0xff]
    %v362 = vld [vmem:[#allocation4 + $0x68] sm:$0xff]
    %v363 = vld [vmem:[#allocation4 + $0x70] sm:$0xff]
    %v364 = vld [vmem:[#allocation4 + $0x78] sm:$0xff]
    %v365 = vld [vmem:[#allocation4 + $0x80] sm:$0xff]
    %v366 = vld [vmem:[#allocation4 + $0x88] sm:$0xff]
    %v367 = vld [vmem:[#allocation4 + $0x90] sm:$0xff]
    %v368 = vld [vmem:[#allocation4 + $0x98] sm:$0xff]
    %v369 = vld [vmem:[#allocation4 + $0xa0] sm:$0xff]
    %v370 = vld [vmem:[#allocation4 + $0xa8] sm:$0xff]
    %v371 = vld [vmem:[#allocation4 + $0xb0] sm:$0xff]
    %v372 = vld [vmem:[#allocation4 + $0xb8] sm:$0xff]
    %v373 = vld [vmem:[#allocation4 + $0xc0] sm:$0xff]
    %v374 = vld [vmem:[#allocation4 + $0xc8] sm:$0xff]
    %v375 = vld [vmem:[#allocation4 + $0xd0] sm:$0xff]
    %v376 = vld [vmem:[#allocation4 + $0xd8] sm:$0xff]
    %v377 = vld [vmem:[#allocation4 + $0xe0] sm:$0xff]
    %v378 = vld [vmem:[#allocation4 + $0xe8] sm:$0xff]
    %v379 = vld [vmem:[#allocation4 + $0xf0] sm:$0xff]
    %v380 = vld [vmem:[#allocation4 + $0xf8] sm:$0xff]
    %v381 = vpack.c.bf16 %v350, %v349
    %v382 = vpack.c.bf16 %v352, %v351
    %v383 = vpack.c.bf16 %v354, %v353
    %v384 = vpack.c.bf16 %v356, %v355
    %v385 = vpack.c.bf16 %v358, %v357
    %v386 = vpack.c.bf16 %v360, %v359
    %v387 = vpack.c.bf16 %v362, %v361
    %v388 = vpack.c.bf16 %v364, %v363
    %v389 = vpack.c.bf16 %v366, %v365
    %v390 = vpack.c.bf16 %v368, %v367
    %v391 = vpack.c.bf16 %v370, %v369
    %v392 = vpack.c.bf16 %v372, %v371
    %v393 = vpack.c.bf16 %v374, %v373
    %v394 = vpack.c.bf16 %v376, %v375
    %v395 = vpack.c.bf16 %v378, %v377
    %v396 = vpack.c.bf16 %v380, %v379
    %v397 = vld [vmem:[#allocation6] sm:$0xff]
    %v398 = vld [vmem:[#allocation6 + $0x8] sm:$0xff]
    %v399 = vld [vmem:[#allocation6 + $0x10] sm:$0xff]
    %v400 = vld [vmem:[#allocation6 + $0x18] sm:$0xff]
    %v401 = vld [vmem:[#allocation6 + $0x20] sm:$0xff]
    %v402 = vld [vmem:[#allocation6 + $0x28] sm:$0xff]
    %v403 = vld [vmem:[#allocation6 + $0x30] sm:$0xff]
    %v404 = vld [vmem:[#allocation6 + $0x38] sm:$0xff]
    %v405 = vld [vmem:[#allocation6 + $0x40] sm:$0xff]
    %v406 = vld [vmem:[#allocation6 + $0x48] sm:$0xff]
    %v407 = vld [vmem:[#allocation6 + $0x50] sm:$0xff]
    %v408 = vld [vmem:[#allocation6 + $0x58] sm:$0xff]
    %v409 = vld [vmem:[#allocation6 + $0x60] sm:$0xff]
    %v410 = vld [vmem:[#allocation6 + $0x68] sm:$0xff]
    %v411 = vld [vmem:[#allocation6 + $0x70] sm:$0xff]
    %v412 = vld [vmem:[#allocation6 + $0x78] sm:$0xff]
    %v413 = vld [vmem:[#allocation6 + $0x80] sm:$0xff]
    %v414 = vld [vmem:[#allocation6 + $0x88] sm:$0xff]
    %v415 = vld [vmem:[#allocation6 + $0x90] sm:$0xff]
    %v416 = vld [vmem:[#allocation6 + $0x98] sm:$0xff]
    %v417 = vld [vmem:[#allocation6 + $0xa0] sm:$0xff]
    %v418 = vld [vmem:[#allocation6 + $0xa8] sm:$0xff]
    %v419 = vld [vmem:[#allocation6 + $0xb0] sm:$0xff]
    %v420 = vld [vmem:[#allocation6 + $0xb8] sm:$0xff]
    %v421 = vld [vmem:[#allocation6 + $0xc0] sm:$0xff]
    %v422 = vld [vmem:[#allocation6 + $0xc8] sm:$0xff]
    %v423 = vld [vmem:[#allocation6 + $0xd0] sm:$0xff]
    %v424 = vld [vmem:[#allocation6 + $0xd8] sm:$0xff]
    %v425 = vld [vmem:[#allocation6 + $0xe0] sm:$0xff]
    %v426 = vld [vmem:[#allocation6 + $0xe8] sm:$0xff]
    %v427 = vld [vmem:[#allocation6 + $0xf0] sm:$0xff]
    %v428 = vld [vmem:[#allocation6 + $0xf8] sm:$0xff]
    %v461 = vunpack.c.l.b16 %v397
    %v462 = vunpack.c.h.b16 %v397
    %v463 = vunpack.c.l.b16 %v398
    %v464 = vunpack.c.h.b16 %v398
    %v465 = vunpack.c.l.b16 %v399
    %v466 = vunpack.c.h.b16 %v399
    %v467 = vunpack.c.l.b16 %v400
    %v468 = vunpack.c.h.b16 %v400
    %v469 = vunpack.c.l.b16 %v401
    %v470 = vunpack.c.h.b16 %v401
    %v471 = vunpack.c.l.b16 %v402
    %v472 = vunpack.c.h.b16 %v402
    %v473 = vunpack.c.l.b16 %v403
    %v474 = vunpack.c.h.b16 %v403
    %v475 = vunpack.c.l.b16 %v404
    %v476 = vunpack.c.h.b16 %v404
    %v477 = vunpack.c.l.b16 %v405
    %v478 = vunpack.c.h.b16 %v405
    %v479 = vunpack.c.l.b16 %v406
    %v480 = vunpack.c.h.b16 %v406
    %v481 = vunpack.c.l.b16 %v407
    %v482 = vunpack.c.h.b16 %v407
    %v483 = vunpack.c.l.b16 %v408
    %v484 = vunpack.c.h.b16 %v408
    %v485 = vunpack.c.l.b16 %v409
    %v486 = vunpack.c.h.b16 %v409
    %v487 = vunpack.c.l.b16 %v410
    %v488 = vunpack.c.h.b16 %v410
    %v489 = vunpack.c.l.b16 %v411
    %v490 = vunpack.c.h.b16 %v411
    %v491 = vunpack.c.l.b16 %v412
    %v492 = vunpack.c.h.b16 %v412
    %v493 = vunpack.c.l.b16 %v413
    %v494 = vunpack.c.h.b16 %v413
    %v495 = vunpack.c.l.b16 %v414
    %v496 = vunpack.c.h.b16 %v414
    %v497 = vunpack.c.l.b16 %v415
    %v498 = vunpack.c.h.b16 %v415
    %v499 = vunpack.c.l.b16 %v416
    %v500 = vunpack.c.h.b16 %v416
    %v501 = vunpack.c.l.b16 %v417
    %v502 = vunpack.c.h.b16 %v417
    %v503 = vunpack.c.l.b16 %v418
    %v504 = vunpack.c.h.b16 %v418
    %v505 = vunpack.c.l.b16 %v419
    %v506 = vunpack.c.h.b16 %v419
    %v507 = vunpack.c.l.b16 %v420
    %v508 = vunpack.c.h.b16 %v420
    %v509 = vunpack.c.l.b16 %v421
    %v510 = vunpack.c.h.b16 %v421
    %v511 = vunpack.c.l.b16 %v422
    %v512 = vunpack.c.h.b16 %v422
    %v513 = vunpack.c.l.b16 %v423
    %v514 = vunpack.c.h.b16 %v423
    %v515 = vunpack.c.l.b16 %v424
    %v516 = vunpack.c.h.b16 %v424
    %v517 = vunpack.c.l.b16 %v425
    %v518 = vunpack.c.h.b16 %v425
    %v519 = vunpack.c.l.b16 %v426
    %v520 = vunpack.c.h.b16 %v426
    %v521 = vunpack.c.l.b16 %v427
    %v522 = vunpack.c.h.b16 %v427
    %v523 = vunpack.c.l.b16 %v428
    %v524 = vunpack.c.h.b16 %v428
    %v525 = vpack.c.b16 %v465, %v461
    %v526 = vpack.c.b16 %v466, %v462
    %v527 = vpack.c.b16 %v467, %v463
    %v528 = vpack.c.b16 %v468, %v464
    %v529 = vpack.c.b16 %v473, %v469
    %v530 = vpack.c.b16 %v474, %v470
    %v531 = vpack.c.b16 %v475, %v471
    %v532 = vpack.c.b16 %v476, %v472
    %v533 = vpack.c.b16 %v481, %v477
    %v534 = vpack.c.b16 %v482, %v478
    %v535 = vpack.c.b16 %v483, %v479
    %v536 = vpack.c.b16 %v484, %v480
    %v537 = vpack.c.b16 %v489, %v485
    %v538 = vpack.c.b16 %v490, %v486
    %v539 = vpack.c.b16 %v491, %v487
    %v540 = vpack.c.b16 %v492, %v488
    %v541 = vpack.c.b16 %v497, %v493
    %v542 = vpack.c.b16 %v498, %v494
    %v543 = vpack.c.b16 %v499, %v495
    %v544 = vpack.c.b16 %v500, %v496
    %v545 = vpack.c.b16 %v505, %v501
    %v546 = vpack.c.b16 %v506, %v502
    %v547 = vpack.c.b16 %v507, %v503
    %v548 = vpack.c.b16 %v508, %v504
    %v549 = vpack.c.b16 %v513, %v509
    %v550 = vpack.c.b16 %v514, %v510
    %v551 = vpack.c.b16 %v515, %v511
    %v552 = vpack.c.b16 %v516, %v512
    %v553 = vpack.c.b16 %v521, %v517
    %v554 = vpack.c.b16 %v522, %v518
    %v555 = vpack.c.b16 %v523, %v519
    %v556 = vpack.c.b16 %v524, %v520
    %589 = vmatprep.subr.bf16.mxu0 %v526
    %590 = vmatpush1.bf16.msra.mxu0 %v525
    %591 = vmatprep.subr.bf16.mxu0 %v530
    %592 = vmatpush1.bf16.msra.mxu0 %v529
    %593 = vmatprep.subr.bf16.mxu0 %v534
    %594 = vmatpush1.bf16.msra.mxu0 %v533
    %595 = vmatprep.subr.bf16.mxu0 %v538
    %596 = vmatpush1.bf16.msra.mxu0 %v537
    %597 = vmatprep.subr.bf16.mxu0 %v542
    %598 = vmatpush1.bf16.msra.mxu0 %v541
    %599 = vmatprep.subr.bf16.mxu0 %v546
    %600 = vmatpush1.bf16.msra.mxu0 %v545
    %601 = vmatprep.subr.bf16.mxu0 %v550
    %602 = vmatpush1.bf16.msra.mxu0 %v549
    %603 = vmatprep.subr.bf16.mxu0 %v554
    %604 = vmatpush1.bf16.msra.mxu0 %v553
    %605 = vmatprep.subr.bf16.mxu0 0
    %606 = vmatpush1.bf16.msra.mxu0 0
    %607 = vmatprep.subr.bf16.mxu0 0
    %608 = vmatpush1.bf16.msra.mxu0 0
    %609 = vmatprep.subr.bf16.mxu0 0
    %610 = vmatpush1.bf16.msra.mxu0 0
    %611 = vmatprep.subr.bf16.mxu0 0
    %612 = vmatpush1.bf16.msra.mxu0 0
    %613 = vmatprep.subr.bf16.mxu0 0
    %614 = vmatpush1.bf16.msra.mxu0 0
    %615 = vmatprep.subr.bf16.mxu0 0
    %616 = vmatpush1.bf16.msra.mxu0 0
    %617 = vmatprep.subr.bf16.mxu0 0
    %618 = vmatpush1.bf16.msra.mxu0 0
    %619 = vmatprep.subr.bf16.mxu0 0
    %620 = vmatpush1.bf16.msra.mxu0 0
    %621 = vmatprep.mubr.bf16.mxu0 0
    %622 = vmatmul.mubr.bf16.gmra.mrb[0].mxu0 %v381
    %v623 = vpop.f32.mrb[0].mxu0
    %v624 = vadd.f32 0.0, %v623
    %v625 = vpop.f32.mrb[0].mxu0
    %v626 = vadd.f32 0.0, %v625
    %v627 = vpop.f32.mrb[0].mxu0
    %v628 = vadd.f32 0.0, %v627
    %v629 = vpop.f32.mrb[0].mxu0
    %v630 = vadd.f32 0.0, %v629
    %631 = vmatprep.mubr.bf16.mxu0 0
    %632 = vmatmul.mubr.bf16.gmra.mrb[0].mxu0 %v382
    %v633 = vpop.f32.mrb[0].mxu0
    %v634 = vadd.f32 0.0, %v633
    %v635 = vpop.f32.mrb[0].mxu0
    %v636 = vadd.f32 0.0, %v635
    %v637 = vpop.f32.mrb[0].mxu0
    %v638 = vadd.f32 0.0, %v637
    %v639 = vpop.f32.mrb[0].mxu0
    %v640 = vadd.f32 0.0, %v639
    %641 = vmatprep.mubr.bf16.mxu0 0
    %642 = vmatmul.mubr.bf16.gmra.mrb[0].mxu0 %v383
    %v643 = vpop.f32.mrb[0].mxu0
    %v644 = vadd.f32 0.0, %v643
    %v645 = vpop.f32.mrb[0].mxu0
    %v646 = vadd.f32 0.0, %v645
    %v647 = vpop.f32.mrb[0].mxu0
    %v648 = vadd.f32 0.0, %v647
    %v649 = vpop.f32.mrb[0].mxu0
    %v650 = vadd.f32 0.0, %v649
    %651 = vmatprep.mubr.bf16.mxu0 0
    %652 = vmatmul.mubr.bf16.gmra.mrb[0].mxu0 %v384
    %v653 = vpop.f32.mrb[0].mxu0
    %v654 = vadd.f32 0.0, %v653
    %v655 = vpop.f32.mrb[0].mxu0
    %v656 = vadd.f32 0.0, %v655
    %v657 = vpop.f32.mrb[0].mxu0
    %v658 = vadd.f32 0.0, %v657
    %v659 = vpop.f32.mrb[0].mxu0
    %v660 = vadd.f32 0.0, %v659
    %661 = vmatprep.mubr.bf16.mxu0 0
    %662 = vmatmul.mubr.bf16.gmra.mrb[0].mxu0 %v385
    %v663 = vpop.f32.mrb[0].mxu0
    %v664 = vadd.f32 0.0, %v663
    %v665 = vpop.f32.mrb[0].mxu0
    %v666 = vadd.f32 0.0, %v665
    %v667 = vpop.f32.mrb[0].mxu0
    %v668 = vadd.f32 0.0, %v667
    %v669 = vpop.f32.mrb[0].mxu0
    %v670 = vadd.f32 0.0, %v669
    %671 = vmatprep.mubr.bf16.mxu0 0
    %672 = vmatmul.mubr.bf16.gmra.mrb[0].mxu0 %v386
    %v673 = vpop.f32.mrb[0].mxu0
    %v674 = vadd.f32 0.0, %v673
    %v675 = vpop.f32.mrb[0].mxu0
    %v676 = vadd.f32 0.0, %v675
    %v677 = vpop.f32.mrb[0].mxu0
    %v678 = vadd.f32 0.0, %v677
    %v679 = vpop.f32.mrb[0].mxu0
    %v680 = vadd.f32 0.0, %v679
    %681 = vmatprep.mubr.bf16.mxu0 0
    %682 = vmatmul.mubr.bf16.gmra.mrb[0].mxu0 %v387
    %v683 = vpop.f32.mrb[0].mxu0
    %v684 = vadd.f32 0.0, %v683
    %v685 = vpop.f32.mrb[0].mxu0
    %v686 = vadd.f32 0.0, %v685
    %v687 = vpop.f32.mrb[0].mxu0
    %v688 = vadd.f32 0.0, %v687
    %v689 = vpop.f32.mrb[0].mxu0
    %v690 = vadd.f32 0.0, %v689
    %691 = vmatprep.mubr.bf16.mxu0 0
    %692 = vmatmul.mubr.bf16.gmra.mrb[0].mxu0 %v388
    %v693 = vpop.f32.mrb[0].mxu0
    %v694 = vadd.f32 0.0, %v693
    %v695 = vpop.f32.mrb[0].mxu0
    %v696 = vadd.f32 0.0, %v695
    %v697 = vpop.f32.mrb[0].mxu0
    %v698 = vadd.f32 0.0, %v697
    %v699 = vpop.f32.mrb[0].mxu0
    %v700 = vadd.f32 0.0, %v699
    %701 = vmatprep.mubr.bf16.mxu0 0
    %702 = vmatmul.mubr.bf16.gmra.mrb[0].mxu0 %v389
    %v703 = vpop.f32.mrb[0].mxu0
    %v704 = vadd.f32 0.0, %v703
    %v705 = vpop.f32.mrb[0].mxu0
    %v706 = vadd.f32 0.0, %v705
    %v707 = vpop.f32.mrb[0].mxu0
    %v708 = vadd.f32 0.0, %v707
    %v709 = vpop.f32.mrb[0].mxu0
    %v710 = vadd.f32 0.0, %v709
    %711 = vmatprep.mubr.bf16.mxu0 0
    %712 = vmatmul.mubr.bf16.gmra.mrb[0].mxu0 %v390
    %v713 = vpop.f32.mrb[0].mxu0
    %v714 = vadd.f32 0.0, %v713
    %v715 = vpop.f32.mrb[0].mxu0
    %v716 = vadd.f32 0.0, %v715
    %v717 = vpop.f32.mrb[0].mxu0
    %v718 = vadd.f32 0.0, %v717
    %v719 = vpop.f32.mrb[0].mxu0
    %v720 = vadd.f32 0.0, %v719
    %721 = vmatprep.mubr.bf16.mxu0 0
    %722 = vmatmul.mubr.bf16.gmra.mrb[0].mxu0 %v391
    %v723 = vpop.f32.mrb[0].mxu0
    %v724 = vadd.f32 0.0, %v723
    %v725 = vpop.f32.mrb[0].mxu0
    %v726 = vadd.f32 0.0, %v725
    %v727 = vpop.f32.mrb[0].mxu0
    %v728 = vadd.f32 0.0, %v727
    %v729 = vpop.f32.mrb[0].mxu0
    %v730 = vadd.f32 0.0, %v729
    %731 = vmatprep.mubr.bf16.mxu0 0
    %732 = vmatmul.mubr.bf16.gmra.mrb[0].mxu0 %v392
    %v733 = vpop.f32.mrb[0].mxu0
    %v734 = vadd.f32 0.0, %v733
    %v735 = vpop.f32.mrb[0].mxu0
    %v736 = vadd.f32 0.0, %v735
    %v737 = vpop.f32.mrb[0].mxu0
    %v738 = vadd.f32 0.0, %v737
    %v739 = vpop.f32.mrb[0].mxu0
    %v740 = vadd.f32 0.0, %v739
    %741 = vmatprep.mubr.bf16.mxu0 0
    %742 = vmatmul.mubr.bf16.gmra.mrb[0].mxu0 %v393
    %v743 = vpop.f32.mrb[0].mxu0
    %v744 = vadd.f32 0.0, %v743
    %v745 = vpop.f32.mrb[0].mxu0
    %v746 = vadd.f32 0.0, %v745
    %v747 = vpop.f32.mrb[0].mxu0
    %v748 = vadd.f32 0.0, %v747
    %v749 = vpop.f32.mrb[0].mxu0
    %v750 = vadd.f32 0.0, %v749
    %751 = vmatprep.mubr.bf16.mxu0 0
    %752 = vmatmul.mubr.bf16.gmra.mrb[0].mxu0 %v394
    %v753 = vpop.f32.mrb[0].mxu0
    %v754 = vadd.f32 0.0, %v753
    %v755 = vpop.f32.mrb[0].mxu0
    %v756 = vadd.f32 0.0, %v755
    %v757 = vpop.f32.mrb[0].mxu0
    %v758 = vadd.f32 0.0, %v757
    %v759 = vpop.f32.mrb[0].mxu0
    %v760 = vadd.f32 0.0, %v759
    %761 = vmatprep.mubr.bf16.mxu0 0
    %762 = vmatmul.mubr.bf16.gmra.mrb[0].mxu0 %v395
    %v763 = vpop.f32.mrb[0].mxu0
    %v764 = vadd.f32 0.0, %v763
    %v765 = vpop.f32.mrb[0].mxu0
    %v766 = vadd.f32 0.0, %v765
    %v767 = vpop.f32.mrb[0].mxu0
    %v768 = vadd.f32 0.0, %v767
    %v769 = vpop.f32.mrb[0].mxu0
    %v770 = vadd.f32 0.0, %v769
    %771 = vmatprep.mubr.bf16.mxu0 0
    %772 = vmatmul.mubr.bf16.gmra.mrb[0].mxu0 %v396
    %v773 = vpop.f32.mrb[0].mxu0
    %v774 = vadd.f32 0.0, %v773
    %v775 = vpop.f32.mrb[0].mxu0
    %v776 = vadd.f32 0.0, %v775
    %v777 = vpop.f32.mrb[0].mxu0
    %v778 = vadd.f32 0.0, %v777
    %v779 = vpop.f32.mrb[0].mxu0
    %v780 = vadd.f32 0.0, %v779
    %781 = vdwg.mxu0
    %782 = vmatprep.subr.bf16.mxu0 %v528
    %783 = vmatpush1.bf16.msra.mxu0 %v527
    %784 = vmatprep.subr.bf16.mxu0 %v532
    %785 = vmatpush1.bf16.msra.mxu0 %v531
    %786 = vmatprep.subr.bf16.mxu0 %v536
    %787 = vmatpush1.bf16.msra.mxu0 %v535
    %788 = vmatprep.subr.bf16.mxu0 %v540
    %789 = vmatpush1.bf16.msra.mxu0 %v539
    %790 = vmatprep.subr.bf16.mxu0 %v544
    %791 = vmatpush1.bf16.msra.mxu0 %v543
    %792 = vmatprep.subr.bf16.mxu0 %v548
    %793 = vmatpush1.bf16.msra.mxu0 %v547
    %794 = vmatprep.subr.bf16.mxu0 %v552
    %795 = vmatpush1.bf16.msra.mxu0 %v551
    %796 = vmatprep.subr.bf16.mxu0 %v556
    %797 = vmatpush1.bf16.msra.mxu0 %v555
    %798 = vmatprep.subr.bf16.mxu0 0
    %799 = vmatpush1.bf16.msra.mxu0 0
    %800 = vmatprep.subr.bf16.mxu0 0
    %801 = vmatpush1.bf16.msra.mxu0 0
    %802 = vmatprep.subr.bf16.mxu0 0
    %803 = vmatpush1.bf16.msra.mxu0 0
    %804 = vmatprep.subr.bf16.mxu0 0
    %805 = vmatpush1.bf16.msra.mxu0 0
    %806 = vmatprep.subr.bf16.mxu0 0
    %807 = vmatpush1.bf16.msra.mxu0 0
    %808 = vmatprep.subr.bf16.mxu0 0
    %809 = vmatpush1.bf16.msra.mxu0 0
    %810 = vmatprep.subr.bf16.mxu0 0
    %811 = vmatpush1.bf16.msra.mxu0 0
    %812 = vmatprep.subr.bf16.mxu0 0
    %813 = vmatpush1.bf16.msra.mxu0 0
    %814 = vmatprep.mubr.bf16.mxu0 0
    %815 = vmatmul.mubr.bf16.gmra.mrb[0].mxu0 %v381
    %v816 = vpop.f32.mrb[0].mxu0
    %v817 = vadd.f32 0.0, %v816
    %v818 = vpop.f32.mrb[0].mxu0
    %v819 = vadd.f32 0.0, %v818
    %v820 = vpop.f32.mrb[0].mxu0
    %v821 = vadd.f32 0.0, %v820
    %v822 = vpop.f32.mrb[0].mxu0
    %v823 = vadd.f32 0.0, %v822
    %824 = vmatprep.mubr.bf16.mxu0 0
    %825 = vmatmul.mubr.bf16.gmra.mrb[0].mxu0 %v382
    %v826 = vpop.f32.mrb[0].mxu0
    %v827 = vadd.f32 0.0, %v826
    %v828 = vpop.f32.mrb[0].mxu0
    %v829 = vadd.f32 0.0, %v828
    %v830 = vpop.f32.mrb[0].mxu0
    %v831 = vadd.f32 0.0, %v830
    %v832 = vpop.f32.mrb[0].mxu0
    %v833 = vadd.f32 0.0, %v832
    %834 = vmatprep.mubr.bf16.mxu0 0
    %835 = vmatmul.mubr.bf16.gmra.mrb[0].mxu0 %v383
    %v836 = vpop.f32.mrb[0].mxu0
    %v837 = vadd.f32 0.0, %v836
    %v838 = vpop.f32.mrb[0].mxu0
    %v839 = vadd.f32 0.0, %v838
    %v840 = vpop.f32.mrb[0].mxu0
    %v841 = vadd.f32 0.0, %v840
    %v842 = vpop.f32.mrb[0].mxu0
    %v843 = vadd.f32 0.0, %v842
    %844 = vmatprep.mubr.bf16.mxu0 0
    %845 = vmatmul.mubr.bf16.gmra.mrb[0].mxu0 %v384
    %v846 = vpop.f32.mrb[0].mxu0
    %v847 = vadd.f32 0.0, %v846
    %v848 = vpop.f32.mrb[0].mxu0
    %v849 = vadd.f32 0.0, %v848
    %v850 = vpop.f32.mrb[0].mxu0
    %v851 = vadd.f32 0.0, %v850
    %v852 = vpop.f32.mrb[0].mxu0
    %v853 = vadd.f32 0.0, %v852
    %854 = vmatprep.mubr.bf16.mxu0 0
    %855 = vmatmul.mubr.bf16.gmra.mrb[0].mxu0 %v385
    %v856 = vpop.f32.mrb[0].mxu0
    %v857 = vadd.f32 0.0, %v856
    %v858 = vpop.f32.mrb[0].mxu0
    %v859 = vadd.f32 0.0, %v858
    %v860 = vpop.f32.mrb[0].mxu0
    %v861 = vadd.f32 0.0, %v860
    %v862 = vpop.f32.mrb[0].mxu0
    %v863 = vadd.f32 0.0, %v862
    %864 = vmatprep.mubr.bf16.mxu0 0
    %865 = vmatmul.mubr.bf16.gmra.mrb[0].mxu0 %v386
    %v866 = vpop.f32.mrb[0].mxu0
    %v867 = vadd.f32 0.0, %v866
    %v868 = vpop.f32.mrb[0].mxu0
    %v869 = vadd.f32 0.0, %v868
    %v870 = vpop.f32.mrb[0].mxu0
    %v871 = vadd.f32 0.0, %v870
    %v872 = vpop.f32.mrb[0].mxu0
    %v873 = vadd.f32 0.0, %v872
    %874 = vmatprep.mubr.bf16.mxu0 0
    %875 = vmatmul.mubr.bf16.gmra.mrb[0].mxu0 %v387
    %v876 = vpop.f32.mrb[0].mxu0
    %v877 = vadd.f32 0.0, %v876
    %v878 = vpop.f32.mrb[0].mxu0
    %v879 = vadd.f32 0.0, %v878
    %v880 = vpop.f32.mrb[0].mxu0
    %v881 = vadd.f32 0.0, %v880
    %v882 = vpop.f32.mrb[0].mxu0
    %v883 = vadd.f32 0.0, %v882
    %884 = vmatprep.mubr.bf16.mxu0 0
    %885 = vmatmul.mubr.bf16.gmra.mrb[0].mxu0 %v388
    %v886 = vpop.f32.mrb[0].mxu0
    %v887 = vadd.f32 0.0, %v886
    %v888 = vpop.f32.mrb[0].mxu0
    %v889 = vadd.f32 0.0, %v888
    %v890 = vpop.f32.mrb[0].mxu0
    %v891 = vadd.f32 0.0, %v890
    %v892 = vpop.f32.mrb[0].mxu0
    %v893 = vadd.f32 0.0, %v892
    %894 = vmatprep.mubr.bf16.mxu0 0
    %895 = vmatmul.mubr.bf16.gmra.mrb[0].mxu0 %v389
    %v896 = vpop.f32.mrb[0].mxu0
    %v897 = vadd.f32 0.0, %v896
    %v898 = vpop.f32.mrb[0].mxu0
    %v899 = vadd.f32 0.0, %v898
    %v900 = vpop.f32.mrb[0].mxu0
    %v901 = vadd.f32 0.0, %v900
    %v902 = vpop.f32.mrb[0].mxu0
    %v903 = vadd.f32 0.0, %v902
    %904 = vmatprep.mubr.bf16.mxu0 0
    %905 = vmatmul.mubr.bf16.gmra.mrb[0].mxu0 %v390
    %v906 = vpop.f32.mrb[0].mxu0
    %v907 = vadd.f32 0.0, %v906
    %v908 = vpop.f32.mrb[0].mxu0
    %v909 = vadd.f32 0.0, %v908
    %v910 = vpop.f32.mrb[0].mxu0
    %v911 = vadd.f32 0.0, %v910
    %v912 = vpop.f32.mrb[0].mxu0
    %v913 = vadd.f32 0.0, %v912
    %914 = vmatprep.mubr.bf16.mxu0 0
    %915 = vmatmul.mubr.bf16.gmra.mrb[0].mxu0 %v391
    %v916 = vpop.f32.mrb[0].mxu0
    %v917 = vadd.f32 0.0, %v916
    %v918 = vpop.f32.mrb[0].mxu0
    %v919 = vadd.f32 0.0, %v918
    %v920 = vpop.f32.mrb[0].mxu0
    %v921 = vadd.f32 0.0, %v920
    %v922 = vpop.f32.mrb[0].mxu0
    %v923 = vadd.f32 0.0, %v922
    %924 = vmatprep.mubr.bf16.mxu0 0
    %925 = vmatmul.mubr.bf16.gmra.mrb[0].mxu0 %v392
    %v926 = vpop.f32.mrb[0].mxu0
    %v927 = vadd.f32 0.0, %v926
    %v928 = vpop.f32.mrb[0].mxu0
    %v929 = vadd.f32 0.0, %v928
    %v930 = vpop.f32.mrb[0].mxu0
    %v931 = vadd.f32 0.0, %v930
    %v932 = vpop.f32.mrb[0].mxu0
    %v933 = vadd.f32 0.0, %v932
    %934 = vmatprep.mubr.bf16.mxu0 0
    %935 = vmatmul.mubr.bf16.gmra.mrb[0].mxu0 %v393
    %v936 = vpop.f32.mrb[0].mxu0
    %v937 = vadd.f32 0.0, %v936
    %v938 = vpop.f32.mrb[0].mxu0
    %v939 = vadd.f32 0.0, %v938
    %v940 = vpop.f32.mrb[0].mxu0
    %v941 = vadd.f32 0.0, %v940
    %v942 = vpop.f32.mrb[0].mxu0
    %v943 = vadd.f32 0.0, %v942
    %944 = vmatprep.mubr.bf16.mxu0 0
    %945 = vmatmul.mubr.bf16.gmra.mrb[0].mxu0 %v394
    %v946 = vpop.f32.mrb[0].mxu0
    %v947 = vadd.f32 0.0, %v946
    %v948 = vpop.f32.mrb[0].mxu0
    %v949 = vadd.f32 0.0, %v948
    %v950 = vpop.f32.mrb[0].mxu0
    %v951 = vadd.f32 0.0, %v950
    %v952 = vpop.f32.mrb[0].mxu0
    %v953 = vadd.f32 0.0, %v952
    %954 = vmatprep.mubr.bf16.mxu0 0
    %955 = vmatmul.mubr.bf16.gmra.mrb[0].mxu0 %v395
    %v956 = vpop.f32.mrb[0].mxu0
    %v957 = vadd.f32 0.0, %v956
    %v958 = vpop.f32.mrb[0].mxu0
    %v959 = vadd.f32 0.0, %v958
    %v960 = vpop.f32.mrb[0].mxu0
    %v961 = vadd.f32 0.0, %v960
    %v962 = vpop.f32.mrb[0].mxu0
    %v963 = vadd.f32 0.0, %v962
    %964 = vmatprep.mubr.bf16.mxu0 0
    %965 = vmatmul.mubr.bf16.gmra.mrb[0].mxu0 %v396
    %v966 = vpop.f32.mrb[0].mxu0
    %v967 = vadd.f32 0.0, %v966
    %v968 = vpop.f32.mrb[0].mxu0
    %v969 = vadd.f32 0.0, %v968
    %v970 = vpop.f32.mrb[0].mxu0
    %v971 = vadd.f32 0.0, %v970
    %v972 = vpop.f32.mrb[0].mxu0
    %v973 = vadd.f32 0.0, %v972
    %974 = vdwg.mxu0
    %v975 = vadd.f32 %v221, %v624
    %v976 = vadd.f32 %v222, %v626
    %v977 = vadd.f32 %v223, %v817
    %v978 = vadd.f32 %v224, %v819
    %v979 = vadd.f32 %v225, %v628
    %v980 = vadd.f32 %v226, %v630
    %v981 = vadd.f32 %v227, %v821
    %v982 = vadd.f32 %v228, %v823
    %v983 = vadd.f32 %v229, %v634
    %v984 = vadd.f32 %v230, %v636
    %v985 = vadd.f32 %v231, %v827
    %v986 = vadd.f32 %v232, %v829
    %v987 = vadd.f32 %v233, %v638
    %v988 = vadd.f32 %v234, %v640
    %v989 = vadd.f32 %v235, %v831
    %v990 = vadd.f32 %v236, %v833
    %v991 = vadd.f32 %v237, %v644
    %v992 = vadd.f32 %v238, %v646
    %v993 = vadd.f32 %v239, %v837
    %v994 = vadd.f32 %v240, %v839
    %v995 = vadd.f32 %v241, %v648
    %v996 = vadd.f32 %v242, %v650
    %v997 = vadd.f32 %v243, %v841
    %v998 = vadd.f32 %v244, %v843
    %v999 = vadd.f32 %v245, %v654
    %v1000 = vadd.f32 %v246, %v656
    %v1001 = vadd.f32 %v247, %v847
    %v1002 = vadd.f32 %v248, %v849
    %v1003 = vadd.f32 %v249, %v658
    %v1004 = vadd.f32 %v250, %v660
    %v1005 = vadd.f32 %v251, %v851
    %v1006 = vadd.f32 %v252, %v853
    %v1007 = vadd.f32 %v253, %v664
    %v1008 = vadd.f32 %v254, %v666
    %v1009 = vadd.f32 %v255, %v857
    %v1010 = vadd.f32 %v256, %v859
    %v1011 = vadd.f32 %v257, %v668
    %v1012 = vadd.f32 %v258, %v670
    %v1013 = vadd.f32 %v259, %v861
    %v1014 = vadd.f32 %v260, %v863
    %v1015 = vadd.f32 %v261, %v674
    %v1016 = vadd.f32 %v262, %v676
    %v1017 = vadd.f32 %v263, %v867
    %v1018 = vadd.f32 %v264, %v869
    %v1019 = vadd.f32 %v265, %v678
    %v1020 = vadd.f32 %v266, %v680
    %v1021 = vadd.f32 %v267, %v871
    %v1022 = vadd.f32 %v268, %v873
    %v1023 = vadd.f32 %v269, %v684
    %v1024 = vadd.f32 %v270, %v686
    %v1025 = vadd.f32 %v271, %v877
    %v1026 = vadd.f32 %v272, %v879
    %v1027 = vadd.f32 %v273, %v688
    %v1028 = vadd.f32 %v274, %v690
    %v1029 = vadd.f32 %v275, %v881
    %v1030 = vadd.f32 %v276, %v883
    %v1031 = vadd.f32 %v277, %v694
    %v1032 = vadd.f32 %v278, %v696
    %v1033 = vadd.f32 %v279, %v887
    %v1034 = vadd.f32 %v280, %v889
    %v1035 = vadd.f32 %v281, %v698
    %v1036 = vadd.f32 %v282, %v700
    %v1037 = vadd.f32 %v283, %v891
    %v1038 = vadd.f32 %v284, %v893
    %v1039 = vadd.f32 %v285, %v704
    %v1040 = vadd.f32 %v286, %v706
    %v1041 = vadd.f32 %v287, %v897
    %v1042 = vadd.f32 %v288, %v899
    %v1043 = vadd.f32 %v289, %v708
    %v1044 = vadd.f32 %v290, %v710
    %v1045 = vadd.f32 %v291, %v901
    %v1046 = vadd.f32 %v292, %v903
    %v1047 = vadd.f32 %v293, %v714
    %v1048 = vadd.f32 %v294, %v716
    %v1049 = vadd.f32 %v295, %v907
    %v1050 = vadd.f32 %v296, %v909
    %v1051 = vadd.f32 %v297, %v718
    %v1052 = vadd.f32 %v298, %v720
    %v1053 = vadd.f32 %v299, %v911
    %v1054 = vadd.f32 %v300, %v913
    %v1055 = vadd.f32 %v301, %v724
    %v1056 = vadd.f32 %v302, %v726
    %v1057 = vadd.f32 %v303, %v917
    %v1058 = vadd.f32 %v304, %v919
    %v1059 = vadd.f32 %v305, %v728
    %v1060 = vadd.f32 %v306, %v730
    %v1061 = vadd.f32 %v307, %v921
    %v1062 = vadd.f32 %v308, %v923
    %v1063 = vadd.f32 %v309, %v734
    %v1064 = vadd.f32 %v310, %v736
    %v1065 = vadd.f32 %v311, %v927
    %v1066 = vadd.f32 %v312, %v929
    %v1067 = vadd.f32 %v313, %v738
    %v1068 = vadd.f32 %v314, %v740
    %v1069 = vadd.f32 %v315, %v931
    %v1070 = vadd.f32 %v316, %v933
    %v1071 = vadd.f32 %v317, %v744
    %v1072 = vadd.f32 %v318, %v746
    %v1073 = vadd.f32 %v319, %v937
    %v1074 = vadd.f32 %v320, %v939
    %v1075 = vadd.f32 %v321, %v748
    %v1076 = vadd.f32 %v322, %v750
    %v1077 = vadd.f32 %v323, %v941
    %v1078 = vadd.f32 %v324, %v943
    %v1079 = vadd.f32 %v325, %v754
    %v1080 = vadd.f32 %v326, %v756
    %v1081 = vadd.f32 %v327, %v947
    %v1082 = vadd.f32 %v328, %v949
    %v1083 = vadd.f32 %v329, %v758
    %v1084 = vadd.f32 %v330, %v760
    %v1085 = vadd.f32 %v331, %v951
    %v1086 = vadd.f32 %v332, %v953
    %v1087 = vadd.f32 %v333, %v764
    %v1088 = vadd.f32 %v334, %v766
    %v1089 = vadd.f32 %v335, %v957
    %v1090 = vadd.f32 %v336, %v959
    %v1091 = vadd.f32 %v337, %v768
    %v1092 = vadd.f32 %v338, %v770
    %v1093 = vadd.f32 %v339, %v961
    %v1094 = vadd.f32 %v340, %v963
    %v1095 = vadd.f32 %v341, %v774
    %v1096 = vadd.f32 %v342, %v776
    %v1097 = vadd.f32 %v343, %v967
    %v1098 = vadd.f32 %v344, %v969
    %v1099 = vadd.f32 %v345, %v778
    %v1100 = vadd.f32 %v346, %v780
    %v1101 = vadd.f32 %v347, %v971
    %v1102 = vadd.f32 %v348, %v973
    %1103 = vst [vmem:[#allocation2] sm:$0xff] %v975
    %1104 = vst [vmem:[#allocation2 + $0x8] sm:$0xff] %v976
    %1105 = vst [vmem:[#allocation2 + $0x10] sm:$0xff] %v977
    %1106 = vst [vmem:[#allocation2 + $0x18] sm:$0xff] %v978
    %1107 = vst [vmem:[#allocation2 + $0x20] sm:$0xff] %v979
    %1108 = vst [vmem:[#allocation2 + $0x28] sm:$0xff] %v980
    %1109 = vst [vmem:[#allocation2 + $0x30] sm:$0xff] %v981
    %1110 = vst [vmem:[#allocation2 + $0x38] sm:$0xff] %v982
    %1111 = vst [vmem:[#allocation2 + $0x40] sm:$0xff] %v983
    %1112 = vst [vmem:[#allocation2 + $0x48] sm:$0xff] %v984
    %1113 = vst [vmem:[#allocation2 + $0x50] sm:$0xff] %v985
    %1114 = vst [vmem:[#allocation2 + $0x58] sm:$0xff] %v986
    %1115 = vst [vmem:[#allocation2 + $0x60] sm:$0xff] %v987
    %1116 = vst [vmem:[#allocation2 + $0x68] sm:$0xff] %v988
    %1117 = vst [vmem:[#allocation2 + $0x70] sm:$0xff] %v989
    %1118 = vst [vmem:[#allocation2 + $0x78] sm:$0xff] %v990
    %1119 = vst [vmem:[#allocation2 + $0x80] sm:$0xff] %v991
    %1120 = vst [vmem:[#allocation2 + $0x88] sm:$0xff] %v992
    %1121 = vst [vmem:[#allocation2 + $0x90] sm:$0xff] %v993
    %1122 = vst [vmem:[#allocation2 + $0x98] sm:$0xff] %v994
    %1123 = vst [vmem:[#allocation2 + $0xa0] sm:$0xff] %v995
    %1124 = vst [vmem:[#allocation2 + $0xa8] sm:$0xff] %v996
    %1125 = vst [vmem:[#allocation2 + $0xb0] sm:$0xff] %v997
    %1126 = vst [vmem:[#allocation2 + $0xb8] sm:$0xff] %v998
    %1127 = vst [vmem:[#allocation2 + $0xc0] sm:$0xff] %v999
    %1128 = vst [vmem:[#allocation2 + $0xc8] sm:$0xff] %v1000
    %1129 = vst [vmem:[#allocation2 + $0xd0] sm:$0xff] %v1001
    %1130 = vst [vmem:[#allocation2 + $0xd8] sm:$0xff] %v1002
    %1131 = vst [vmem:[#allocation2 + $0xe0] sm:$0xff] %v1003
    %1132 = vst [vmem:[#allocation2 + $0xe8] sm:$0xff] %v1004
    %1133 = vst [vmem:[#allocation2 + $0xf0] sm:$0xff] %v1005
    %1134 = vst [vmem:[#allocation2 + $0xf8] sm:$0xff] %v1006
    %1135 = vst [vmem:[#allocation2 + $0x100] sm:$0xff] %v1007
    %1136 = vst [vmem:[#allocation2 + $0x108] sm:$0xff] %v1008
    %1137 = vst [vmem:[#allocation2 + $0x110] sm:$0xff] %v1009
    %1138 = vst [vmem:[#allocation2 + $0x118] sm:$0xff] %v1010
    %1139 = vst [vmem:[#allocation2 + $0x120] sm:$0xff] %v1011
    %1140 = vst [vmem:[#allocation2 + $0x128] sm:$0xff] %v1012
    %1141 = vst [vmem:[#allocation2 + $0x130] sm:$0xff] %v1013
    %1142 = vst [vmem:[#allocation2 + $0x138] sm:$0xff] %v1014
    %1143 = vst [vmem:[#allocation2 + $0x140] sm:$0xff] %v1015
    %1144 = vst [vmem:[#allocation2 + $0x148] sm:$0xff] %v1016
    %1145 = vst [vmem:[#allocation2 + $0x150] sm:$0xff] %v1017
    %1146 = vst [vmem:[#allocation2 + $0x158] sm:$0xff] %v1018
    %1147 = vst [vmem:[#allocation2 + $0x160] sm:$0xff] %v1019
    %1148 = vst [vmem:[#allocation2 + $0x168] sm:$0xff] %v1020
    %1149 = vst [vmem:[#allocation2 + $0x170] sm:$0xff] %v1021
    %1150 = vst [vmem:[#allocation2 + $0x178] sm:$0xff] %v1022
    %1151 = vst [vmem:[#allocation2 + $0x180] sm:$0xff] %v1023
    %1152 = vst [vmem:[#allocation2 + $0x188] sm:$0xff] %v1024
    %1153 = vst [vmem:[#allocation2 + $0x190] sm:$0xff] %v1025
    %1154 = vst [vmem:[#allocation2 + $0x198] sm:$0xff] %v1026
    %1155 = vst [vmem:[#allocation2 + $0x1a0] sm:$0xff] %v1027
    %1156 = vst [vmem:[#allocation2 + $0x1a8] sm:$0xff] %v1028
    %1157 = vst [vmem:[#allocation2 + $0x1b0] sm:$0xff] %v1029
    %1158 = vst [vmem:[#allocation2 + $0x1b8] sm:$0xff] %v1030
    %1159 = vst [vmem:[#allocation2 + $0x1c0] sm:$0xff] %v1031
    %1160 = vst [vmem:[#allocation2 + $0x1c8] sm:$0xff] %v1032
    %1161 = vst [vmem:[#allocation2 + $0x1d0] sm:$0xff] %v1033
    %1162 = vst [vmem:[#allocation2 + $0x1d8] sm:$0xff] %v1034
    %1163 = vst [vmem:[#allocation2 + $0x1e0] sm:$0xff] %v1035
    %1164 = vst [vmem:[#allocation2 + $0x1e8] sm:$0xff] %v1036
    %1165 = vst [vmem:[#allocation2 + $0x1f0] sm:$0xff] %v1037
    %1166 = vst [vmem:[#allocation2 + $0x1f8] sm:$0xff] %v1038
    %1167 = vst [vmem:[#allocation2 + $0x200] sm:$0xff] %v1039
    %1168 = vst [vmem:[#allocation2 + $0x208] sm:$0xff] %v1040
    %1169 = vst [vmem:[#allocation2 + $0x210] sm:$0xff] %v1041
    %1170 = vst [vmem:[#allocation2 + $0x218] sm:$0xff] %v1042
    %1171 = vst [vmem:[#allocation2 + $0x220] sm:$0xff] %v1043
    %1172 = vst [vmem:[#allocation2 + $0x228] sm:$0xff] %v1044
    %1173 = vst [vmem:[#allocation2 + $0x230] sm:$0xff] %v1045
    %1174 = vst [vmem:[#allocation2 + $0x238] sm:$0xff] %v1046
    %1175 = vst [vmem:[#allocation2 + $0x240] sm:$0xff] %v1047
    %1176 = vst [vmem:[#allocation2 + $0x248] sm:$0xff] %v1048
    %1177 = vst [vmem:[#allocation2 + $0x250] sm:$0xff] %v1049
    %1178 = vst [vmem:[#allocation2 + $0x258] sm:$0xff] %v1050
    %1179 = vst [vmem:[#allocation2 + $0x260] sm:$0xff] %v1051
    %1180 = vst [vmem:[#allocation2 + $0x268] sm:$0xff] %v1052
    %1181 = vst [vmem:[#allocation2 + $0x270] sm:$0xff] %v1053
    %1182 = vst [vmem:[#allocation2 + $0x278] sm:$0xff] %v1054
    %1183 = vst [vmem:[#allocation2 + $0x280] sm:$0xff] %v1055
    %1184 = vst [vmem:[#allocation2 + $0x288] sm:$0xff] %v1056
    %1185 = vst [vmem:[#allocation2 + $0x290] sm:$0xff] %v1057
    %1186 = vst [vmem:[#allocation2 + $0x298] sm:$0xff] %v1058
    %1187 = vst [vmem:[#allocation2 + $0x2a0] sm:$0xff] %v1059
    %1188 = vst [vmem:[#allocation2 + $0x2a8] sm:$0xff] %v1060
    %1189 = vst [vmem:[#allocation2 + $0x2b0] sm:$0xff] %v1061
    %1190 = vst [vmem:[#allocation2 + $0x2b8] sm:$0xff] %v1062
    %1191 = vst [vmem:[#allocation2 + $0x2c0] sm:$0xff] %v1063
    %1192 = vst [vmem:[#allocation2 + $0x2c8] sm:$0xff] %v1064
    %1193 = vst [vmem:[#allocation2 + $0x2d0] sm:$0xff] %v1065
    %1194 = vst [vmem:[#allocation2 + $0x2d8] sm:$0xff] %v1066
    %1195 = vst [vmem:[#allocation2 + $0x2e0] sm:$0xff] %v1067
    %1196 = vst [vmem:[#allocation2 + $0x2e8] sm:$0xff] %v1068
    %1197 = vst [vmem:[#allocation2 + $0x2f0] sm:$0xff] %v1069
    %1198 = vst [vmem:[#allocation2 + $0x2f8] sm:$0xff] %v1070
    %1199 = vst [vmem:[#allocation2 + $0x300] sm:$0xff] %v1071
    %1200 = vst [vmem:[#allocation2 + $0x308] sm:$0xff] %v1072
    %1201 = vst [vmem:[#allocation2 + $0x310] sm:$0xff] %v1073
    %1202 = vst [vmem:[#allocation2 + $0x318] sm:$0xff] %v1074
    %1203 = vst [vmem:[#allocation2 + $0x320] sm:$0xff] %v1075
    %1204 = vst [vmem:[#allocation2 + $0x328] sm:$0xff] %v1076
    %1205 = vst [vmem:[#allocation2 + $0x330] sm:$0xff] %v1077
    %1206 = vst [vmem:[#allocation2 + $0x338] sm:$0xff] %v1078
    %1207 = vst [vmem:[#allocation2 + $0x340] sm:$0xff] %v1079
    %1208 = vst [vmem:[#allocation2 + $0x348] sm:$0xff] %v1080
    %1209 = vst [vmem:[#allocation2 + $0x350] sm:$0xff] %v1081
    %1210 = vst [vmem:[#allocation2 + $0x358] sm:$0xff] %v1082
    %1211 = vst [vmem:[#allocation2 + $0x360] sm:$0xff] %v1083
    %1212 = vst [vmem:[#allocation2 + $0x368] sm:$0xff] %v1084
    %1213 = vst [vmem:[#allocation2 + $0x370] sm:$0xff] %v1085
    %1214 = vst [vmem:[#allocation2 + $0x378] sm:$0xff] %v1086
    %1215 = vst [vmem:[#allocation2 + $0x380] sm:$0xff] %v1087
    %1216 = vst [vmem:[#allocation2 + $0x388] sm:$0xff] %v1088
    %1217 = vst [vmem:[#allocation2 + $0x390] sm:$0xff] %v1089
    %1218 = vst [vmem:[#allocation2 + $0x398] sm:$0xff] %v1090
    %1219 = vst [vmem:[#allocation2 + $0x3a0] sm:$0xff] %v1091
    %1220 = vst [vmem:[#allocation2 + $0x3a8] sm:$0xff] %v1092
    %1221 = vst [vmem:[#allocation2 + $0x3b0] sm:$0xff] %v1093
    %1222 = vst [vmem:[#allocation2 + $0x3b8] sm:$0xff] %v1094
    %1223 = vst [vmem:[#allocation2 + $0x3c0] sm:$0xff] %v1095
    %1224 = vst [vmem:[#allocation2 + $0x3c8] sm:$0xff] %v1096
    %1225 = vst [vmem:[#allocation2 + $0x3d0] sm:$0xff] %v1097
    %1226 = vst [vmem:[#allocation2 + $0x3d8] sm:$0xff] %v1098
    %1227 = vst [vmem:[#allocation2 + $0x3e0] sm:$0xff] %v1099
    %1228 = vst [vmem:[#allocation2 + $0x3e8] sm:$0xff] %v1100
    %1229 = vst [vmem:[#allocation2 + $0x3f0] sm:$0xff] %v1101
    %1230 = vst [vmem:[#allocation2 + $0x3f8] sm:$0xff] %v1102
    // Predicated region
    $region58: #{tpu_custom_call.1} parent=1 // pred_check
      %p1231 = pneg %p89
    $region59: #{tpu_custom_call.1} parent=1 // pred_check_branch
      %1233 = sbr.rel (%p1231) target = $region61
    $region60: #{tpu_custom_call.1} parent=1 // pred_region
      %v1234 = vld [vmem:[#allocation2] sm:$0xff]
      %v1235 = vld [vmem:[#allocation2 + $0x8] sm:$0xff]
      %v1236 = vld [vmem:[#allocation2 + $0x10] sm:$0xff]
      %v1237 = vld [vmem:[#allocation2 + $0x18] sm:$0xff]
      %v1238 = vld [vmem:[#allocation2 + $0x20] sm:$0xff]
      %v1239 = vld [vmem:[#allocation2 + $0x28] sm:$0xff]
      %v1240 = vld [vmem:[#allocation2 + $0x30] sm:$0xff]
      %v1241 = vld [vmem:[#allocation2 + $0x38] sm:$0xff]
      %v1242 = vld [vmem:[#allocation2 + $0x40] sm:$0xff]
      %v1243 = vld [vmem:[#allocation2 + $0x48] sm:$0xff]
      %v1244 = vld [vmem:[#allocation2 + $0x50] sm:$0xff]
      %v1245 = vld [vmem:[#allocation2 + $0x58] sm:$0xff]
      %v1246 = vld [vmem:[#allocation2 + $0x60] sm:$0xff]
      %v1247 = vld [vmem:[#allocation2 + $0x68] sm:$0xff]
      %v1248 = vld [vmem:[#allocation2 + $0x70] sm:$0xff]
      %v1249 = vld [vmem:[#allocation2 + $0x78] sm:$0xff]
      %v1250 = vld [vmem:[#allocation2 + $0x80] sm:$0xff]
      %v1251 = vld [vmem:[#allocation2 + $0x88] sm:$0xff]
      %v1252 = vld [vmem:[#allocation2 + $0x90] sm:$0xff]
      %v1253 = vld [vmem:[#allocation2 + $0x98] sm:$0xff]
      %v1254 = vld [vmem:[#allocation2 + $0xa0] sm:$0xff]
      %v1255 = vld [vmem:[#allocation2 + $0xa8] sm:$0xff]
      %v1256 = vld [vmem:[#allocation2 + $0xb0] sm:$0xff]
      %v1257 = vld [vmem:[#allocation2 + $0xb8] sm:$0xff]
      %v1258 = vld [vmem:[#allocation2 + $0xc0] sm:$0xff]
      %v1259 = vld [vmem:[#allocation2 + $0xc8] sm:$0xff]
      %v1260 = vld [vmem:[#allocation2 + $0xd0] sm:$0xff]
      %v1261 = vld [vmem:[#allocation2 + $0xd8] sm:$0xff]
      %v1262 = vld [vmem:[#allocation2 + $0xe0] sm:$0xff]
      %v1263 = vld [vmem:[#allocation2 + $0xe8] sm:$0xff]
      %v1264 = vld [vmem:[#allocation2 + $0xf0] sm:$0xff]
      %v1265 = vld [vmem:[#allocation2 + $0xf8] sm:$0xff]
      %v1266 = vld [vmem:[#allocation2 + $0x100] sm:$0xff]
      %v1267 = vld [vmem:[#allocation2 + $0x108] sm:$0xff]
      %v1268 = vld [vmem:[#allocation2 + $0x110] sm:$0xff]
      %v1269 = vld [vmem:[#allocation2 + $0x118] sm:$0xff]
      %v1270 = vld [vmem:[#allocation2 + $0x120] sm:$0xff]
      %v1271 = vld [vmem:[#allocation2 + $0x128] sm:$0xff]
      %v1272 = vld [vmem:[#allocation2 + $0x130] sm:$0xff]
      %v1273 = vld [vmem:[#allocation2 + $0x138] sm:$0xff]
      %v1274 = vld [vmem:[#allocation2 + $0x140] sm:$0xff]
      %v1275 = vld [vmem:[#allocation2 + $0x148] sm:$0xff]
      %v1276 = vld [vmem:[#allocation2 + $0x150] sm:$0xff]
      %v1277 = vld [vmem:[#allocation2 + $0x158] sm:$0xff]
      %v1278 = vld [vmem:[#allocation2 + $0x160] sm:$0xff]
      %v1279 = vld [vmem:[#allocation2 + $0x168] sm:$0xff]
      %v1280 = vld [vmem:[#allocation2 + $0x170] sm:$0xff]
      %v1281 = vld [vmem:[#allocation2 + $0x178] sm:$0xff]
      %v1282 = vld [vmem:[#allocation2 + $0x180] sm:$0xff]
      %v1283 = vld [vmem:[#allocation2 + $0x188] sm:$0xff]
      %v1284 = vld [vmem:[#allocation2 + $0x190] sm:$0xff]
      %v1285 = vld [vmem:[#allocation2 + $0x198] sm:$0xff]
      %v1286 = vld [vmem:[#allocation2 + $0x1a0] sm:$0xff]
      %v1287 = vld [vmem:[#allocation2 + $0x1a8] sm:$0xff]
      %v1288 = vld [vmem:[#allocation2 + $0x1b0] sm:$0xff]
      %v1289 = vld [vmem:[#allocation2 + $0x1b8] sm:$0xff]
      %v1290 = vld [vmem:[#allocation2 + $0x1c0] sm:$0xff]
      %v1291 = vld [vmem:[#allocation2 + $0x1c8] sm:$0xff]
      %v1292 = vld [vmem:[#allocation2 + $0x1d0] sm:$0xff]
      %v1293 = vld [vmem:[#allocation2 + $0x1d8] sm:$0xff]
      %v1294 = vld [vmem:[#allocation2 + $0x1e0] sm:$0xff]
      %v1295 = vld [vmem:[#allocation2 + $0x1e8] sm:$0xff]
      %v1296 = vld [vmem:[#allocation2 + $0x1f0] sm:$0xff]
      %v1297 = vld [vmem:[#allocation2 + $0x1f8] sm:$0xff]
      %v1298 = vld [vmem:[#allocation2 + $0x200] sm:$0xff]
      %v1299 = vld [vmem:[#allocation2 + $0x208] sm:$0xff]
      %v1300 = vld [vmem:[#allocation2 + $0x210] sm:$0xff]
      %v1301 = vld [vmem:[#allocation2 + $0x218] sm:$0xff]
      %v1302 = vld [vmem:[#allocation2 + $0x220] sm:$0xff]
      %v1303 = vld [vmem:[#allocation2 + $0x228] sm:$0xff]
      %v1304 = vld [vmem:[#allocation2 + $0x230] sm:$0xff]
      %v1305 = vld [vmem:[#allocation2 + $0x238] sm:$0xff]
      %v1306 = vld [vmem:[#allocation2 + $0x240] sm:$0xff]
      %v1307 = vld [vmem:[#allocation2 + $0x248] sm:$0xff]
      %v1308 = vld [vmem:[#allocation2 + $0x250] sm:$0xff]
      %v1309 = vld [vmem:[#allocation2 + $0x258] sm:$0xff]
      %v1310 = vld [vmem:[#allocation2 + $0x260] sm:$0xff]
      %v1311 = vld [vmem:[#allocation2 + $0x268] sm:$0xff]
      %v1312 = vld [vmem:[#allocation2 + $0x270] sm:$0xff]
      %v1313 = vld [vmem:[#allocation2 + $0x278] sm:$0xff]
      %v1314 = vld [vmem:[#allocation2 + $0x280] sm:$0xff]
      %v1315 = vld [vmem:[#allocation2 + $0x288] sm:$0xff]
      %v1316 = vld [vmem:[#allocation2 + $0x290] sm:$0xff]
      %v1317 = vld [vmem:[#allocation2 + $0x298] sm:$0xff]
      %v1318 = vld [vmem:[#allocation2 + $0x2a0] sm:$0xff]
      %v1319 = vld [vmem:[#allocation2 + $0x2a8] sm:$0xff]
      %v1320 = vld [vmem:[#allocation2 + $0x2b0] sm:$0xff]
      %v1321 = vld [vmem:[#allocation2 + $0x2b8] sm:$0xff]
      %v1322 = vld [vmem:[#allocation2 + $0x2c0] sm:$0xff]
      %v1323 = vld [vmem:[#allocation2 + $0x2c8] sm:$0xff]
      %v1324 = vld [vmem:[#allocation2 + $0x2d0] sm:$0xff]
      %v1325 = vld [vmem:[#allocation2 + $0x2d8] sm:$0xff]
      %v1326 = vld [vmem:[#allocation2 + $0x2e0] sm:$0xff]
      %v1327 = vld [vmem:[#allocation2 + $0x2e8] sm:$0xff]
      %v1328 = vld [vmem:[#allocation2 + $0x2f0] sm:$0xff]
      %v1329 = vld [vmem:[#allocation2 + $0x2f8] sm:$0xff]
      %v1330 = vld [vmem:[#allocation2 + $0x300] sm:$0xff]
      %v1331 = vld [vmem:[#allocation2 + $0x308] sm:$0xff]
      %v1332 = vld [vmem:[#allocation2 + $0x310] sm:$0xff]
      %v1333 = vld [vmem:[#allocation2 + $0x318] sm:$0xff]
      %v1334 = vld [vmem:[#allocation2 + $0x320] sm:$0xff]
      %v1335 = vld [vmem:[#allocation2 + $0x328] sm:$0xff]
      %v1336 = vld [vmem:[#allocation2 + $0x330] sm:$0xff]
      %v1337 = vld [vmem:[#allocation2 + $0x338] sm:$0xff]
      %v1338 = vld [vmem:[#allocation2 + $0x340] sm:$0xff]
      %v1339 = vld [vmem:[#allocation2 + $0x348] sm:$0xff]
      %v1340 = vld [vmem:[#allocation2 + $0x350] sm:$0xff]
      %v1341 = vld [vmem:[#allocation2 + $0x358] sm:$0xff]
      %v1342 = vld [vmem:[#allocation2 + $0x360] sm:$0xff]
      %v1343 = vld [vmem:[#allocation2 + $0x368] sm:$0xff]
      %v1344 = vld [vmem:[#allocation2 + $0x370] sm:$0xff]
      %v1345 = vld [vmem:[#allocation2 + $0x378] sm:$0xff]
      %v1346 = vld [vmem:[#allocation2 + $0x380] sm:$0xff]
      %v1347 = vld [vmem:[#allocation2 + $0x388] sm:$0xff]
      %v1348 = vld [vmem:[#allocation2 + $0x390] sm:$0xff]
      %v1349 = vld [vmem:[#allocation2 + $0x398] sm:$0xff]
      %v1350 = vld [vmem:[#allocation2 + $0x3a0] sm:$0xff]
      %v1351 = vld [vmem:[#allocation2 + $0x3a8] sm:$0xff]
      %v1352 = vld [vmem:[#allocation2 + $0x3b0] sm:$0xff]
      %v1353 = vld [vmem:[#allocation2 + $0x3b8] sm:$0xff]
      %v1354 = vld [vmem:[#allocation2 + $0x3c0] sm:$0xff]
      %v1355 = vld [vmem:[#allocation2 + $0x3c8] sm:$0xff]
      %v1356 = vld [vmem:[#allocation2 + $0x3d0] sm:$0xff]
      %v1357 = vld [vmem:[#allocation2 + $0x3d8] sm:$0xff]
      %v1358 = vld [vmem:[#allocation2 + $0x3e0] sm:$0xff]
      %v1359 = vld [vmem:[#allocation2 + $0x3e8] sm:$0xff]
      %v1360 = vld [vmem:[#allocation2 + $0x3f0] sm:$0xff]
      %v1361 = vld [vmem:[#allocation2 + $0x3f8] sm:$0xff]
      %v1362 = vld [vmem:[%s2] sm:$0xf]
      %v1364 = vlaneseq
      %v1365 = vshrl.u32 %v1364, 7
      %v1366 = vsub.s32 0, %v1365
      %v1367 = vrot.slane %v1362, %v1366
      %v1368 = vlaneseq
      %v1369 = vshrl.u32 %v1368, 7
      %v1370 = vsub.s32 1, %v1369
      %v1371 = vrot.slane %v1362, %v1370
      %v1372 = vlaneseq
      %v1373 = vshrl.u32 %v1372, 7
      %v1374 = vsub.s32 2, %v1373
      %v1375 = vrot.slane %v1362, %v1374
      %v1376 = vlaneseq
      %v1377 = vshrl.u32 %v1376, 7
      %v1378 = vsub.s32 3, %v1377
      %v1379 = vrot.slane %v1362, %v1378
      %v1384 = vadd.f32 %v1234, %v1367
      %v1385 = vadd.f32 %v1235, %v1371
      %v1386 = vadd.f32 %v1236, %v1375
      %v1387 = vadd.f32 %v1237, %v1379
      %v1388 = vadd.f32 %v1238, %v1367
      %v1389 = vadd.f32 %v1239, %v1371
      %v1390 = vadd.f32 %v1240, %v1375
      %v1391 = vadd.f32 %v1241, %v1379
      %v1392 = vadd.f32 %v1242, %v1367
      %v1393 = vadd.f32 %v1243, %v1371
      %v1394 = vadd.f32 %v1244, %v1375
      %v1395 = vadd.f32 %v1245, %v1379
      %v1396 = vadd.f32 %v1246, %v1367
      %v1397 = vadd.f32 %v1247, %v1371
      %v1398 = vadd.f32 %v1248, %v1375
      %v1399 = vadd.f32 %v1249, %v1379
      %v1400 = vadd.f32 %v1250, %v1367
      %v1401 = vadd.f32 %v1251, %v1371
      %v1402 = vadd.f32 %v1252, %v1375
      %v1403 = vadd.f32 %v1253, %v1379
      %v1404 = vadd.f32 %v1254, %v1367
      %v1405 = vadd.f32 %v1255, %v1371
      %v1406 = vadd.f32 %v1256, %v1375
      %v1407 = vadd.f32 %v1257, %v1379
      %v1408 = vadd.f32 %v1258, %v1367
      %v1409 = vadd.f32 %v1259, %v1371
      %v1410 = vadd.f32 %v1260, %v1375
      %v1411 = vadd.f32 %v1261, %v1379
      %v1412 = vadd.f32 %v1262, %v1367
      %v1413 = vadd.f32 %v1263, %v1371
      %v1414 = vadd.f32 %v1264, %v1375
      %v1415 = vadd.f32 %v1265, %v1379
      %v1416 = vadd.f32 %v1266, %v1367
      %v1417 = vadd.f32 %v1267, %v1371
      %v1418 = vadd.f32 %v1268, %v1375
      %v1419 = vadd.f32 %v1269, %v1379
      %v1420 = vadd.f32 %v1270, %v1367
      %v1421 = vadd.f32 %v1271, %v1371
      %v1422 = vadd.f32 %v1272, %v1375
      %v1423 = vadd.f32 %v1273, %v1379
      %v1424 = vadd.f32 %v1274, %v1367
      %v1425 = vadd.f32 %v1275, %v1371
      %v1426 = vadd.f32 %v1276, %v1375
      %v1427 = vadd.f32 %v1277, %v1379
      %v1428 = vadd.f32 %v1278, %v1367
      %v1429 = vadd.f32 %v1279, %v1371
      %v1430 = vadd.f32 %v1280, %v1375
      %v1431 = vadd.f32 %v1281, %v1379
      %v1432 = vadd.f32 %v1282, %v1367
      %v1433 = vadd.f32 %v1283, %v1371
      %v1434 = vadd.f32 %v1284, %v1375
      %v1435 = vadd.f32 %v1285, %v1379
      %v1436 = vadd.f32 %v1286, %v1367
      %v1437 = vadd.f32 %v1287, %v1371
      %v1438 = vadd.f32 %v1288, %v1375
      %v1439 = vadd.f32 %v1289, %v1379
      %v1440 = vadd.f32 %v1290, %v1367
      %v1441 = vadd.f32 %v1291, %v1371
      %v1442 = vadd.f32 %v1292, %v1375
      %v1443 = vadd.f32 %v1293, %v1379
      %v1444 = vadd.f32 %v1294, %v1367
      %v1445 = vadd.f32 %v1295, %v1371
      %v1446 = vadd.f32 %v1296, %v1375
      %v1447 = vadd.f32 %v1297, %v1379
      %v1448 = vadd.f32 %v1298, %v1367
      %v1449 = vadd.f32 %v1299, %v1371
      %v1450 = vadd.f32 %v1300, %v1375
      %v1451 = vadd.f32 %v1301, %v1379
      %v1452 = vadd.f32 %v1302, %v1367
      %v1453 = vadd.f32 %v1303, %v1371
      %v1454 = vadd.f32 %v1304, %v1375
      %v1455 = vadd.f32 %v1305, %v1379
      %v1456 = vadd.f32 %v1306, %v1367
      %v1457 = vadd.f32 %v1307, %v1371
      %v1458 = vadd.f32 %v1308, %v1375
      %v1459 = vadd.f32 %v1309, %v1379
      %v1460 = vadd.f32 %v1310, %v1367
      %v1461 = vadd.f32 %v1311, %v1371
      %v1462 = vadd.f32 %v1312, %v1375
      %v1463 = vadd.f32 %v1313, %v1379
      %v1464 = vadd.f32 %v1314, %v1367
      %v1465 = vadd.f32 %v1315, %v1371
      %v1466 = vadd.f32 %v1316, %v1375
      %v1467 = vadd.f32 %v1317, %v1379
      %v1468 = vadd.f32 %v1318, %v1367
      %v1469 = vadd.f32 %v1319, %v1371
      %v1470 = vadd.f32 %v1320, %v1375
      %v1471 = vadd.f32 %v1321, %v1379
      %v1472 = vadd.f32 %v1322, %v1367
      %v1473 = vadd.f32 %v1323, %v1371
      %v1474 = vadd.f32 %v1324, %v1375
      %v1475 = vadd.f32 %v1325, %v1379
      %v1476 = vadd.f32 %v1326, %v1367
      %v1477 = vadd.f32 %v1327, %v1371
      %v1478 = vadd.f32 %v1328, %v1375
      %v1479 = vadd.f32 %v1329, %v1379
      %v1480 = vadd.f32 %v1330, %v1367
      %v1481 = vadd.f32 %v1331, %v1371
      %v1482 = vadd.f32 %v1332, %v1375
      %v1483 = vadd.f32 %v1333, %v1379
      %v1484 = vadd.f32 %v1334, %v1367
      %v1485 = vadd.f32 %v1335, %v1371
      %v1486 = vadd.f32 %v1336, %v1375
      %v1487 = vadd.f32 %v1337, %v1379
      %v1488 = vadd.f32 %v1338, %v1367
      %v1489 = vadd.f32 %v1339, %v1371
      %v1490 = vadd.f32 %v1340, %v1375
      %v1491 = vadd.f32 %v1341, %v1379
      %v1492 = vadd.f32 %v1342, %v1367
      %v1493 = vadd.f32 %v1343, %v1371
      %v1494 = vadd.f32 %v1344, %v1375
      %v1495 = vadd.f32 %v1345, %v1379
      %v1496 = vadd.f32 %v1346, %v1367
      %v1497 = vadd.f32 %v1347, %v1371
      %v1498 = vadd.f32 %v1348, %v1375
      %v1499 = vadd.f32 %v1349, %v1379
      %v1500 = vadd.f32 %v1350, %v1367
      %v1501 = vadd.f32 %v1351, %v1371
      %v1502 = vadd.f32 %v1352, %v1375
      %v1503 = vadd.f32 %v1353, %v1379
      %v1504 = vadd.f32 %v1354, %v1367
      %v1505 = vadd.f32 %v1355, %v1371
      %v1506 = vadd.f32 %v1356, %v1375
      %v1507 = vadd.f32 %v1357, %v1379
      %v1508 = vadd.f32 %v1358, %v1367
      %v1509 = vadd.f32 %v1359, %v1371
      %v1510 = vadd.f32 %v1360, %v1375
      %v1511 = vadd.f32 %v1361, %v1379
      %v1512 = vmax.f32 %v1384, 0.0
      %v1513 = vmax.f32 %v1385, 0.0
      %v1514 = vmax.f32 %v1386, 0.0
      %v1515 = vmax.f32 %v1387, 0.0
      %v1516 = vmax.f32 %v1388, 0.0
      %v1517 = vmax.f32 %v1389, 0.0
      %v1518 = vmax.f32 %v1390, 0.0
      %v1519 = vmax.f32 %v1391, 0.0
      %v1520 = vmax.f32 %v1392, 0.0
      %v1521 = vmax.f32 %v1393, 0.0
      %v1522 = vmax.f32 %v1394, 0.0
      %v1523 = vmax.f32 %v1395, 0.0
      %v1524 = vmax.f32 %v1396, 0.0
      %v1525 = vmax.f32 %v1397, 0.0
      %v1526 = vmax.f32 %v1398, 0.0
      %v1527 = vmax.f32 %v1399, 0.0
      %v1528 = vmax.f32 %v1400, 0.0
      %v1529 = vmax.f32 %v1401, 0.0
      %v1530 = vmax.f32 %v1402, 0.0
      %v1531 = vmax.f32 %v1403, 0.0
      %v1532 = vmax.f32 %v1404, 0.0
      %v1533 = vmax.f32 %v1405, 0.0
      %v1534 = vmax.f32 %v1406, 0.0
      %v1535 = vmax.f32 %v1407, 0.0
      %v1536 = vmax.f32 %v1408, 0.0
      %v1537 = vmax.f32 %v1409, 0.0
      %v1538 = vmax.f32 %v1410, 0.0
      %v1539 = vmax.f32 %v1411, 0.0
      %v1540 = vmax.f32 %v1412, 0.0
      %v1541 = vmax.f32 %v1413, 0.0
      %v1542 = vmax.f32 %v1414, 0.0
      %v1543 = vmax.f32 %v1415, 0.0
      %v1544 = vmax.f32 %v1416, 0.0
      %v1545 = vmax.f32 %v1417, 0.0
      %v1546 = vmax.f32 %v1418, 0.0
      %v1547 = vmax.f32 %v1419, 0.0
      %v1548 = vmax.f32 %v1420, 0.0
      %v1549 = vmax.f32 %v1421, 0.0
      %v1550 = vmax.f32 %v1422, 0.0
      %v1551 = vmax.f32 %v1423, 0.0
      %v1552 = vmax.f32 %v1424, 0.0
      %v1553 = vmax.f32 %v1425, 0.0
      %v1554 = vmax.f32 %v1426, 0.0
      %v1555 = vmax.f32 %v1427, 0.0
      %v1556 = vmax.f32 %v1428, 0.0
      %v1557 = vmax.f32 %v1429, 0.0
      %v1558 = vmax.f32 %v1430, 0.0
      %v1559 = vmax.f32 %v1431, 0.0
      %v1560 = vmax.f32 %v1432, 0.0
      %v1561 = vmax.f32 %v1433, 0.0
      %v1562 = vmax.f32 %v1434, 0.0
      %v1563 = vmax.f32 %v1435, 0.0
      %v1564 = vmax.f32 %v1436, 0.0
      %v1565 = vmax.f32 %v1437, 0.0
      %v1566 = vmax.f32 %v1438, 0.0
      %v1567 = vmax.f32 %v1439, 0.0
      %v1568 = vmax.f32 %v1440, 0.0
      %v1569 = vmax.f32 %v1441, 0.0
      %v1570 = vmax.f32 %v1442, 0.0
      %v1571 = vmax.f32 %v1443, 0.0
      %v1572 = vmax.f32 %v1444, 0.0
      %v1573 = vmax.f32 %v1445, 0.0
      %v1574 = vmax.f32 %v1446, 0.0
      %v1575 = vmax.f32 %v1447, 0.0
      %v1576 = vmax.f32 %v1448, 0.0
      %v1577 = vmax.f32 %v1449, 0.0
      %v1578 = vmax.f32 %v1450, 0.0
      %v1579 = vmax.f32 %v1451, 0.0
      %v1580 = vmax.f32 %v1452, 0.0
      %v1581 = vmax.f32 %v1453, 0.0
      %v1582 = vmax.f32 %v1454, 0.0
      %v1583 = vmax.f32 %v1455, 0.0
      %v1584 = vmax.f32 %v1456, 0.0
      %v1585 = vmax.f32 %v1457, 0.0
      %v1586 = vmax.f32 %v1458, 0.0
      %v1587 = vmax.f32 %v1459, 0.0
      %v1588 = vmax.f32 %v1460, 0.0
      %v1589 = vmax.f32 %v1461, 0.0
      %v1590 = vmax.f32 %v1462, 0.0
      %v1591 = vmax.f32 %v1463, 0.0
      %v1592 = vmax.f32 %v1464, 0.0
      %v1593 = vmax.f32 %v1465, 0.0
      %v1594 = vmax.f32 %v1466, 0.0
      %v1595 = vmax.f32 %v1467, 0.0
      %v1596 = vmax.f32 %v1468, 0.0
      %v1597 = vmax.f32 %v1469, 0.0
      %v1598 = vmax.f32 %v1470, 0.0
      %v1599 = vmax.f32 %v1471, 0.0
      %v1600 = vmax.f32 %v1472, 0.0
      %v1601 = vmax.f32 %v1473, 0.0
      %v1602 = vmax.f32 %v1474, 0.0
      %v1603 = vmax.f32 %v1475, 0.0
      %v1604 = vmax.f32 %v1476, 0.0
      %v1605 = vmax.f32 %v1477, 0.0
      %v1606 = vmax.f32 %v1478, 0.0
      %v1607 = vmax.f32 %v1479, 0.0
      %v1608 = vmax.f32 %v1480, 0.0
      %v1609 = vmax.f32 %v1481, 0.0
      %v1610 = vmax.f32 %v1482, 0.0
      %v1611 = vmax.f32 %v1483, 0.0
      %v1612 = vmax.f32 %v1484, 0.0
      %v1613 = vmax.f32 %v1485, 0.0
      %v1614 = vmax.f32 %v1486, 0.0
      %v1615 = vmax.f32 %v1487, 0.0
      %v1616 = vmax.f32 %v1488, 0.0
      %v1617 = vmax.f32 %v1489, 0.0
      %v1618 = vmax.f32 %v1490, 0.0
      %v1619 = vmax.f32 %v1491, 0.0
      %v1620 = vmax.f32 %v1492, 0.0
      %v1621 = vmax.f32 %v1493, 0.0
      %v1622 = vmax.f32 %v1494, 0.0
      %v1623 = vmax.f32 %v1495, 0.0
      %v1624 = vmax.f32 %v1496, 0.0
      %v1625 = vmax.f32 %v1497, 0.0
      %v1626 = vmax.f32 %v1498, 0.0
      %v1627 = vmax.f32 %v1499, 0.0
      %v1628 = vmax.f32 %v1500, 0.0
      %v1629 = vmax.f32 %v1501, 0.0
      %v1630 = vmax.f32 %v1502, 0.0
      %v1631 = vmax.f32 %v1503, 0.0
      %v1632 = vmax.f32 %v1504, 0.0
      %v1633 = vmax.f32 %v1505, 0.0
      %v1634 = vmax.f32 %v1506, 0.0
      %v1635 = vmax.f32 %v1507, 0.0
      %v1636 = vmax.f32 %v1508, 0.0
      %v1637 = vmax.f32 %v1509, 0.0
      %v1638 = vmax.f32 %v1510, 0.0
      %v1639 = vmax.f32 %v1511, 0.0
      %v1640 = vpack.c.bf16 %v1516, %v1512
      %v1641 = vpack.c.bf16 %v1517, %v1513
      %v1642 = vpack.c.bf16 %v1518, %v1514
      %v1643 = vpack.c.bf16 %v1519, %v1515
      %v1644 = vpack.c.bf16 %v1524, %v1520
      %v1645 = vpack.c.bf16 %v1525, %v1521
      %v1646 = vpack.c.bf16 %v1526, %v1522
      %v1647 = vpack.c.bf16 %v1527, %v1523
      %v1648 = vpack.c.bf16 %v1532, %v1528
      %v1649 = vpack.c.bf16 %v1533, %v1529
      %v1650 = vpack.c.bf16 %v1534, %v1530
      %v1651 = vpack.c.bf16 %v1535, %v1531
      %v1652 = vpack.c.bf16 %v1540, %v1536
      %v1653 = vpack.c.bf16 %v1541, %v1537
      %v1654 = vpack.c.bf16 %v1542, %v1538
      %v1655 = vpack.c.bf16 %v1543, %v1539
      %v1656 = vpack.c.bf16 %v1548, %v1544
      %v1657 = vpack.c.bf16 %v1549, %v1545
      %v1658 = vpack.c.bf16 %v1550, %v1546
      %v1659 = vpack.c.bf16 %v1551, %v1547
      %v1660 = vpack.c.bf16 %v1556, %v1552
      %v1661 = vpack.c.bf16 %v1557, %v1553
      %v1662 = vpack.c.bf16 %v1558, %v1554
      %v1663 = vpack.c.bf16 %v1559, %v1555
      %v1664 = vpack.c.bf16 %v1564, %v1560
      %v1665 = vpack.c.bf16 %v1565, %v1561
      %v1666 = vpack.c.bf16 %v1566, %v1562
      %v1667 = vpack.c.bf16 %v1567, %v1563
      %v1668 = vpack.c.bf16 %v1572, %v1568
      %v1669 = vpack.c.bf16 %v1573, %v1569
      %v1670 = vpack.c.bf16 %v1574, %v1570
      %v1671 = vpack.c.bf16 %v1575, %v1571
      %v1672 = vpack.c.bf16 %v1580, %v1576
      %v1673 = vpack.c.bf16 %v1581, %v1577
      %v1674 = vpack.c.bf16 %v1582, %v1578
      %v1675 = vpack.c.bf16 %v1583, %v1579
      %v1676 = vpack.c.bf16 %v1588, %v1584
      %v1677 = vpack.c.bf16 %v1589, %v1585
      %v1678 = vpack.c.bf16 %v1590, %v1586
      %v1679 = vpack.c.bf16 %v1591, %v1587
      %v1680 = vpack.c.bf16 %v1596, %v1592
      %v1681 = vpack.c.bf16 %v1597, %v1593
      %v1682 = vpack.c.bf16 %v1598, %v1594
      %v1683 = vpack.c.bf16 %v1599, %v1595
      %v1684 = vpack.c.bf16 %v1604, %v1600
      %v1685 = vpack.c.bf16 %v1605, %v1601
      %v1686 = vpack.c.bf16 %v1606, %v1602
      %v1687 = vpack.c.bf16 %v1607, %v1603
      %v1688 = vpack.c.bf16 %v1612, %v1608
      %v1689 = vpack.c.bf16 %v1613, %v1609
      %v1690 = vpack.c.bf16 %v1614, %v1610
      %v1691 = vpack.c.bf16 %v1615, %v1611
      %v1692 = vpack.c.bf16 %v1620, %v1616
      %v1693 = vpack.c.bf16 %v1621, %v1617
      %v1694 = vpack.c.bf16 %v1622, %v1618
      %v1695 = vpack.c.bf16 %v1623, %v1619
      %v1696 = vpack.c.bf16 %v1628, %v1624
      %v1697 = vpack.c.bf16 %v1629, %v1625
      %v1698 = vpack.c.bf16 %v1630, %v1626
      %v1699 = vpack.c.bf16 %v1631, %v1627
      %v1700 = vpack.c.bf16 %v1636, %v1632
      %v1701 = vpack.c.bf16 %v1637, %v1633
      %v1702 = vpack.c.bf16 %v1638, %v1634
      %v1703 = vpack.c.bf16 %v1639, %v1635
      %v1704 = vld [vmem:[#allocation8] sm:$0xff]
      %v1705 = vld [vmem:[#allocation8 + $0x8] sm:$0xff]
      %v1706 = vld [vmem:[#allocation8 + $0x10] sm:$0xff]
      %v1707 = vld [vmem:[#allocation8 + $0x18] sm:$0xff]
      %v1708 = vld [vmem:[#allocation8 + $0x20] sm:$0xff]
      %v1709 = vld [vmem:[#allocation8 + $0x28] sm:$0xff]
      %v1710 = vld [vmem:[#allocation8 + $0x30] sm:$0xff]
      %v1711 = vld [vmem:[#allocation8 + $0x38] sm:$0xff]
      %v1712 = vld [vmem:[#allocation8 + $0x40] sm:$0xff]
      %v1713 = vld [vmem:[#allocation8 + $0x48] sm:$0xff]
      %v1714 = vld [vmem:[#allocation8 + $0x50] sm:$0xff]
      %v1715 = vld [vmem:[#allocation8 + $0x58] sm:$0xff]
      %v1716 = vld [vmem:[#allocation8 + $0x60] sm:$0xff]
      %v1717 = vld [vmem:[#allocation8 + $0x68] sm:$0xff]
      %v1718 = vld [vmem:[#allocation8 + $0x70] sm:$0xff]
      %v1719 = vld [vmem:[#allocation8 + $0x78] sm:$0xff]
      %v1720 = vld [vmem:[#allocation8 + $0x80] sm:$0xff]
      %v1721 = vld [vmem:[#allocation8 + $0x88] sm:$0xff]
      %v1722 = vld [vmem:[#allocation8 + $0x90] sm:$0xff]
      %v1723 = vld [vmem:[#allocation8 + $0x98] sm:$0xff]
      %v1724 = vld [vmem:[#allocation8 + $0xa0] sm:$0xff]
      %v1725 = vld [vmem:[#allocation8 + $0xa8] sm:$0xff]
      %v1726 = vld [vmem:[#allocation8 + $0xb0] sm:$0xff]
      %v1727 = vld [vmem:[#allocation8 + $0xb8] sm:$0xff]
      %v1728 = vld [vmem:[#allocation8 + $0xc0] sm:$0xff]
      %v1729 = vld [vmem:[#allocation8 + $0xc8] sm:$0xff]
      %v1730 = vld [vmem:[#allocation8 + $0xd0] sm:$0xff]
      %v1731 = vld [vmem:[#allocation8 + $0xd8] sm:$0xff]
      %v1732 = vld [vmem:[#allocation8 + $0xe0] sm:$0xff]
      %v1733 = vld [vmem:[#allocation8 + $0xe8] sm:$0xff]
      %v1734 = vld [vmem:[#allocation8 + $0xf0] sm:$0xff]
      %v1735 = vld [vmem:[#allocation8 + $0xf8] sm:$0xff]
      %v1736 = vld [vmem:[#allocation8 + $0x100] sm:$0xff]
      %v1737 = vld [vmem:[#allocation8 + $0x108] sm:$0xff]
      %v1738 = vld [vmem:[#allocation8 + $0x110] sm:$0xff]
      %v1739 = vld [vmem:[#allocation8 + $0x118] sm:$0xff]
      %v1740 = vld [vmem:[#allocation8 + $0x120] sm:$0xff]
      %v1741 = vld [vmem:[#allocation8 + $0x128] sm:$0xff]
      %v1742 = vld [vmem:[#allocation8 + $0x130] sm:$0xff]
      %v1743 = vld [vmem:[#allocation8 + $0x138] sm:$0xff]
      %v1744 = vld [vmem:[#allocation8 + $0x140] sm:$0xff]
      %v1745 = vld [vmem:[#allocation8 + $0x148] sm:$0xff]
      %v1746 = vld [vmem:[#allocation8 + $0x150] sm:$0xff]
      %v1747 = vld [vmem:[#allocation8 + $0x158] sm:$0xff]
      %v1748 = vld [vmem:[#allocation8 + $0x160] sm:$0xff]
      %v1749 = vld [vmem:[#allocation8 + $0x168] sm:$0xff]
      %v1750 = vld [vmem:[#allocation8 + $0x170] sm:$0xff]
      %v1751 = vld [vmem:[#allocation8 + $0x178] sm:$0xff]
      %v1752 = vld [vmem:[#allocation8 + $0x180] sm:$0xff]
      %v1753 = vld [vmem:[#allocation8 + $0x188] sm:$0xff]
      %v1754 = vld [vmem:[#allocation8 + $0x190] sm:$0xff]
      %v1755 = vld [vmem:[#allocation8 + $0x198] sm:$0xff]
      %v1756 = vld [vmem:[#allocation8 + $0x1a0] sm:$0xff]
      %v1757 = vld [vmem:[#allocation8 + $0x1a8] sm:$0xff]
      %v1758 = vld [vmem:[#allocation8 + $0x1b0] sm:$0xff]
      %v1759 = vld [vmem:[#allocation8 + $0x1b8] sm:$0xff]
      %v1760 = vld [vmem:[#allocation8 + $0x1c0] sm:$0xff]
      %v1761 = vld [vmem:[#allocation8 + $0x1c8] sm:$0xff]
      %v1762 = vld [vmem:[#allocation8 + $0x1d0] sm:$0xff]
      %v1763 = vld [vmem:[#allocation8 + $0x1d8] sm:$0xff]
      %v1764 = vld [vmem:[#allocation8 + $0x1e0] sm:$0xff]
      %v1765 = vld [vmem:[#allocation8 + $0x1e8] sm:$0xff]
      %v1766 = vld [vmem:[#allocation8 + $0x1f0] sm:$0xff]
      %v1767 = vld [vmem:[#allocation8 + $0x1f8] sm:$0xff]
      %v1768 = vld [vmem:[%s4] sm:$0x3]
      %v1770 = vlaneseq
      %v1771 = vshrl.u32 %v1770, 7
      %v1772 = vsub.s32 0, %v1771
      %v1773 = vrot.slane %v1768, %v1772
      %v1774 = vlaneseq
      %v1775 = vshrl.u32 %v1774, 7
      %v1776 = vsub.s32 1, %v1775
      %v1777 = vrot.slane %v1768, %v1776
      %v1844 = vunpack.c.l.b16 %v1704
      %v1845 = vunpack.c.h.b16 %v1704
      %v1846 = vunpack.c.l.b16 %v1705
      %v1847 = vunpack.c.h.b16 %v1705
      %v1848 = vunpack.c.l.b16 %v1706
      %v1849 = vunpack.c.h.b16 %v1706
      %v1850 = vunpack.c.l.b16 %v1707
      %v1851 = vunpack.c.h.b16 %v1707
      %v1852 = vunpack.c.l.b16 %v1708
      %v1853 = vunpack.c.h.b16 %v1708
      %v1854 = vunpack.c.l.b16 %v1709
      %v1855 = vunpack.c.h.b16 %v1709
      %v1856 = vunpack.c.l.b16 %v1710
      %v1857 = vunpack.c.h.b16 %v1710
      %v1858 = vunpack.c.l.b16 %v1711
      %v1859 = vunpack.c.h.b16 %v1711
      %v1860 = vunpack.c.l.b16 %v1712
      %v1861 = vunpack.c.h.b16 %v1712
      %v1862 = vunpack.c.l.b16 %v1713
      %v1863 = vunpack.c.h.b16 %v1713
      %v1864 = vunpack.c.l.b16 %v1714
      %v1865 = vunpack.c.h.b16 %v1714
      %v1866 = vunpack.c.l.b16 %v1715
      %v1867 = vunpack.c.h.b16 %v1715
      %v1868 = vunpack.c.l.b16 %v1716
      %v1869 = vunpack.c.h.b16 %v1716
      %v1870 = vunpack.c.l.b16 %v1717
      %v1871 = vunpack.c.h.b16 %v1717
      %v1872 = vunpack.c.l.b16 %v1718
      %v1873 = vunpack.c.h.b16 %v1718
      %v1874 = vunpack.c.l.b16 %v1719
      %v1875 = vunpack.c.h.b16 %v1719
      %v1876 = vunpack.c.l.b16 %v1720
      %v1877 = vunpack.c.h.b16 %v1720
      %v1878 = vunpack.c.l.b16 %v1721
      %v1879 = vunpack.c.h.b16 %v1721
      %v1880 = vunpack.c.l.b16 %v1722
      %v1881 = vunpack.c.h.b16 %v1722
      %v1882 = vunpack.c.l.b16 %v1723
      %v1883 = vunpack.c.h.b16 %v1723
      %v1884 = vunpack.c.l.b16 %v1724
      %v1885 = vunpack.c.h.b16 %v1724
      %v1886 = vunpack.c.l.b16 %v1725
      %v1887 = vunpack.c.h.b16 %v1725
      %v1888 = vunpack.c.l.b16 %v1726
      %v1889 = vunpack.c.h.b16 %v1726
      %v1890 = vunpack.c.l.b16 %v1727
      %v1891 = vunpack.c.h.b16 %v1727
      %v1892 = vunpack.c.l.b16 %v1728
      %v1893 = vunpack.c.h.b16 %v1728
      %v1894 = vunpack.c.l.b16 %v1729
      %v1895 = vunpack.c.h.b16 %v1729
      %v1896 = vunpack.c.l.b16 %v1730
      %v1897 = vunpack.c.h.b16 %v1730
      %v1898 = vunpack.c.l.b16 %v1731
      %v1899 = vunpack.c.h.b16 %v1731
      %v1900 = vunpack.c.l.b16 %v1732
      %v1901 = vunpack.c.h.b16 %v1732
      %v1902 = vunpack.c.l.b16 %v1733
      %v1903 = vunpack.c.h.b16 %v1733
      %v1904 = vunpack.c.l.b16 %v1734
      %v1905 = vunpack.c.h.b16 %v1734
      %v1906 = vunpack.c.l.b16 %v1735
      %v1907 = vunpack.c.h.b16 %v1735
      %v1908 = vunpack.c.l.b16 %v1736
      %v1909 = vunpack.c.h.b16 %v1736
      %v1910 = vunpack.c.l.b16 %v1737
      %v1911 = vunpack.c.h.b16 %v1737
      %v1912 = vunpack.c.l.b16 %v1738
      %v1913 = vunpack.c.h.b16 %v1738
      %v1914 = vunpack.c.l.b16 %v1739
      %v1915 = vunpack.c.h.b16 %v1739
      %v1916 = vunpack.c.l.b16 %v1740
      %v1917 = vunpack.c.h.b16 %v1740
      %v1918 = vunpack.c.l.b16 %v1741
      %v1919 = vunpack.c.h.b16 %v1741
      %v1920 = vunpack.c.l.b16 %v1742
      %v1921 = vunpack.c.h.b16 %v1742
      %v1922 = vunpack.c.l.b16 %v1743
      %v1923 = vunpack.c.h.b16 %v1743
      %v1924 = vunpack.c.l.b16 %v1744
      %v1925 = vunpack.c.h.b16 %v1744
      %v1926 = vunpack.c.l.b16 %v1745
      %v1927 = vunpack.c.h.b16 %v1745
      %v1928 = vunpack.c.l.b16 %v1746
      %v1929 = vunpack.c.h.b16 %v1746
      %v1930 = vunpack.c.l.b16 %v1747
      %v1931 = vunpack.c.h.b16 %v1747
      %v1932 = vunpack.c.l.b16 %v1748
      %v1933 = vunpack.c.h.b16 %v1748
      %v1934 = vunpack.c.l.b16 %v1749
      %v1935 = vunpack.c.h.b16 %v1749
      %v1936 = vunpack.c.l.b16 %v1750
      %v1937 = vunpack.c.h.b16 %v1750
      %v1938 = vunpack.c.l.b16 %v1751
      %v1939 = vunpack.c.h.b16 %v1751
      %v1940 = vunpack.c.l.b16 %v1752
      %v1941 = vunpack.c.h.b16 %v1752
      %v1942 = vunpack.c.l.b16 %v1753
      %v1943 = vunpack.c.h.b16 %v1753
      %v1944 = vunpack.c.l.b16 %v1754
      %v1945 = vunpack.c.h.b16 %v1754
      %v1946 = vunpack.c.l.b16 %v1755
      %v1947 = vunpack.c.h.b16 %v1755
      %v1948 = vunpack.c.l.b16 %v1756
      %v1949 = vunpack.c.h.b16 %v1756
      %v1950 = vunpack.c.l.b16 %v1757
      %v1951 = vunpack.c.h.b16 %v1757
      %v1952 = vunpack.c.l.b16 %v1758
      %v1953 = vunpack.c.h.b16 %v1758
      %v1954 = vunpack.c.l.b16 %v1759
      %v1955 = vunpack.c.h.b16 %v1759
      %v1956 = vunpack.c.l.b16 %v1760
      %v1957 = vunpack.c.h.b16 %v1760
      %v1958 = vunpack.c.l.b16 %v1761
      %v1959 = vunpack.c.h.b16 %v1761
      %v1960 = vunpack.c.l.b16 %v1762
      %v1961 = vunpack.c.h.b16 %v1762
      %v1962 = vunpack.c.l.b16 %v1763
      %v1963 = vunpack.c.h.b16 %v1763
      %v1964 = vunpack.c.l.b16 %v1764
      %v1965 = vunpack.c.h.b16 %v1764
      %v1966 = vunpack.c.l.b16 %v1765
      %v1967 = vunpack.c.h.b16 %v1765
      %v1968 = vunpack.c.l.b16 %v1766
      %v1969 = vunpack.c.h.b16 %v1766
      %v1970 = vunpack.c.l.b16 %v1767
      %v1971 = vunpack.c.h.b16 %v1767
      %v1972 = vpack.c.b16 %v1846, %v1844
      %v1973 = vpack.c.b16 %v1847, %v1845
      %v1974 = vpack.c.b16 %v1850, %v1848
      %v1975 = vpack.c.b16 %v1851, %v1849
      %v1976 = vpack.c.b16 %v1854, %v1852
      %v1977 = vpack.c.b16 %v1855, %v1853
      %v1978 = vpack.c.b16 %v1858, %v1856
      %v1979 = vpack.c.b16 %v1859, %v1857
      %v1980 = vpack.c.b16 %v1862, %v1860
      %v1981 = vpack.c.b16 %v1863, %v1861
      %v1982 = vpack.c.b16 %v1866, %v1864
      %v1983 = vpack.c.b16 %v1867, %v1865
      %v1984 = vpack.c.b16 %v1870, %v1868
      %v1985 = vpack.c.b16 %v1871, %v1869
      %v1986 = vpack.c.b16 %v1874, %v1872
      %v1987 = vpack.c.b16 %v1875, %v1873
      %v1988 = vpack.c.b16 %v1878, %v1876
      %v1989 = vpack.c.b16 %v1879, %v1877
      %v1990 = vpack.c.b16 %v1882, %v1880
      %v1991 = vpack.c.b16 %v1883, %v1881
      %v1992 = vpack.c.b16 %v1886, %v1884
      %v1993 = vpack.c.b16 %v1887, %v1885
      %v1994 = vpack.c.b16 %v1890, %v1888
      %v1995 = vpack.c.b16 %v1891, %v1889
      %v1996 = vpack.c.b16 %v1894, %v1892
      %v1997 = vpack.c.b16 %v1895, %v1893
      %v1998 = vpack.c.b16 %v1898, %v1896
      %v1999 = vpack.c.b16 %v1899, %v1897
      %v2000 = vpack.c.b16 %v1902, %v1900
      %v2001 = vpack.c.b16 %v1903, %v1901
      %v2002 = vpack.c.b16 %v1906, %v1904
      %v2003 = vpack.c.b16 %v1907, %v1905
      %v2004 = vpack.c.b16 %v1910, %v1908
      %v2005 = vpack.c.b16 %v1911, %v1909
      %v2006 = vpack.c.b16 %v1914, %v1912
      %v2007 = vpack.c.b16 %v1915, %v1913
      %v2008 = vpack.c.b16 %v1918, %v1916
      %v2009 = vpack.c.b16 %v1919, %v1917
      %v2010 = vpack.c.b16 %v1922, %v1920
      %v2011 = vpack.c.b16 %v1923, %v1921
      %v2012 = vpack.c.b16 %v1926, %v1924
      %v2013 = vpack.c.b16 %v1927, %v1925
      %v2014 = vpack.c.b16 %v1930, %v1928
      %v2015 = vpack.c.b16 %v1931, %v1929
      %v2016 = vpack.c.b16 %v1934, %v1932
      %v2017 = vpack.c.b16 %v1935, %v1933
      %v2018 = vpack.c.b16 %v1938, %v1936
      %v2019 = vpack.c.b16 %v1939, %v1937
      %v2020 = vpack.c.b16 %v1942, %v1940
      %v2021 = vpack.c.b16 %v1943, %v1941
      %v2022 = vpack.c.b16 %v1946, %v1944
      %v2023 = vpack.c.b16 %v1947, %v1945
      %v2024 = vpack.c.b16 %v1950, %v1948
      %v2025 = vpack.c.b16 %v1951, %v1949
      %v2026 = vpack.c.b16 %v1954, %v1952
      %v2027 = vpack.c.b16 %v1955, %v1953
      %v2028 = vpack.c.b16 %v1958, %v1956
      %v2029 = vpack.c.b16 %v1959, %v1957
      %v2030 = vpack.c.b16 %v1962, %v1960
      %v2031 = vpack.c.b16 %v1963, %v1961
      %v2032 = vpack.c.b16 %v1966, %v1964
      %v2033 = vpack.c.b16 %v1967, %v1965
      %v2034 = vpack.c.b16 %v1970, %v1968
      %v2035 = vpack.c.b16 %v1971, %v1969
      %2100 = vmatprep.subr.bf16.mxu0 %v1973
      %2101 = vmatpush1.bf16.msra.mxu0 %v1972
      %2102 = vmatprep.subr.bf16.mxu0 %v1975
      %2103 = vmatpush1.bf16.msra.mxu0 %v1974
      %2104 = vmatprep.subr.bf16.mxu0 %v1977
      %2105 = vmatpush1.bf16.msra.mxu0 %v1976
      %2106 = vmatprep.subr.bf16.mxu0 %v1979
      %2107 = vmatpush1.bf16.msra.mxu0 %v1978
      %2108 = vmatprep.subr.bf16.mxu0 %v1981
      %2109 = vmatpush1.bf16.msra.mxu0 %v1980
      %2110 = vmatprep.subr.bf16.mxu0 %v1983
      %2111 = vmatpush1.bf16.msra.mxu0 %v1982
      %2112 = vmatprep.subr.bf16.mxu0 %v1985
      %2113 = vmatpush1.bf16.msra.mxu0 %v1984
      %2114 = vmatprep.subr.bf16.mxu0 %v1987
      %2115 = vmatpush1.bf16.msra.mxu0 %v1986
      %2116 = vmatprep.subr.bf16.mxu0 %v1989
      %2117 = vmatpush1.bf16.msra.mxu0 %v1988
      %2118 = vmatprep.subr.bf16.mxu0 %v1991
      %2119 = vmatpush1.bf16.msra.mxu0 %v1990
      %2120 = vmatprep.subr.bf16.mxu0 %v1993
      %2121 = vmatpush1.bf16.msra.mxu0 %v1992
      %2122 = vmatprep.subr.bf16.mxu0 %v1995
      %2123 = vmatpush1.bf16.msra.mxu0 %v1994
      %2124 = vmatprep.subr.bf16.mxu0 %v1997
      %2125 = vmatpush1.bf16.msra.mxu0 %v1996
      %2126 = vmatprep.subr.bf16.mxu0 %v1999
      %2127 = vmatpush1.bf16.msra.mxu0 %v1998
      %2128 = vmatprep.subr.bf16.mxu0 %v2001
      %2129 = vmatpush1.bf16.msra.mxu0 %v2000
      %2130 = vmatprep.subr.bf16.mxu0 %v2003
      %2131 = vmatpush1.bf16.msra.mxu0 %v2002
      %2132 = vmatprep.mubr.bf16.mxu0 %v1641
      %2133 = vmatmul.mubr.bf16.gmra.mrb[0].mxu0 %v1640
      %v2134 = vpop.f32.mrb[0].mxu0
      %v2135 = vadd.f32 %v1773, %v2134
      %v2136 = vpop.f32.mrb[0].mxu0
      %v2137 = vadd.f32 %v1777, %v2136
      %v2138 = vpop.f32.mrb[0].mxu0
      %v2139 = vadd.f32 %v1773, %v2138
      %v2140 = vpop.f32.mrb[0].mxu0
      %v2141 = vadd.f32 %v1777, %v2140
      %2142 = vmatprep.mubr.bf16.mxu0 %v1645
      %2143 = vmatmul.mubr.bf16.gmra.mrb[0].mxu0 %v1644
      %v2144 = vpop.f32.mrb[0].mxu0
      %v2145 = vadd.f32 %v1773, %v2144
      %v2146 = vpop.f32.mrb[0].mxu0
      %v2147 = vadd.f32 %v1777, %v2146
      %v2148 = vpop.f32.mrb[0].mxu0
      %v2149 = vadd.f32 %v1773, %v2148
      %v2150 = vpop.f32.mrb[0].mxu0
      %v2151 = vadd.f32 %v1777, %v2150
      %2152 = vmatprep.mubr.bf16.mxu0 %v1649
      %2153 = vmatmul.mubr.bf16.gmra.mrb[0].mxu0 %v1648
      %v2154 = vpop.f32.mrb[0].mxu0
      %v2155 = vadd.f32 %v1773, %v2154
      %v2156 = vpop.f32.mrb[0].mxu0
      %v2157 = vadd.f32 %v1777, %v2156
      %v2158 = vpop.f32.mrb[0].mxu0
      %v2159 = vadd.f32 %v1773, %v2158
      %v2160 = vpop.f32.mrb[0].mxu0
      %v2161 = vadd.f32 %v1777, %v2160
      %2162 = vmatprep.mubr.bf16.mxu0 %v1653
      %2163 = vmatmul.mubr.bf16.gmra.mrb[0].mxu0 %v1652
      %v2164 = vpop.f32.mrb[0].mxu0
      %v2165 = vadd.f32 %v1773, %v2164
      %v2166 = vpop.f32.mrb[0].mxu0
      %v2167 = vadd.f32 %v1777, %v2166
      %v2168 = vpop.f32.mrb[0].mxu0
      %v2169 = vadd.f32 %v1773, %v2168
      %v2170 = vpop.f32.mrb[0].mxu0
      %v2171 = vadd.f32 %v1777, %v2170
      %2172 = vmatprep.mubr.bf16.mxu0 %v1657
      %2173 = vmatmul.mubr.bf16.gmra.mrb[0].mxu0 %v1656
      %v2174 = vpop.f32.mrb[0].mxu0
      %v2175 = vadd.f32 %v1773, %v2174
      %v2176 = vpop.f32.mrb[0].mxu0
      %v2177 = vadd.f32 %v1777, %v2176
      %v2178 = vpop.f32.mrb[0].mxu0
      %v2179 = vadd.f32 %v1773, %v2178
      %v2180 = vpop.f32.mrb[0].mxu0
      %v2181 = vadd.f32 %v1777, %v2180
      %2182 = vmatprep.mubr.bf16.mxu0 %v1661
      %2183 = vmatmul.mubr.bf16.gmra.mrb[0].mxu0 %v1660
      %v2184 = vpop.f32.mrb[0].mxu0
      %v2185 = vadd.f32 %v1773, %v2184
      %v2186 = vpop.f32.mrb[0].mxu0
      %v2187 = vadd.f32 %v1777, %v2186
      %v2188 = vpop.f32.mrb[0].mxu0
      %v2189 = vadd.f32 %v1773, %v2188
      %v2190 = vpop.f32.mrb[0].mxu0
      %v2191 = vadd.f32 %v1777, %v2190
      %2192 = vmatprep.mubr.bf16.mxu0 %v1665
      %2193 = vmatmul.mubr.bf16.gmra.mrb[0].mxu0 %v1664
      %v2194 = vpop.f32.mrb[0].mxu0
      %v2195 = vadd.f32 %v1773, %v2194
      %v2196 = vpop.f32.mrb[0].mxu0
      %v2197 = vadd.f32 %v1777, %v2196
      %v2198 = vpop.f32.mrb[0].mxu0
      %v2199 = vadd.f32 %v1773, %v2198
      %v2200 = vpop.f32.mrb[0].mxu0
      %v2201 = vadd.f32 %v1777, %v2200
      %2202 = vmatprep.mubr.bf16.mxu0 %v1669
      %2203 = vmatmul.mubr.bf16.gmra.mrb[0].mxu0 %v1668
      %v2204 = vpop.f32.mrb[0].mxu0
      %v2205 = vadd.f32 %v1773, %v2204
      %v2206 = vpop.f32.mrb[0].mxu0
      %v2207 = vadd.f32 %v1777, %v2206
      %v2208 = vpop.f32.mrb[0].mxu0
      %v2209 = vadd.f32 %v1773, %v2208
      %v2210 = vpop.f32.mrb[0].mxu0
      %v2211 = vadd.f32 %v1777, %v2210
      %2212 = vmatprep.mubr.bf16.mxu0 %v1673
      %2213 = vmatmul.mubr.bf16.gmra.mrb[0].mxu0 %v1672
      %v2214 = vpop.f32.mrb[0].mxu0
      %v2215 = vadd.f32 %v1773, %v2214
      %v2216 = vpop.f32.mrb[0].mxu0
      %v2217 = vadd.f32 %v1777, %v2216
      %v2218 = vpop.f32.mrb[0].mxu0
      %v2219 = vadd.f32 %v1773, %v2218
      %v2220 = vpop.f32.mrb[0].mxu0
      %v2221 = vadd.f32 %v1777, %v2220
      %2222 = vmatprep.mubr.bf16.mxu0 %v1677
      %2223 = vmatmul.mubr.bf16.gmra.mrb[0].mxu0 %v1676
      %v2224 = vpop.f32.mrb[0].mxu0
      %v2225 = vadd.f32 %v1773, %v2224
      %v2226 = vpop.f32.mrb[0].mxu0
      %v2227 = vadd.f32 %v1777, %v2226
      %v2228 = vpop.f32.mrb[0].mxu0
      %v2229 = vadd.f32 %v1773, %v2228
      %v2230 = vpop.f32.mrb[0].mxu0
      %v2231 = vadd.f32 %v1777, %v2230
      %2232 = vmatprep.mubr.bf16.mxu0 %v1681
      %2233 = vmatmul.mubr.bf16.gmra.mrb[0].mxu0 %v1680
      %v2234 = vpop.f32.mrb[0].mxu0
      %v2235 = vadd.f32 %v1773, %v2234
      %v2236 = vpop.f32.mrb[0].mxu0
      %v2237 = vadd.f32 %v1777, %v2236
      %v2238 = vpop.f32.mrb[0].mxu0
      %v2239 = vadd.f32 %v1773, %v2238
      %v2240 = vpop.f32.mrb[0].mxu0
      %v2241 = vadd.f32 %v1777, %v2240
      %2242 = vmatprep.mubr.bf16.mxu0 %v1685
      %2243 = vmatmul.mubr.bf16.gmra.mrb[0].mxu0 %v1684
      %v2244 = vpop.f32.mrb[0].mxu0
      %v2245 = vadd.f32 %v1773, %v2244
      %v2246 = vpop.f32.mrb[0].mxu0
      %v2247 = vadd.f32 %v1777, %v2246
      %v2248 = vpop.f32.mrb[0].mxu0
      %v2249 = vadd.f32 %v1773, %v2248
      %v2250 = vpop.f32.mrb[0].mxu0
      %v2251 = vadd.f32 %v1777, %v2250
      %2252 = vmatprep.mubr.bf16.mxu0 %v1689
      %2253 = vmatmul.mubr.bf16.gmra.mrb[0].mxu0 %v1688
      %v2254 = vpop.f32.mrb[0].mxu0
      %v2255 = vadd.f32 %v1773, %v2254
      %v2256 = vpop.f32.mrb[0].mxu0
      %v2257 = vadd.f32 %v1777, %v2256
      %v2258 = vpop.f32.mrb[0].mxu0
      %v2259 = vadd.f32 %v1773, %v2258
      %v2260 = vpop.f32.mrb[0].mxu0
      %v2261 = vadd.f32 %v1777, %v2260
      %2262 = vmatprep.mubr.bf16.mxu0 %v1693
      %2263 = vmatmul.mubr.bf16.gmra.mrb[0].mxu0 %v1692
      %v2264 = vpop.f32.mrb[0].mxu0
      %v2265 = vadd.f32 %v1773, %v2264
      %v2266 = vpop.f32.mrb[0].mxu0
      %v2267 = vadd.f32 %v1777, %v2266
      %v2268 = vpop.f32.mrb[0].mxu0
      %v2269 = vadd.f32 %v1773, %v2268
      %v2270 = vpop.f32.mrb[0].mxu0
      %v2271 = vadd.f32 %v1777, %v2270
      %2272 = vmatprep.mubr.bf16.mxu0 %v1697
      %2273 = vmatmul.mubr.bf16.gmra.mrb[0].mxu0 %v1696
      %v2274 = vpop.f32.mrb[0].mxu0
      %v2275 = vadd.f32 %v1773, %v2274
      %v2276 = vpop.f32.mrb[0].mxu0
      %v2277 = vadd.f32 %v1777, %v2276
      %v2278 = vpop.f32.mrb[0].mxu0
      %v2279 = vadd.f32 %v1773, %v2278
      %v2280 = vpop.f32.mrb[0].mxu0
      %v2281 = vadd.f32 %v1777, %v2280
      %2282 = vmatprep.mubr.bf16.mxu0 %v1701
      %2283 = vmatmul.mubr.bf16.gmra.mrb[0].mxu0 %v1700
      %v2284 = vpop.f32.mrb[0].mxu0
      %v2285 = vadd.f32 %v1773, %v2284
      %v2286 = vpop.f32.mrb[0].mxu0
      %v2287 = vadd.f32 %v1777, %v2286
      %v2288 = vpop.f32.mrb[0].mxu0
      %v2289 = vadd.f32 %v1773, %v2288
      %v2290 = vpop.f32.mrb[0].mxu0
      %v2291 = vadd.f32 %v1777, %v2290
      %2292 = vdwg.mxu0
      %2293 = vmatprep.subr.bf16.mxu0 %v2005
      %2294 = vmatpush1.bf16.msra.mxu0 %v2004
      %2295 = vmatprep.subr.bf16.mxu0 %v2007
      %2296 = vmatpush1.bf16.msra.mxu0 %v2006
      %2297 = vmatprep.subr.bf16.mxu0 %v2009
      %2298 = vmatpush1.bf16.msra.mxu0 %v2008
      %2299 = vmatprep.subr.bf16.mxu0 %v2011
      %2300 = vmatpush1.bf16.msra.mxu0 %v2010
      %2301 = vmatprep.subr.bf16.mxu0 %v2013
      %2302 = vmatpush1.bf16.msra.mxu0 %v2012
      %2303 = vmatprep.subr.bf16.mxu0 %v2015
      %2304 = vmatpush1.bf16.msra.mxu0 %v2014
      %2305 = vmatprep.subr.bf16.mxu0 %v2017
      %2306 = vmatpush1.bf16.msra.mxu0 %v2016
      %2307 = vmatprep.subr.bf16.mxu0 %v2019
      %2308 = vmatpush1.bf16.msra.mxu0 %v2018
      %2309 = vmatprep.subr.bf16.mxu0 %v2021
      %2310 = vmatpush1.bf16.msra.mxu0 %v2020
      %2311 = vmatprep.subr.bf16.mxu0 %v2023
      %2312 = vmatpush1.bf16.msra.mxu0 %v2022
      %2313 = vmatprep.subr.bf16.mxu0 %v2025
      %2314 = vmatpush1.bf16.msra.mxu0 %v2024
      %2315 = vmatprep.subr.bf16.mxu0 %v2027
      %2316 = vmatpush1.bf16.msra.mxu0 %v2026
      %2317 = vmatprep.subr.bf16.mxu0 %v2029
      %2318 = vmatpush1.bf16.msra.mxu0 %v2028
      %2319 = vmatprep.subr.bf16.mxu0 %v2031
      %2320 = vmatpush1.bf16.msra.mxu0 %v2030
      %2321 = vmatprep.subr.bf16.mxu0 %v2033
      %2322 = vmatpush1.bf16.msra.mxu0 %v2032
      %2323 = vmatprep.subr.bf16.mxu0 %v2035
      %2324 = vmatpush1.bf16.msra.mxu0 %v2034
      %2325 = vmatprep.mubr.bf16.mxu0 %v1643
      %2326 = vmatmul.mubr.bf16.gmra.mrb[0].mxu0 %v1642
      %v2327 = vpop.f32.mrb[0].mxu0
      %v2328 = vadd.f32 %v2135, %v2327
      %v2329 = vpop.f32.mrb[0].mxu0
      %v2330 = vadd.f32 %v2137, %v2329
      %v2331 = vpop.f32.mrb[0].mxu0
      %v2332 = vadd.f32 %v2139, %v2331
      %v2333 = vpop.f32.mrb[0].mxu0
      %v2334 = vadd.f32 %v2141, %v2333
      %2335 = vmatprep.mubr.bf16.mxu0 %v1647
      %2336 = vmatmul.mubr.bf16.gmra.mrb[0].mxu0 %v1646
      %v2337 = vpop.f32.mrb[0].mxu0
      %v2338 = vadd.f32 %v2145, %v2337
      %v2339 = vpop.f32.mrb[0].mxu0
      %v2340 = vadd.f32 %v2147, %v2339
      %v2341 = vpop.f32.mrb[0].mxu0
      %v2342 = vadd.f32 %v2149, %v2341
      %v2343 = vpop.f32.mrb[0].mxu0
      %v2344 = vadd.f32 %v2151, %v2343
      %2345 = vmatprep.mubr.bf16.mxu0 %v1651
      %2346 = vmatmul.mubr.bf16.gmra.mrb[0].mxu0 %v1650
      %v2347 = vpop.f32.mrb[0].mxu0
      %v2348 = vadd.f32 %v2155, %v2347
      %v2349 = vpop.f32.mrb[0].mxu0
      %v2350 = vadd.f32 %v2157, %v2349
      %v2351 = vpop.f32.mrb[0].mxu0
      %v2352 = vadd.f32 %v2159, %v2351
      %v2353 = vpop.f32.mrb[0].mxu0
      %v2354 = vadd.f32 %v2161, %v2353
      %2355 = vmatprep.mubr.bf16.mxu0 %v1655
      %2356 = vmatmul.mubr.bf16.gmra.mrb[0].mxu0 %v1654
      %v2357 = vpop.f32.mrb[0].mxu0
      %v2358 = vadd.f32 %v2165, %v2357
      %v2359 = vpop.f32.mrb[0].mxu0
      %v2360 = vadd.f32 %v2167, %v2359
      %v2361 = vpop.f32.mrb[0].mxu0
      %v2362 = vadd.f32 %v2169, %v2361
      %v2363 = vpop.f32.mrb[0].mxu0
      %v2364 = vadd.f32 %v2171, %v2363
      %2365 = vmatprep.mubr.bf16.mxu0 %v1659
      %2366 = vmatmul.mubr.bf16.gmra.mrb[0].mxu0 %v1658
      %v2367 = vpop.f32.mrb[0].mxu0
      %v2368 = vadd.f32 %v2175, %v2367
      %v2369 = vpop.f32.mrb[0].mxu0
      %v2370 = vadd.f32 %v2177, %v2369
      %v2371 = vpop.f32.mrb[0].mxu0
      %v2372 = vadd.f32 %v2179, %v2371
      %v2373 = vpop.f32.mrb[0].mxu0
      %v2374 = vadd.f32 %v2181, %v2373
      %2375 = vmatprep.mubr.bf16.mxu0 %v1663
      %2376 = vmatmul.mubr.bf16.gmra.mrb[0].mxu0 %v1662
      %v2377 = vpop.f32.mrb[0].mxu0
      %v2378 = vadd.f32 %v2185, %v2377
      %v2379 = vpop.f32.mrb[0].mxu0
      %v2380 = vadd.f32 %v2187, %v2379
      %v2381 = vpop.f32.mrb[0].mxu0
      %v2382 = vadd.f32 %v2189, %v2381
      %v2383 = vpop.f32.mrb[0].mxu0
      %v2384 = vadd.f32 %v2191, %v2383
      %2385 = vmatprep.mubr.bf16.mxu0 %v1667
      %2386 = vmatmul.mubr.bf16.gmra.mrb[0].mxu0 %v1666
      %v2387 = vpop.f32.mrb[0].mxu0
      %v2388 = vadd.f32 %v2195, %v2387
      %v2389 = vpop.f32.mrb[0].mxu0
      %v2390 = vadd.f32 %v2197, %v2389
      %v2391 = vpop.f32.mrb[0].mxu0
      %v2392 = vadd.f32 %v2199, %v2391
      %v2393 = vpop.f32.mrb[0].mxu0
      %v2394 = vadd.f32 %v2201, %v2393
      %2395 = vmatprep.mubr.bf16.mxu0 %v1671
      %2396 = vmatmul.mubr.bf16.gmra.mrb[0].mxu0 %v1670
      %v2397 = vpop.f32.mrb[0].mxu0
      %v2398 = vadd.f32 %v2205, %v2397
      %v2399 = vpop.f32.mrb[0].mxu0
      %v2400 = vadd.f32 %v2207, %v2399
      %v2401 = vpop.f32.mrb[0].mxu0
      %v2402 = vadd.f32 %v2209, %v2401
      %v2403 = vpop.f32.mrb[0].mxu0
      %v2404 = vadd.f32 %v2211, %v2403
      %2405 = vmatprep.mubr.bf16.mxu0 %v1675
      %2406 = vmatmul.mubr.bf16.gmra.mrb[0].mxu0 %v1674
      %v2407 = vpop.f32.mrb[0].mxu0
      %v2408 = vadd.f32 %v2215, %v2407
      %v2409 = vpop.f32.mrb[0].mxu0
      %v2410 = vadd.f32 %v2217, %v2409
      %v2411 = vpop.f32.mrb[0].mxu0
      %v2412 = vadd.f32 %v2219, %v2411
      %v2413 = vpop.f32.mrb[0].mxu0
      %v2414 = vadd.f32 %v2221, %v2413
      %2415 = vmatprep.mubr.bf16.mxu0 %v1679
      %2416 = vmatmul.mubr.bf16.gmra.mrb[0].mxu0 %v1678
      %v2417 = vpop.f32.mrb[0].mxu0
      %v2418 = vadd.f32 %v2225, %v2417
      %v2419 = vpop.f32.mrb[0].mxu0
      %v2420 = vadd.f32 %v2227, %v2419
      %v2421 = vpop.f32.mrb[0].mxu0
      %v2422 = vadd.f32 %v2229, %v2421
      %v2423 = vpop.f32.mrb[0].mxu0
      %v2424 = vadd.f32 %v2231, %v2423
      %2425 = vmatprep.mubr.bf16.mxu0 %v1683
      %2426 = vmatmul.mubr.bf16.gmra.mrb[0].mxu0 %v1682
      %v2427 = vpop.f32.mrb[0].mxu0
      %v2428 = vadd.f32 %v2235, %v2427
      %v2429 = vpop.f32.mrb[0].mxu0
      %v2430 = vadd.f32 %v2237, %v2429
      %v2431 = vpop.f32.mrb[0].mxu0
      %v2432 = vadd.f32 %v2239, %v2431
      %v2433 = vpop.f32.mrb[0].mxu0
      %v2434 = vadd.f32 %v2241, %v2433
      %2435 = vmatprep.mubr.bf16.mxu0 %v1687
      %2436 = vmatmul.mubr.bf16.gmra.mrb[0].mxu0 %v1686
      %v2437 = vpop.f32.mrb[0].mxu0
      %v2438 = vadd.f32 %v2245, %v2437
      %v2439 = vpop.f32.mrb[0].mxu0
      %v2440 = vadd.f32 %v2247, %v2439
      %v2441 = vpop.f32.mrb[0].mxu0
      %v2442 = vadd.f32 %v2249, %v2441
      %v2443 = vpop.f32.mrb[0].mxu0
      %v2444 = vadd.f32 %v2251, %v2443
      %2445 = vmatprep.mubr.bf16.mxu0 %v1691
      %2446 = vmatmul.mubr.bf16.gmra.mrb[0].mxu0 %v1690
      %v2447 = vpop.f32.mrb[0].mxu0
      %v2448 = vadd.f32 %v2255, %v2447
      %v2449 = vpop.f32.mrb[0].mxu0
      %v2450 = vadd.f32 %v2257, %v2449
      %v2451 = vpop.f32.mrb[0].mxu0
      %v2452 = vadd.f32 %v2259, %v2451
      %v2453 = vpop.f32.mrb[0].mxu0
      %v2454 = vadd.f32 %v2261, %v2453
      %2455 = vmatprep.mubr.bf16.mxu0 %v1695
      %2456 = vmatmul.mubr.bf16.gmra.mrb[0].mxu0 %v1694
      %v2457 = vpop.f32.mrb[0].mxu0
      %v2458 = vadd.f32 %v2265, %v2457
      %v2459 = vpop.f32.mrb[0].mxu0
      %v2460 = vadd.f32 %v2267, %v2459
      %v2461 = vpop.f32.mrb[0].mxu0
      %v2462 = vadd.f32 %v2269, %v2461
      %v2463 = vpop.f32.mrb[0].mxu0
      %v2464 = vadd.f32 %v2271, %v2463
      %2465 = vmatprep.mubr.bf16.mxu0 %v1699
      %2466 = vmatmul.mubr.bf16.gmra.mrb[0].mxu0 %v1698
      %v2467 = vpop.f32.mrb[0].mxu0
      %v2468 = vadd.f32 %v2275, %v2467
      %v2469 = vpop.f32.mrb[0].mxu0
      %v2470 = vadd.f32 %v2277, %v2469
      %v2471 = vpop.f32.mrb[0].mxu0
      %v2472 = vadd.f32 %v2279, %v2471
      %v2473 = vpop.f32.mrb[0].mxu0
      %v2474 = vadd.f32 %v2281, %v2473
      %2475 = vmatprep.mubr.bf16.mxu0 %v1703
      %2476 = vmatmul.mubr.bf16.gmra.mrb[0].mxu0 %v1702
      %v2477 = vpop.f32.mrb[0].mxu0
      %v2478 = vadd.f32 %v2285, %v2477
      %v2479 = vpop.f32.mrb[0].mxu0
      %v2480 = vadd.f32 %v2287, %v2479
      %v2481 = vpop.f32.mrb[0].mxu0
      %v2482 = vadd.f32 %v2289, %v2481
      %v2483 = vpop.f32.mrb[0].mxu0
      %v2484 = vadd.f32 %v2291, %v2483
      %2485 = vdwg.mxu0
      %v2486 = vmax.f32 %v2328, 0.0
      %v2487 = vmax.f32 %v2330, 0.0
      %v2488 = vmax.f32 %v2332, 0.0
      %v2489 = vmax.f32 %v2334, 0.0
      %v2490 = vmax.f32 %v2338, 0.0
      %v2491 = vmax.f32 %v2340, 0.0
      %v2492 = vmax.f32 %v2342, 0.0
      %v2493 = vmax.f32 %v2344, 0.0
      %v2494 = vmax.f32 %v2348, 0.0
      %v2495 = vmax.f32 %v2350, 0.0
      %v2496 = vmax.f32 %v2352, 0.0
      %v2497 = vmax.f32 %v2354, 0.0
      %v2498 = vmax.f32 %v2358, 0.0
      %v2499 = vmax.f32 %v2360, 0.0
      %v2500 = vmax.f32 %v2362, 0.0
      %v2501 = vmax.f32 %v2364, 0.0
      %v2502 = vmax.f32 %v2368, 0.0
      %v2503 = vmax.f32 %v2370, 0.0
      %v2504 = vmax.f32 %v2372, 0.0
      %v2505 = vmax.f32 %v2374, 0.0
      %v2506 = vmax.f32 %v2378, 0.0
      %v2507 = vmax.f32 %v2380, 0.0
      %v2508 = vmax.f32 %v2382, 0.0
      %v2509 = vmax.f32 %v2384, 0.0
      %v2510 = vmax.f32 %v2388, 0.0
      %v2511 = vmax.f32 %v2390, 0.0
      %v2512 = vmax.f32 %v2392, 0.0
      %v2513 = vmax.f32 %v2394, 0.0
      %v2514 = vmax.f32 %v2398, 0.0
      %v2515 = vmax.f32 %v2400, 0.0
      %v2516 = vmax.f32 %v2402, 0.0
      %v2517 = vmax.f32 %v2404, 0.0
      %v2518 = vmax.f32 %v2408, 0.0
      %v2519 = vmax.f32 %v2410, 0.0
      %v2520 = vmax.f32 %v2412, 0.0
      %v2521 = vmax.f32 %v2414, 0.0
      %v2522 = vmax.f32 %v2418, 0.0
      %v2523 = vmax.f32 %v2420, 0.0
      %v2524 = vmax.f32 %v2422, 0.0
      %v2525 = vmax.f32 %v2424, 0.0
      %v2526 = vmax.f32 %v2428, 0.0
      %v2527 = vmax.f32 %v2430, 0.0
      %v2528 = vmax.f32 %v2432, 0.0
      %v2529 = vmax.f32 %v2434, 0.0
      %v2530 = vmax.f32 %v2438, 0.0
      %v2531 = vmax.f32 %v2440, 0.0
      %v2532 = vmax.f32 %v2442, 0.0
      %v2533 = vmax.f32 %v2444, 0.0
      %v2534 = vmax.f32 %v2448, 0.0
      %v2535 = vmax.f32 %v2450, 0.0
      %v2536 = vmax.f32 %v2452, 0.0
      %v2537 = vmax.f32 %v2454, 0.0
      %v2538 = vmax.f32 %v2458, 0.0
      %v2539 = vmax.f32 %v2460, 0.0
      %v2540 = vmax.f32 %v2462, 0.0
      %v2541 = vmax.f32 %v2464, 0.0
      %v2542 = vmax.f32 %v2468, 0.0
      %v2543 = vmax.f32 %v2470, 0.0
      %v2544 = vmax.f32 %v2472, 0.0
      %v2545 = vmax.f32 %v2474, 0.0
      %v2546 = vmax.f32 %v2478, 0.0
      %v2547 = vmax.f32 %v2480, 0.0
      %v2548 = vmax.f32 %v2482, 0.0
      %v2549 = vmax.f32 %v2484, 0.0
      %v2550 = vpack.c.bf16 %v2488, %v2486
      %v2551 = vpack.c.bf16 %v2489, %v2487
      %v2552 = vpack.c.bf16 %v2492, %v2490
      %v2553 = vpack.c.bf16 %v2493, %v2491
      %v2554 = vpack.c.bf16 %v2496, %v2494
      %v2555 = vpack.c.bf16 %v2497, %v2495
      %v2556 = vpack.c.bf16 %v2500, %v2498
      %v2557 = vpack.c.bf16 %v2501, %v2499
      %v2558 = vpack.c.bf16 %v2504, %v2502
      %v2559 = vpack.c.bf16 %v2505, %v2503
      %v2560 = vpack.c.bf16 %v2508, %v2506
      %v2561 = vpack.c.bf16 %v2509, %v2507
      %v2562 = vpack.c.bf16 %v2512, %v2510
      %v2563 = vpack.c.bf16 %v2513, %v2511
      %v2564 = vpack.c.bf16 %v2516, %v2514
      %v2565 = vpack.c.bf16 %v2517, %v2515
      %v2566 = vpack.c.bf16 %v2520, %v2518
      %v2567 = vpack.c.bf16 %v2521, %v2519
      %v2568 = vpack.c.bf16 %v2524, %v2522
      %v2569 = vpack.c.bf16 %v2525, %v2523
      %v2570 = vpack.c.bf16 %v2528, %v2526
      %v2571 = vpack.c.bf16 %v2529, %v2527
      %v2572 = vpack.c.bf16 %v2532, %v2530
      %v2573 = vpack.c.bf16 %v2533, %v2531
      %v2574 = vpack.c.bf16 %v2536, %v2534
      %v2575 = vpack.c.bf16 %v2537, %v2535
      %v2576 = vpack.c.bf16 %v2540, %v2538
      %v2577 = vpack.c.bf16 %v2541, %v2539
      %v2578 = vpack.c.bf16 %v2544, %v2542
      %v2579 = vpack.c.bf16 %v2545, %v2543
      %v2580 = vpack.c.bf16 %v2548, %v2546
      %v2581 = vpack.c.bf16 %v2549, %v2547
      %v2582 = vld [vmem:[#allocation9] sm:$0xf]
      %v2583 = vld [vmem:[#allocation9 + $0x4] sm:$0xf]
      %v2584 = vld [vmem:[#allocation9 + $0x8] sm:$0xf]
      %v2585 = vld [vmem:[#allocation9 + $0xc] sm:$0xf]
      %v2586 = vld [vmem:[#allocation9 + $0x10] sm:$0xf]
      %v2587 = vld [vmem:[#allocation9 + $0x14] sm:$0xf]
      %v2588 = vld [vmem:[#allocation9 + $0x18] sm:$0xf]
      %v2589 = vld [vmem:[#allocation9 + $0x1c] sm:$0xf]
      %v2590 = vld [vmem:[#allocation9 + $0x20] sm:$0xf]
      %v2591 = vld [vmem:[#allocation9 + $0x24] sm:$0xf]
      %v2592 = vld [vmem:[#allocation9 + $0x28] sm:$0xf]
      %v2593 = vld [vmem:[#allocation9 + $0x2c] sm:$0xf]
      %v2594 = vld [vmem:[#allocation9 + $0x30] sm:$0xf]
      %v2595 = vld [vmem:[#allocation9 + $0x34] sm:$0xf]
      %v2596 = vld [vmem:[#allocation9 + $0x38] sm:$0xf]
      %v2597 = vld [vmem:[#allocation9 + $0x3c] sm:$0xf]
      %v2598 = vld [vmem:[#allocation9 + $0x40] sm:$0xf]
      %v2599 = vld [vmem:[#allocation9 + $0x44] sm:$0xf]
      %v2600 = vld [vmem:[#allocation9 + $0x48] sm:$0xf]
      %v2601 = vld [vmem:[#allocation9 + $0x4c] sm:$0xf]
      %v2602 = vld [vmem:[#allocation9 + $0x50] sm:$0xf]
      %v2603 = vld [vmem:[#allocation9 + $0x54] sm:$0xf]
      %v2604 = vld [vmem:[#allocation9 + $0x58] sm:$0xf]
      %v2605 = vld [vmem:[#allocation9 + $0x5c] sm:$0xf]
      %v2606 = vld [vmem:[#allocation9 + $0x60] sm:$0xf]
      %v2607 = vld [vmem:[#allocation9 + $0x64] sm:$0xf]
      %v2608 = vld [vmem:[#allocation9 + $0x68] sm:$0xf]
      %v2609 = vld [vmem:[#allocation9 + $0x6c] sm:$0xf]
      %v2610 = vld [vmem:[#allocation9 + $0x70] sm:$0xf]
      %v2611 = vld [vmem:[#allocation9 + $0x74] sm:$0xf]
      %v2612 = vld [vmem:[#allocation9 + $0x78] sm:$0xf]
      %v2613 = vld [vmem:[#allocation9 + $0x7c] sm:$0xf]
      %v2614 = vld [vmem:[%s6] sm:$0x1]
      %v2616 = vlaneseq
      %v2617 = vshrl.u32 %v2616, 7
      %v2618 = vsub.s32 0, %v2617
      %v2619 = vrot.slane %v2614, %v2618
      %v2653 = vunpack.c.l.b16 %v2582
      %v2654 = vunpack.c.l.b16 %v2583
      %v2655 = vunpack.c.l.b16 %v2584
      %v2656 = vunpack.c.l.b16 %v2585
      %v2657 = vunpack.c.l.b16 %v2586
      %v2658 = vunpack.c.l.b16 %v2587
      %v2659 = vunpack.c.l.b16 %v2588
      %v2660 = vunpack.c.l.b16 %v2589
      %v2661 = vunpack.c.l.b16 %v2590
      %v2662 = vunpack.c.l.b16 %v2591
      %v2663 = vunpack.c.l.b16 %v2592
      %v2664 = vunpack.c.l.b16 %v2593
      %v2665 = vunpack.c.l.b16 %v2594
      %v2666 = vunpack.c.l.b16 %v2595
      %v2667 = vunpack.c.l.b16 %v2596
      %v2668 = vunpack.c.l.b16 %v2597
      %v2669 = vunpack.c.l.b16 %v2598
      %v2670 = vunpack.c.l.b16 %v2599
      %v2671 = vunpack.c.l.b16 %v2600
      %v2672 = vunpack.c.l.b16 %v2601
      %v2673 = vunpack.c.l.b16 %v2602
      %v2674 = vunpack.c.l.b16 %v2603
      %v2675 = vunpack.c.l.b16 %v2604
      %v2676 = vunpack.c.l.b16 %v2605
      %v2677 = vunpack.c.l.b16 %v2606
      %v2678 = vunpack.c.l.b16 %v2607
      %v2679 = vunpack.c.l.b16 %v2608
      %v2680 = vunpack.c.l.b16 %v2609
      %v2681 = vunpack.c.l.b16 %v2610
      %v2682 = vunpack.c.l.b16 %v2611
      %v2683 = vunpack.c.l.b16 %v2612
      %v2684 = vunpack.c.l.b16 %v2613
      %v2685 = vpack.c.b16 %v2654, %v2653
      %v2686 = vpack.c.b16 %v2656, %v2655
      %v2687 = vpack.c.b16 %v2658, %v2657
      %v2688 = vpack.c.b16 %v2660, %v2659
      %v2689 = vpack.c.b16 %v2662, %v2661
      %v2690 = vpack.c.b16 %v2664, %v2663
      %v2691 = vpack.c.b16 %v2666, %v2665
      %v2692 = vpack.c.b16 %v2668, %v2667
      %v2693 = vpack.c.b16 %v2670, %v2669
      %v2694 = vpack.c.b16 %v2672, %v2671
      %v2695 = vpack.c.b16 %v2674, %v2673
      %v2696 = vpack.c.b16 %v2676, %v2675
      %v2697 = vpack.c.b16 %v2678, %v2677
      %v2698 = vpack.c.b16 %v2680, %v2679
      %v2699 = vpack.c.b16 %v2682, %v2681
      %v2700 = vpack.c.b16 %v2684, %v2683
      %2717 = vmatprep.subr.bf16.mxu0 0
      %2718 = vmatpush1.bf16.msra.mxu0 %v2685
      %2719 = vmatprep.subr.bf16.mxu0 0
      %2720 = vmatpush1.bf16.msra.mxu0 %v2686
      %2721 = vmatprep.subr.bf16.mxu0 0
      %2722 = vmatpush1.bf16.msra.mxu0 %v2687
      %2723 = vmatprep.subr.bf16.mxu0 0
      %2724 = vmatpush1.bf16.msra.mxu0 %v2688
      %2725 = vmatprep.subr.bf16.mxu0 0
      %2726 = vmatpush1.bf16.msra.mxu0 %v2689
      %2727 = vmatprep.subr.bf16.mxu0 0
      %2728 = vmatpush1.bf16.msra.mxu0 %v2690
      %2729 = vmatprep.subr.bf16.mxu0 0
      %2730 = vmatpush1.bf16.msra.mxu0 %v2691
      %2731 = vmatprep.subr.bf16.mxu0 0
      %2732 = vmatpush1.bf16.msra.mxu0 %v2692
      %2733 = vmatprep.subr.bf16.mxu0 0
      %2734 = vmatpush1.bf16.msra.mxu0 %v2693
      %2735 = vmatprep.subr.bf16.mxu0 0
      %2736 = vmatpush1.bf16.msra.mxu0 %v2694
      %2737 = vmatprep.subr.bf16.mxu0 0
      %2738 = vmatpush1.bf16.msra.mxu0 %v2695
      %2739 = vmatprep.subr.bf16.mxu0 0
      %2740 = vmatpush1.bf16.msra.mxu0 %v2696
      %2741 = vmatprep.subr.bf16.mxu0 0
      %2742 = vmatpush1.bf16.msra.mxu0 %v2697
      %2743 = vmatprep.subr.bf16.mxu0 0
      %2744 = vmatpush1.bf16.msra.mxu0 %v2698
      %2745 = vmatprep.subr.bf16.mxu0 0
      %2746 = vmatpush1.bf16.msra.mxu0 %v2699
      %2747 = vmatprep.subr.bf16.mxu0 0
      %2748 = vmatpush1.bf16.msra.mxu0 %v2700
      %2749 = vmatprep.mubr.bf16.mxu0 %v2551
      %2750 = vmatmul.mubr.bf16.gmra.mrb[0].mxu0 %v2550
      %v2751 = vpop.f32.mrb[0].mxu0
      %v2752 = vadd.f32 %v2619, %v2751
      %v2753 = vpop.f32.mrb[0].mxu0
      %v2754 = vpop.f32.mrb[0].mxu0
      %v2755 = vadd.f32 %v2619, %v2754
      %v2756 = vpop.f32.mrb[0].mxu0
      %2757 = vmatprep.mubr.bf16.mxu0 %v2553
      %2758 = vmatmul.mubr.bf16.gmra.mrb[0].mxu0 %v2552
      %v2759 = vpop.f32.mrb[0].mxu0
      %v2760 = vadd.f32 %v2619, %v2759
      %v2761 = vpop.f32.mrb[0].mxu0
      %v2762 = vpop.f32.mrb[0].mxu0
      %v2763 = vadd.f32 %v2619, %v2762
      %v2764 = vpop.f32.mrb[0].mxu0
      %2765 = vmatprep.mubr.bf16.mxu0 %v2555
      %2766 = vmatmul.mubr.bf16.gmra.mrb[0].mxu0 %v2554
      %v2767 = vpop.f32.mrb[0].mxu0
      %v2768 = vadd.f32 %v2619, %v2767
      %v2769 = vpop.f32.mrb[0].mxu0
      %v2770 = vpop.f32.mrb[0].mxu0
      %v2771 = vadd.f32 %v2619, %v2770
      %v2772 = vpop.f32.mrb[0].mxu0
      %2773 = vmatprep.mubr.bf16.mxu0 %v2557
      %2774 = vmatmul.mubr.bf16.gmra.mrb[0].mxu0 %v2556
      %v2775 = vpop.f32.mrb[0].mxu0
      %v2776 = vadd.f32 %v2619, %v2775
      %v2777 = vpop.f32.mrb[0].mxu0
      %v2778 = vpop.f32.mrb[0].mxu0
      %v2779 = vadd.f32 %v2619, %v2778
      %v2780 = vpop.f32.mrb[0].mxu0
      %2781 = vmatprep.mubr.bf16.mxu0 %v2559
      %2782 = vmatmul.mubr.bf16.gmra.mrb[0].mxu0 %v2558
      %v2783 = vpop.f32.mrb[0].mxu0
      %v2784 = vadd.f32 %v2619, %v2783
      %v2785 = vpop.f32.mrb[0].mxu0
      %v2786 = vpop.f32.mrb[0].mxu0
      %v2787 = vadd.f32 %v2619, %v2786
      %v2788 = vpop.f32.mrb[0].mxu0
      %2789 = vmatprep.mubr.bf16.mxu0 %v2561
      %2790 = vmatmul.mubr.bf16.gmra.mrb[0].mxu0 %v2560
      %v2791 = vpop.f32.mrb[0].mxu0
      %v2792 = vadd.f32 %v2619, %v2791
      %v2793 = vpop.f32.mrb[0].mxu0
      %v2794 = vpop.f32.mrb[0].mxu0
      %v2795 = vadd.f32 %v2619, %v2794
      %v2796 = vpop.f32.mrb[0].mxu0
      %2797 = vmatprep.mubr.bf16.mxu0 %v2563
      %2798 = vmatmul.mubr.bf16.gmra.mrb[0].mxu0 %v2562
      %v2799 = vpop.f32.mrb[0].mxu0
      %v2800 = vadd.f32 %v2619, %v2799
      %v2801 = vpop.f32.mrb[0].mxu0
      %v2802 = vpop.f32.mrb[0].mxu0
      %v2803 = vadd.f32 %v2619, %v2802
      %v2804 = vpop.f32.mrb[0].mxu0
      %2805 = vmatprep.mubr.bf16.mxu0 %v2565
      %2806 = vmatmul.mubr.bf16.gmra.mrb[0].mxu0 %v2564
      %v2807 = vpop.f32.mrb[0].mxu0
      %v2808 = vadd.f32 %v2619, %v2807
      %v2809 = vpop.f32.mrb[0].mxu0
      %v2810 = vpop.f32.mrb[0].mxu0
      %v2811 = vadd.f32 %v2619, %v2810
      %v2812 = vpop.f32.mrb[0].mxu0
      %2813 = vmatprep.mubr.bf16.mxu0 %v2567
      %2814 = vmatmul.mubr.bf16.gmra.mrb[0].mxu0 %v2566
      %v2815 = vpop.f32.mrb[0].mxu0
      %v2816 = vadd.f32 %v2619, %v2815
      %v2817 = vpop.f32.mrb[0].mxu0
      %v2818 = vpop.f32.mrb[0].mxu0
      %v2819 = vadd.f32 %v2619, %v2818
      %v2820 = vpop.f32.mrb[0].mxu0
      %2821 = vmatprep.mubr.bf16.mxu0 %v2569
      %2822 = vmatmul.mubr.bf16.gmra.mrb[0].mxu0 %v2568
      %v2823 = vpop.f32.mrb[0].mxu0
      %v2824 = vadd.f32 %v2619, %v2823
      %v2825 = vpop.f32.mrb[0].mxu0
      %v2826 = vpop.f32.mrb[0].mxu0
      %v2827 = vadd.f32 %v2619, %v2826
      %v2828 = vpop.f32.mrb[0].mxu0
      %2829 = vmatprep.mubr.bf16.mxu0 %v2571
      %2830 = vmatmul.mubr.bf16.gmra.mrb[0].mxu0 %v2570
      %v2831 = vpop.f32.mrb[0].mxu0
      %v2832 = vadd.f32 %v2619, %v2831
      %v2833 = vpop.f32.mrb[0].mxu0
      %v2834 = vpop.f32.mrb[0].mxu0
      %v2835 = vadd.f32 %v2619, %v2834
      %v2836 = vpop.f32.mrb[0].mxu0
      %2837 = vmatprep.mubr.bf16.mxu0 %v2573
      %2838 = vmatmul.mubr.bf16.gmra.mrb[0].mxu0 %v2572
      %v2839 = vpop.f32.mrb[0].mxu0
      %v2840 = vadd.f32 %v2619, %v2839
      %v2841 = vpop.f32.mrb[0].mxu0
      %v2842 = vpop.f32.mrb[0].mxu0
      %v2843 = vadd.f32 %v2619, %v2842
      %v2844 = vpop.f32.mrb[0].mxu0
      %2845 = vmatprep.mubr.bf16.mxu0 %v2575
      %2846 = vmatmul.mubr.bf16.gmra.mrb[0].mxu0 %v2574
      %v2847 = vpop.f32.mrb[0].mxu0
      %v2848 = vadd.f32 %v2619, %v2847
      %v2849 = vpop.f32.mrb[0].mxu0
      %v2850 = vpop.f32.mrb[0].mxu0
      %v2851 = vadd.f32 %v2619, %v2850
      %v2852 = vpop.f32.mrb[0].mxu0
      %2853 = vmatprep.mubr.bf16.mxu0 %v2577
      %2854 = vmatmul.mubr.bf16.gmra.mrb[0].mxu0 %v2576
      %v2855 = vpop.f32.mrb[0].mxu0
      %v2856 = vadd.f32 %v2619, %v2855
      %v2857 = vpop.f32.mrb[0].mxu0
      %v2858 = vpop.f32.mrb[0].mxu0
      %v2859 = vadd.f32 %v2619, %v2858
      %v2860 = vpop.f32.mrb[0].mxu0
      %2861 = vmatprep.mubr.bf16.mxu0 %v2579
      %2862 = vmatmul.mubr.bf16.gmra.mrb[0].mxu0 %v2578
      %v2863 = vpop.f32.mrb[0].mxu0
      %v2864 = vadd.f32 %v2619, %v2863
      %v2865 = vpop.f32.mrb[0].mxu0
      %v2866 = vpop.f32.mrb[0].mxu0
      %v2867 = vadd.f32 %v2619, %v2866
      %v2868 = vpop.f32.mrb[0].mxu0
      %2869 = vmatprep.mubr.bf16.mxu0 %v2581
      %2870 = vmatmul.mubr.bf16.gmra.mrb[0].mxu0 %v2580
      %v2871 = vpop.f32.mrb[0].mxu0
      %v2872 = vadd.f32 %v2619, %v2871
      %v2873 = vpop.f32.mrb[0].mxu0
      %v2874 = vpop.f32.mrb[0].mxu0
      %v2875 = vadd.f32 %v2619, %v2874
      %v2876 = vpop.f32.mrb[0].mxu0
      %2877 = vdwg.mxu0
      %v2878 = vmax.f32 %v2752, 0.0
      %v2879 = vmax.f32 %v2755, 0.0
      %v2880 = vmax.f32 %v2760, 0.0
      %v2881 = vmax.f32 %v2763, 0.0
      %v2882 = vmax.f32 %v2768, 0.0
      %v2883 = vmax.f32 %v2771, 0.0
      %v2884 = vmax.f32 %v2776, 0.0
      %v2885 = vmax.f32 %v2779, 0.0
      %v2886 = vmax.f32 %v2784, 0.0
      %v2887 = vmax.f32 %v2787, 0.0
      %v2888 = vmax.f32 %v2792, 0.0
      %v2889 = vmax.f32 %v2795, 0.0
      %v2890 = vmax.f32 %v2800, 0.0
      %v2891 = vmax.f32 %v2803, 0.0
      %v2892 = vmax.f32 %v2808, 0.0
      %v2893 = vmax.f32 %v2811, 0.0
      %v2894 = vmax.f32 %v2816, 0.0
      %v2895 = vmax.f32 %v2819, 0.0
      %v2896 = vmax.f32 %v2824, 0.0
      %v2897 = vmax.f32 %v2827, 0.0
      %v2898 = vmax.f32 %v2832, 0.0
      %v2899 = vmax.f32 %v2835, 0.0
      %v2900 = vmax.f32 %v2840, 0.0
      %v2901 = vmax.f32 %v2843, 0.0
      %v2902 = vmax.f32 %v2848, 0.0
      %v2903 = vmax.f32 %v2851, 0.0
      %v2904 = vmax.f32 %v2856, 0.0
      %v2905 = vmax.f32 %v2859, 0.0
      %v2906 = vmax.f32 %v2864, 0.0
      %v2907 = vmax.f32 %v2867, 0.0
      %v2908 = vmax.f32 %v2872, 0.0
      %v2909 = vmax.f32 %v2875, 0.0
      %v2910 = vld [vmem:[%s7] sm:$0x1]
      %v2912 = vlaneseq
      %v2913 = vshrl.u32 %v2912, 7
      %v2914 = vsub.s32 0, %v2913
      %v2915 = vrot.slane %v2910, %v2914
      %v2917 = vmul.f32 %v2878, %v2915
      %v2918 = vmul.f32 %v2879, %v2915
      %v2919 = vmul.f32 %v2880, %v2915
      %v2920 = vmul.f32 %v2881, %v2915
      %v2921 = vmul.f32 %v2882, %v2915
      %v2922 = vmul.f32 %v2883, %v2915
      %v2923 = vmul.f32 %v2884, %v2915
      %v2924 = vmul.f32 %v2885, %v2915
      %v2925 = vmul.f32 %v2886, %v2915
      %v2926 = vmul.f32 %v2887, %v2915
      %v2927 = vmul.f32 %v2888, %v2915
      %v2928 = vmul.f32 %v2889, %v2915
      %v2929 = vmul.f32 %v2890, %v2915
      %v2930 = vmul.f32 %v2891, %v2915
      %v2931 = vmul.f32 %v2892, %v2915
      %v2932 = vmul.f32 %v2893, %v2915
      %v2933 = vmul.f32 %v2894, %v2915
      %v2934 = vmul.f32 %v2895, %v2915
      %v2935 = vmul.f32 %v2896, %v2915
      %v2936 = vmul.f32 %v2897, %v2915
      %v2937 = vmul.f32 %v2898, %v2915
      %v2938 = vmul.f32 %v2899, %v2915
      %v2939 = vmul.f32 %v2900, %v2915
      %v2940 = vmul.f32 %v2901, %v2915
      %v2941 = vmul.f32 %v2902, %v2915
      %v2942 = vmul.f32 %v2903, %v2915
      %v2943 = vmul.f32 %v2904, %v2915
      %v2944 = vmul.f32 %v2905, %v2915
      %v2945 = vmul.f32 %v2906, %v2915
      %v2946 = vmul.f32 %v2907, %v2915
      %v2947 = vmul.f32 %v2908, %v2915
      %v2948 = vmul.f32 %v2909, %v2915
      %2949 = vadd.xlane.f32.xlu0 %v2917
      %v2950 = vpop.xlane.xlu0 %2949
      %2951 = vadd.xlane.f32.xlu0 %v2918
      %v2952 = vpop.xlane.xlu0 %2951
      %2953 = vadd.xlane.f32.xlu0 %v2919
      %v2954 = vpop.xlane.xlu0 %2953
      %2955 = vadd.xlane.f32.xlu0 %v2920
      %v2956 = vpop.xlane.xlu0 %2955
      %2957 = vadd.xlane.f32.xlu0 %v2921
      %v2958 = vpop.xlane.xlu0 %2957
      %2959 = vadd.xlane.f32.xlu0 %v2922
      %v2960 = vpop.xlane.xlu0 %2959
      %2961 = vadd.xlane.f32.xlu0 %v2923
      %v2962 = vpop.xlane.xlu0 %2961
      %2963 = vadd.xlane.f32.xlu0 %v2924
      %v2964 = vpop.xlane.xlu0 %2963
      %2965 = vadd.xlane.f32.xlu0 %v2925
      %v2966 = vpop.xlane.xlu0 %2965
      %2967 = vadd.xlane.f32.xlu0 %v2926
      %v2968 = vpop.xlane.xlu0 %2967
      %2969 = vadd.xlane.f32.xlu0 %v2927
      %v2970 = vpop.xlane.xlu0 %2969
      %2971 = vadd.xlane.f32.xlu0 %v2928
      %v2972 = vpop.xlane.xlu0 %2971
      %2973 = vadd.xlane.f32.xlu0 %v2929
      %v2974 = vpop.xlane.xlu0 %2973
      %2975 = vadd.xlane.f32.xlu0 %v2930
      %v2976 = vpop.xlane.xlu0 %2975
      %2977 = vadd.xlane.f32.xlu0 %v2931
      %v2978 = vpop.xlane.xlu0 %2977
      %2979 = vadd.xlane.f32.xlu0 %v2932
      %v2980 = vpop.xlane.xlu0 %2979
      %2981 = vadd.xlane.f32.xlu0 %v2933
      %v2982 = vpop.xlane.xlu0 %2981
      %2983 = vadd.xlane.f32.xlu0 %v2934
      %v2984 = vpop.xlane.xlu0 %2983
      %2985 = vadd.xlane.f32.xlu0 %v2935
      %v2986 = vpop.xlane.xlu0 %2985
      %2987 = vadd.xlane.f32.xlu0 %v2936
      %v2988 = vpop.xlane.xlu0 %2987
      %2989 = vadd.xlane.f32.xlu0 %v2937
      %v2990 = vpop.xlane.xlu0 %2989
      %2991 = vadd.xlane.f32.xlu0 %v2938
      %v2992 = vpop.xlane.xlu0 %2991
      %2993 = vadd.xlane.f32.xlu0 %v2939
      %v2994 = vpop.xlane.xlu0 %2993
      %2995 = vadd.xlane.f32.xlu0 %v2940
      %v2996 = vpop.xlane.xlu0 %2995
      %2997 = vadd.xlane.f32.xlu0 %v2941
      %v2998 = vpop.xlane.xlu0 %2997
      %2999 = vadd.xlane.f32.xlu0 %v2942
      %v3000 = vpop.xlane.xlu0 %2999
      %3001 = vadd.xlane.f32.xlu0 %v2943
      %v3002 = vpop.xlane.xlu0 %3001
      %3003 = vadd.xlane.f32.xlu0 %v2944
      %v3004 = vpop.xlane.xlu0 %3003
      %3005 = vadd.xlane.f32.xlu0 %v2945
      %v3006 = vpop.xlane.xlu0 %3005
      %3007 = vadd.xlane.f32.xlu0 %v2946
      %v3008 = vpop.xlane.xlu0 %3007
      %3009 = vadd.xlane.f32.xlu0 %v2947
      %v3010 = vpop.xlane.xlu0 %3009
      %3011 = vadd.xlane.f32.xlu0 %v2948
      %v3012 = vpop.xlane.xlu0 %3011
      %s3013 = sld [smem:[#allocation3]]
      %v3014 = vstv %s3013
      %v3015 = vadd.f32 %v2950, %v3014
      %v3016 = vadd.f32 %v2952, %v3014
      %v3017 = vadd.f32 %v2954, %v3014
      %v3018 = vadd.f32 %v2956, %v3014
      %v3019 = vadd.f32 %v2958, %v3014
      %v3020 = vadd.f32 %v2960, %v3014
      %v3021 = vadd.f32 %v2962, %v3014
      %v3022 = vadd.f32 %v2964, %v3014
      %v3023 = vadd.f32 %v2966, %v3014
      %v3024 = vadd.f32 %v2968, %v3014
      %v3025 = vadd.f32 %v2970, %v3014
      %v3026 = vadd.f32 %v2972, %v3014
      %v3027 = vadd.f32 %v2974, %v3014
      %v3028 = vadd.f32 %v2976, %v3014
      %v3029 = vadd.f32 %v2978, %v3014
      %v3030 = vadd.f32 %v2980, %v3014
      %v3031 = vadd.f32 %v2982, %v3014
      %v3032 = vadd.f32 %v2984, %v3014
      %v3033 = vadd.f32 %v2986, %v3014
      %v3034 = vadd.f32 %v2988, %v3014
      %v3035 = vadd.f32 %v2990, %v3014
      %v3036 = vadd.f32 %v2992, %v3014
      %v3037 = vadd.f32 %v2994, %v3014
      %v3038 = vadd.f32 %v2996, %v3014
      %v3039 = vadd.f32 %v2998, %v3014
      %v3040 = vadd.f32 %v3000, %v3014
      %v3041 = vadd.f32 %v3002, %v3014
      %v3042 = vadd.f32 %v3004, %v3014
      %v3043 = vadd.f32 %v3006, %v3014
      %v3044 = vadd.f32 %v3008, %v3014
      %v3045 = vadd.f32 %v3010, %v3014
      %v3046 = vadd.f32 %v3012, %v3014
      %v3047 = vxor.u32 %v3015, 2147483648
      %v3048 = vxor.u32 %v3016, 2147483648
      %v3049 = vxor.u32 %v3017, 2147483648
      %v3050 = vxor.u32 %v3018, 2147483648
      %v3051 = vxor.u32 %v3019, 2147483648
      %v3052 = vxor.u32 %v3020, 2147483648
      %v3053 = vxor.u32 %v3021, 2147483648
      %v3054 = vxor.u32 %v3022, 2147483648
      %v3055 = vxor.u32 %v3023, 2147483648
      %v3056 = vxor.u32 %v3024, 2147483648
      %v3057 = vxor.u32 %v3025, 2147483648
      %v3058 = vxor.u32 %v3026, 2147483648
      %v3059 = vxor.u32 %v3027, 2147483648
      %v3060 = vxor.u32 %v3028, 2147483648
      %v3061 = vxor.u32 %v3029, 2147483648
      %v3062 = vxor.u32 %v3030, 2147483648
      %v3063 = vxor.u32 %v3031, 2147483648
      %v3064 = vxor.u32 %v3032, 2147483648
      %v3065 = vxor.u32 %v3033, 2147483648
      %v3066 = vxor.u32 %v3034, 2147483648
      %v3067 = vxor.u32 %v3035, 2147483648
      %v3068 = vxor.u32 %v3036, 2147483648
      %v3069 = vxor.u32 %v3037, 2147483648
      %v3070 = vxor.u32 %v3038, 2147483648
      %v3071 = vxor.u32 %v3039, 2147483648
      %v3072 = vxor.u32 %v3040, 2147483648
      %v3073 = vxor.u32 %v3041, 2147483648
      %v3074 = vxor.u32 %v3042, 2147483648
      %v3075 = vxor.u32 %v3043, 2147483648
      %v3076 = vxor.u32 %v3044, 2147483648
      %v3077 = vxor.u32 %v3045, 2147483648
      %v3078 = vxor.u32 %v3046, 2147483648
      %v3079 = vmul.f32 %v3047, 1.442695
      %v3080 = vpow.pop %v3079
      %v3081 = vmul.f32 %v3048, 1.442695
      %v3082 = vpow.pop %v3081
      %v3083 = vmul.f32 %v3049, 1.442695
      %v3084 = vpow.pop %v3083
      %v3085 = vmul.f32 %v3050, 1.442695
      %v3086 = vpow.pop %v3085
      %v3087 = vmul.f32 %v3051, 1.442695
      %v3088 = vpow.pop %v3087
      %v3089 = vmul.f32 %v3052, 1.442695
      %v3090 = vpow.pop %v3089
      %v3091 = vmul.f32 %v3053, 1.442695
      %v3092 = vpow.pop %v3091
      %v3093 = vmul.f32 %v3054, 1.442695
      %v3094 = vpow.pop %v3093
      %v3095 = vmul.f32 %v3055, 1.442695
      %v3096 = vpow.pop %v3095
      %v3097 = vmul.f32 %v3056, 1.442695
      %v3098 = vpow.pop %v3097
      %v3099 = vmul.f32 %v3057, 1.442695
      %v3100 = vpow.pop %v3099
      %v3101 = vmul.f32 %v3058, 1.442695
      %v3102 = vpow.pop %v3101
      %v3103 = vmul.f32 %v3059, 1.442695
      %v3104 = vpow.pop %v3103
      %v3105 = vmul.f32 %v3060, 1.442695
      %v3106 = vpow.pop %v3105
      %v3107 = vmul.f32 %v3061, 1.442695
      %v3108 = vpow.pop %v3107
      %v3109 = vmul.f32 %v3062, 1.442695
      %v3110 = vpow.pop %v3109
      %v3111 = vmul.f32 %v3063, 1.442695
      %v3112 = vpow.pop %v3111
      %v3113 = vmul.f32 %v3064, 1.442695
      %v3114 = vpow.pop %v3113
      %v3115 = vmul.f32 %v3065, 1.442695
      %v3116 = vpow.pop %v3115
      %v3117 = vmul.f32 %v3066, 1.442695
      %v3118 = vpow.pop %v3117
      %v3119 = vmul.f32 %v3067, 1.442695
      %v3120 = vpow.pop %v3119
      %v3121 = vmul.f32 %v3068, 1.442695
      %v3122 = vpow.pop %v3121
      %v3123 = vmul.f32 %v3069, 1.442695
      %v3124 = vpow.pop %v3123
      %v3125 = vmul.f32 %v3070, 1.442695
      %v3126 = vpow.pop %v3125
      %v3127 = vmul.f32 %v3071, 1.442695
      %v3128 = vpow.pop %v3127
      %v3129 = vmul.f32 %v3072, 1.442695
      %v3130 = vpow.pop %v3129
      %v3131 = vmul.f32 %v3073, 1.442695
      %v3132 = vpow.pop %v3131
      %v3133 = vmul.f32 %v3074, 1.442695
      %v3134 = vpow.pop %v3133
      %v3135 = vmul.f32 %v3075, 1.442695
      %v3136 = vpow.pop %v3135
      %v3137 = vmul.f32 %v3076, 1.442695
      %v3138 = vpow.pop %v3137
      %v3139 = vmul.f32 %v3077, 1.442695
      %v3140 = vpow.pop %v3139
      %v3141 = vmul.f32 %v3078, 1.442695
      %v3142 = vpow.pop %v3141
      %v3143 = vadd.f32 %v3080, 1.0
      %v3144 = vadd.f32 %v3082, 1.0
      %v3145 = vadd.f32 %v3084, 1.0
      %v3146 = vadd.f32 %v3086, 1.0
      %v3147 = vadd.f32 %v3088, 1.0
      %v3148 = vadd.f32 %v3090, 1.0
      %v3149 = vadd.f32 %v3092, 1.0
      %v3150 = vadd.f32 %v3094, 1.0
      %v3151 = vadd.f32 %v3096, 1.0
      %v3152 = vadd.f32 %v3098, 1.0
      %v3153 = vadd.f32 %v3100, 1.0
      %v3154 = vadd.f32 %v3102, 1.0
      %v3155 = vadd.f32 %v3104, 1.0
      %v3156 = vadd.f32 %v3106, 1.0
      %v3157 = vadd.f32 %v3108, 1.0
      %v3158 = vadd.f32 %v3110, 1.0
      %v3159 = vadd.f32 %v3112, 1.0
      %v3160 = vadd.f32 %v3114, 1.0
      %v3161 = vadd.f32 %v3116, 1.0
      %v3162 = vadd.f32 %v3118, 1.0
      %v3163 = vadd.f32 %v3120, 1.0
      %v3164 = vadd.f32 %v3122, 1.0
      %v3165 = vadd.f32 %v3124, 1.0
      %v3166 = vadd.f32 %v3126, 1.0
      %v3167 = vadd.f32 %v3128, 1.0
      %v3168 = vadd.f32 %v3130, 1.0
      %v3169 = vadd.f32 %v3132, 1.0
      %v3170 = vadd.f32 %v3134, 1.0
      %v3171 = vadd.f32 %v3136, 1.0
      %v3172 = vadd.f32 %v3138, 1.0
      %v3173 = vadd.f32 %v3140, 1.0
      %v3174 = vadd.f32 %v3142, 1.0
      %v3175 = vrcp.pop %v3143
      %v3176 = vmul.f32 1.0, %v3175
      %v3177 = vrcp.pop %v3144
      %v3178 = vmul.f32 1.0, %v3177
      %v3179 = vrcp.pop %v3145
      %v3180 = vmul.f32 1.0, %v3179
      %v3181 = vrcp.pop %v3146
      %v3182 = vmul.f32 1.0, %v3181
      %v3183 = vrcp.pop %v3147
      %v3184 = vmul.f32 1.0, %v3183
      %v3185 = vrcp.pop %v3148
      %v3186 = vmul.f32 1.0, %v3185
      %v3187 = vrcp.pop %v3149
      %v3188 = vmul.f32 1.0, %v3187
      %v3189 = vrcp.pop %v3150
      %v3190 = vmul.f32 1.0, %v3189
      %v3191 = vrcp.pop %v3151
      %v3192 = vmul.f32 1.0, %v3191
      %v3193 = vrcp.pop %v3152
      %v3194 = vmul.f32 1.0, %v3193
      %v3195 = vrcp.pop %v3153
      %v3196 = vmul.f32 1.0, %v3195
      %v3197 = vrcp.pop %v3154
      %v3198 = vmul.f32 1.0, %v3197
      %v3199 = vrcp.pop %v3155
      %v3200 = vmul.f32 1.0, %v3199
      %v3201 = vrcp.pop %v3156
      %v3202 = vmul.f32 1.0, %v3201
      %v3203 = vrcp.pop %v3157
      %v3204 = vmul.f32 1.0, %v3203
      %v3205 = vrcp.pop %v3158
      %v3206 = vmul.f32 1.0, %v3205
      %v3207 = vrcp.pop %v3159
      %v3208 = vmul.f32 1.0, %v3207
      %v3209 = vrcp.pop %v3160
      %v3210 = vmul.f32 1.0, %v3209
      %v3211 = vrcp.pop %v3161
      %v3212 = vmul.f32 1.0, %v3211
      %v3213 = vrcp.pop %v3162
      %v3214 = vmul.f32 1.0, %v3213
      %v3215 = vrcp.pop %v3163
      %v3216 = vmul.f32 1.0, %v3215
      %v3217 = vrcp.pop %v3164
      %v3218 = vmul.f32 1.0, %v3217
      %v3219 = vrcp.pop %v3165
      %v3220 = vmul.f32 1.0, %v3219
      %v3221 = vrcp.pop %v3166
      %v3222 = vmul.f32 1.0, %v3221
      %v3223 = vrcp.pop %v3167
      %v3224 = vmul.f32 1.0, %v3223
      %v3225 = vrcp.pop %v3168
      %v3226 = vmul.f32 1.0, %v3225
      %v3227 = vrcp.pop %v3169
      %v3228 = vmul.f32 1.0, %v3227
      %v3229 = vrcp.pop %v3170
      %v3230 = vmul.f32 1.0, %v3229
      %v3231 = vrcp.pop %v3171
      %v3232 = vmul.f32 1.0, %v3231
      %v3233 = vrcp.pop %v3172
      %v3234 = vmul.f32 1.0, %v3233
      %v3235 = vrcp.pop %v3173
      %v3236 = vmul.f32 1.0, %v3235
      %v3237 = vrcp.pop %v3174
      %v3238 = vmul.f32 1.0, %v3237
      %vm3239 = vcmask 7168
      %3240 = vst.msk [vmem:[%s9] sm:$0xff] %vm3239, %v3176
      %3241 = vst.msk [vmem:[%s9 + $0x8] sm:$0xff] %vm3239, %v3178
      %3242 = vst.msk [vmem:[%s9 + $0x10] sm:$0xff] %vm3239, %v3180
      %3243 = vst.msk [vmem:[%s9 + $0x18] sm:$0xff] %vm3239, %v3182
      %3244 = vst.msk [vmem:[%s9 + $0x20] sm:$0xff] %vm3239, %v3184
      %3245 = vst.msk [vmem:[%s9 + $0x28] sm:$0xff] %vm3239, %v3186
      %3246 = vst.msk [vmem:[%s9 + $0x30] sm:$0xff] %vm3239, %v3188
      %3247 = vst.msk [vmem:[%s9 + $0x38] sm:$0xff] %vm3239, %v3190
      %3248 = vst.msk [vmem:[%s9 + $0x40] sm:$0xff] %vm3239, %v3192
      %3249 = vst.msk [vmem:[%s9 + $0x48] sm:$0xff] %vm3239, %v3194
      %3250 = vst.msk [vmem:[%s9 + $0x50] sm:$0xff] %vm3239, %v3196
      %3251 = vst.msk [vmem:[%s9 + $0x58] sm:$0xff] %vm3239, %v3198
      %3252 = vst.msk [vmem:[%s9 + $0x60] sm:$0xff] %vm3239, %v3200
      %3253 = vst.msk [vmem:[%s9 + $0x68] sm:$0xff] %vm3239, %v3202
      %3254 = vst.msk [vmem:[%s9 + $0x70] sm:$0xff] %vm3239, %v3204
      %3255 = vst.msk [vmem:[%s9 + $0x78] sm:$0xff] %vm3239, %v3206
      %3256 = vst.msk [vmem:[%s9 + $0x80] sm:$0xff] %vm3239, %v3208
      %3257 = vst.msk [vmem:[%s9 + $0x88] sm:$0xff] %vm3239, %v3210
      %3258 = vst.msk [vmem:[%s9 + $0x90] sm:$0xff] %vm3239, %v3212
      %3259 = vst.msk [vmem:[%s9 + $0x98] sm:$0xff] %vm3239, %v3214
      %3260 = vst.msk [vmem:[%s9 + $0xa0] sm:$0xff] %vm3239, %v3216
      %3261 = vst.msk [vmem:[%s9 + $0xa8] sm:$0xff] %vm3239, %v3218
      %3262 = vst.msk [vmem:[%s9 + $0xb0] sm:$0xff] %vm3239, %v3220
      %3263 = vst.msk [vmem:[%s9 + $0xb8] sm:$0xff] %vm3239, %v3222
      %3264 = vst.msk [vmem:[%s9 + $0xc0] sm:$0xff] %vm3239, %v3224
      %3265 = vst.msk [vmem:[%s9 + $0xc8] sm:$0xff] %vm3239, %v3226
      %3266 = vst.msk [vmem:[%s9 + $0xd0] sm:$0xff] %vm3239, %v3228
      %3267 = vst.msk [vmem:[%s9 + $0xd8] sm:$0xff] %vm3239, %v3230
      %3268 = vst.msk [vmem:[%s9 + $0xe0] sm:$0xff] %vm3239, %v3232
      %3269 = vst.msk [vmem:[%s9 + $0xe8] sm:$0xff] %vm3239, %v3234
      %3270 = vst.msk [vmem:[%s9 + $0xf0] sm:$0xff] %vm3239, %v3236
      %3271 = vst.msk [vmem:[%s9 + $0xf8] sm:$0xff] %vm3239, %v3238
    $region61: #{tpu_custom_call.1} parent=1 // pred_fallthru
      _
    // Predicated region
    $region62: #{tpu_custom_call.1} parent=1 // pred_check
      _
    $region63: #{tpu_custom_call.1} parent=1 // pred_check_branch
      %3273 = sbr.rel (0) target = $region65
    $region64: #{tpu_custom_call.1} parent=1 // pred_region
      _
    $region65: #{tpu_custom_call.1} parent=1 // pred_fallthru
      _
    // Predicated region
    $region66: #{tpu_custom_call.1} parent=1 // pred_check
      _
    $region67: #{tpu_custom_call.1} parent=1 // pred_check_branch
      %3275 = sbr.rel (0) target = $region69
    $region68: #{tpu_custom_call.1} parent=1 // pred_region
      _
    $region69: #{tpu_custom_call.1} parent=1 // pred_fallthru
      _
    %3276 = vsyncpa [#allocation5], 1
    %3277 = vsyncpa [#allocation7], 1
    %3278 = vsyncpa [#allocation10], 1

</llo_original>
